<compile_context>
chip_gen: v7x
topology: tpu7x:2x2x1
jax: 0.10.0
libtpu: 0.0.40
codegen_flags: <defaults>
</compile_context>

<pallas_src>
import numpy as np
import jax
import jax.numpy as jnp
from jax import lax
from jax.experimental import pallas as pl
from jax.experimental.pallas import tpu as pltpu

NEG_SLOPE = 0.2


def _lrelu(t):
    return jnp.where(t >= 0, t, NEG_SLOPE * t)


def downblock_kernel(x_ref, w_ref, b_ref, o_ref, pat_ref, ys_ref, us_ref):
    """One grid step processes B_TILE images.

    x_ref  : (B, H, W, Cin)   bf16 unpadded input tile (NHWC)
    w_ref  : (9*Cin, Cout)    bf16 conv weights, row index = (dy*3+dx)*Cin + ci
    b_ref  : (1, Cout)        f32 conv bias
    o_ref  : (B, Cout, H2*W2) f32 output tile (channel-major, spatial on lanes)
    pat_ref: (B, H, W, 9*Cin) bf16 scratch: im2col patches (zero-padded taps)
    ys_ref : (B, H+2, W+2, Cout) f32 scratch: conv output with a zero border
    us_ref : (B, H+2, W2, Cout)  f32 scratch: after the W-direction blur+pool
    """
    B, H, W, Cin = x_ref.shape
    Cout = o_ref.shape[1]
    H2, W2 = H // 2, W // 2
    KC = w_ref.shape[0]                       # 9 * Cin

    # Zero the scratches that rely on zero borders.  Done every step (cheap)
    # so the kernel stays correct when the parallel grid axis is split across
    # TensorCores (no cross-step scratch state).
    pat_ref[...] = jnp.zeros(pat_ref.shape, pat_ref.dtype)
    ys_ref[...] = jnp.zeros(ys_ref.shape, ys_ref.dtype)

    # ---- im2col: 9 shifted windows of the implicitly zero-padded input -----
    for dy in range(3):
        for dx in range(3):
            oy, ox = dy - 1, dx - 1
            hs, ws = H - abs(oy), W - abs(ox)
            h0, w0 = max(0, oy), max(0, ox)       # source offsets
            h1, w1 = max(0, -oy), max(0, -ox)     # destination offsets
            t = dy * 3 + dx
            pat_ref[:, pl.ds(h1, hs), pl.ds(w1, ws), pl.ds(t * Cin, Cin)] = \
                x_ref[:, pl.ds(h0, hs), pl.ds(w0, ws), :]

    # ---- conv as ONE matmul (bf16 operands, f32 accumulation) ---------------
    patches = pat_ref[...].reshape(B * H * W, KC)
    y = jnp.dot(patches, w_ref[...], preferred_element_type=jnp.float32)
    y = _lrelu(y + b_ref[...])                   # bias + activation1 (f32 VPU)

    # Stash the conv output inside a zero-bordered scratch for the blur.
    ys_ref[:, pl.ds(1, H), pl.ds(1, W), :] = y.reshape(B, H, W, Cout)

    # ---- separable blur([1,2,1]/4, pad 1) + 2x2 avg-pool --------------------
    # Per axis this is taps [1, 3, 3, 1]/8 applied at even positions; the zero
    # border of ys_ref provides the conv-style zero padding.  Pure VPU work,
    # strided reads along non-lane axes of the scratch refs.
    u = (ys_ref[:, :, pl.ds(0, W2, stride=2), :]
         + 3.0 * ys_ref[:, :, pl.ds(1, W2, stride=2), :]
         + 3.0 * ys_ref[:, :, pl.ds(2, W2, stride=2), :]
         + ys_ref[:, :, pl.ds(3, W2, stride=2), :]) * 0.125
    us_ref[...] = u                              # (B, H+2, W2, Cout)

    z = (us_ref[:, pl.ds(0, H2, stride=2), :, :]
         + 3.0 * us_ref[:, pl.ds(1, H2, stride=2), :, :]
         + 3.0 * us_ref[:, pl.ds(2, H2, stride=2), :, :]
         + us_ref[:, pl.ds(3, H2, stride=2), :, :]) * 0.125
    z = _lrelu(z)                                # activation2, (B, H2, W2, Cout)

    # ---- NHWC -> NCHW on the small post-pool tensor; lane-dense store -------
    z = z.reshape(B, H2 * W2, Cout)
    for i in range(B):
        o_ref[i] = z[i].T                        # (Cout, H2*W2)


def _pick_batch_tile(n, hw):
    """Batch several images per grid step (targets >=512 matmul rows)."""
    target = max(1, -(-512 // hw))               # ceil(512 / hw)
    bt = min(n, target)
    while n % bt:
        bt -= 1
    return bt


def downblock_pallas(x_nchw, w_oihw, bias):
    N, Cin, H, W = x_nchw.shape
    Cout = w_oihw.shape[0]
    assert H % 2 == 0 and W % 2 == 0, "DownBlock needs even spatial dims"
    H2, W2 = H // 2, W // 2
    bt = _pick_batch_tile(N, H * W)

    # NCHW -> NHWC once on the way in (channels on lanes for the conv matmul);
    # bf16 inputs/weights halve DMA bytes and run the MXU single-pass.
    x_nhwc = jnp.transpose(x_nchw, (0, 2, 3, 1)).astype(jnp.bfloat16)
    w9 = jnp.transpose(w_oihw, (2, 3, 1, 0)).reshape(9 * Cin, Cout)
    w9 = w9.astype(jnp.bfloat16)
    b2 = bias.reshape(1, Cout).astype(jnp.float32)

    out = pl.pallas_call(
        downblock_kernel,
        out_shape=jax.ShapeDtypeStruct((N, Cout, H2 * W2), jnp.float32),
        grid=(N // bt,),
        in_specs=[
            pl.BlockSpec((bt, H, W, Cin), lambda n: (n, 0, 0, 0)),
            pl.BlockSpec((9 * Cin, Cout), lambda n: (0, 0)),
            pl.BlockSpec((1, Cout), lambda n: (0, 0)),
        ],
        out_specs=pl.BlockSpec((bt, Cout, H2 * W2), lambda n: (n, 0, 0)),
        scratch_shapes=[
            pltpu.VMEM((bt, H, W, 9 * Cin), jnp.bfloat16),      # im2col patches
            pltpu.VMEM((bt, H + 2, W + 2, Cout), jnp.float32),  # padded conv out
            pltpu.VMEM((bt, H + 2, W2, Cout), jnp.float32),     # after W pass
        ],
        compiler_params=pltpu.CompilerParams(
            dimension_semantics=("parallel",)),
    )(x_nhwc, w9, b2)

    # Output is already channel-major; only a free reshape remains.
    return out.reshape(N, Cout, H2, W2)


def downblock_reference(x, w, b):
    """Pure-JAX f32 reference with the same (intended) semantics, NCHW."""
    y = lax.conv_general_dilated(
        x, w, window_strides=(1, 1), padding=((1, 1), (1, 1)),
        dimension_numbers=('NCHW', 'OIHW', 'NCHW'),
        precision=lax.Precision.HIGHEST) + b[None, :, None, None]
    y = jnp.where(y >= 0, y, NEG_SLOPE * y)
    C = y.shape[1]
    taps = jnp.array([1.0, 2.0, 1.0], jnp.float32)
    blur = (taps[:, None] * taps[None, :]) / 16.0
    blur_w = jnp.broadcast_to(blur[None, None], (C, 1, 3, 3))
    y = lax.conv_general_dilated(
        y, blur_w, (1, 1), ((1, 1), (1, 1)),
        dimension_numbers=('NCHW', 'OIHW', 'NCHW'),
        feature_group_count=C, precision=lax.Precision.HIGHEST)
    n, c, h, w_ = y.shape
    y = y.reshape(n, c, h // 2, 2, w_ // 2, 2).mean(axis=(3, 5))
    return jnp.where(y >= 0, y, NEG_SLOPE * y)


if __name__ == "__main__":
    N, Cin, Cout, H, W = 2, 4, 8, 16, 16

    key = jax.random.PRNGKey(0)
    kx, kw, kb = jax.random.split(key, 3)
    x = jax.random.normal(kx, (N, Cin, H, W), jnp.float32)
    w = jax.random.normal(kw, (Cout, Cin, 3, 3), jnp.float32) * 0.1
    b = jax.random.normal(kb, (Cout,), jnp.float32) * 0.1

    out = jax.jit(downblock_pallas)(x, w, b)
    jax.block_until_ready(out)

    ref = downblock_reference(x, w, b)
    assert out.shape == (N, Cout, H // 2, W // 2), out.shape
    # Tolerance loosened vs. the f32-exact reference because the conv matmul
    # now uses bf16 MXU operands (per perf review); observed error << 2e-2.
    np.testing.assert_allclose(np.asarray(out), np.asarray(ref),
                               rtol=2e-2, atol=2e-2)
    print("KERNEL_OK")
</pallas_src>

<mosaic_0001>
module attributes {stable_mosaic.version = 11 : i64} {
  func.func @downblock_kernel(%arg0: i32, %arg1: memref<2x16x16x4xbf16, #tpu.memory_space<vmem>>, %arg2: memref<36x8xbf16, #tpu.memory_space<vmem>>, %arg3: memref<1x8xf32, #tpu.memory_space<vmem>>, %arg4: memref<2x8x64xf32, #tpu.memory_space<vmem>>, %arg5: memref<2x16x16x36xbf16, #tpu.memory_space<vmem>>, %arg6: memref<2x18x18x8xf32, #tpu.memory_space<vmem>>, %arg7: memref<2x18x8x8xf32, #tpu.memory_space<vmem>>) attributes {dimension_semantics = [#tpu.dimension_semantics<parallel>], iteration_bounds = array<i64: 1>, scalar_prefetch = 0 : i64, scratch_operands = 3 : i64, tpu.core_type = #tpu.core_type<tc>, window_params = [{transform_indices = @transform_0, window_bounds = array<i64: 2, 16, 16, 4>}, {pipeline_mode = #tpu.pipeline_mode<synchronous>, transform_indices = @transform_1, window_bounds = array<i64: 36, 8>}, {pipeline_mode = #tpu.pipeline_mode<synchronous>, transform_indices = @transform_2, window_bounds = array<i64: 1, 8>}, {transform_indices = @transform_3, window_bounds = array<i64: 2, 8, 64>}]} {
    %cst = arith.constant 0.000000e+00 : bf16
    %0 = vector.broadcast %cst : bf16 to vector<2x16x16x36xbf16>
    %c0 = arith.constant 0 : index
    %c0_0 = arith.constant 0 : index
    %c0_1 = arith.constant 0 : index
    %c0_2 = arith.constant 0 : index
    %1 = vector.load %arg5[%c0, %c0_0, %c0_1, %c0_2] : memref<2x16x16x36xbf16, #tpu.memory_space<vmem>>, vector<2x16x16x36xbf16>
    tpu.vector_store %arg5[%c0, %c0_0, %c0_1, %c0_2], %0 {strides = array<i32>} : memref<2x16x16x36xbf16, #tpu.memory_space<vmem>>, vector<2x16x16x36xbf16>,
    %cst_3 = arith.constant 0.000000e+00 : f32
    %2 = vector.broadcast %cst_3 : f32 to vector<2x18x18x8xf32>
    %c0_4 = arith.constant 0 : index
    %c0_5 = arith.constant 0 : index
    %c0_6 = arith.constant 0 : index
    %c0_7 = arith.constant 0 : index
    %3 = vector.load %arg6[%c0_4, %c0_5, %c0_6, %c0_7] : memref<2x18x18x8xf32, #tpu.memory_space<vmem>>, vector<2x18x18x8xf32>
    tpu.vector_store %arg6[%c0_4, %c0_5, %c0_6, %c0_7], %2 {strides = array<i32>} : memref<2x18x18x8xf32, #tpu.memory_space<vmem>>, vector<2x18x18x8xf32>,
    %c0_8 = arith.constant 0 : index
    %c0_9 = arith.constant 0 : index
    %c0_10 = arith.constant 0 : index
    %c0_11 = arith.constant 0 : index
    %4 = vector.load %arg1[%c0_8, %c0_9, %c0_10, %c0_11] : memref<2x16x16x4xbf16, #tpu.memory_space<vmem>>, vector<2x15x15x4xbf16>
    %c0_12 = arith.constant 0 : index
    %c1 = arith.constant 1 : index
    %c1_13 = arith.constant 1 : index
    %c0_14 = arith.constant 0 : index
    %5 = vector.load %arg5[%c0_12, %c1, %c1_13, %c0_14] : memref<2x16x16x36xbf16, #tpu.memory_space<vmem>>, vector<2x15x15x4xbf16>
    tpu.vector_store %arg5[%c0_12, %c1, %c1_13, %c0_14], %4 {strides = array<i32>} : memref<2x16x16x36xbf16, #tpu.memory_space<vmem>>, vector<2x15x15x4xbf16>,
    %c0_15 = arith.constant 0 : index
    %c0_16 = arith.constant 0 : index
    %c0_17 = arith.constant 0 : index
    %c0_18 = arith.constant 0 : index
    %6 = vector.load %arg1[%c0_15, %c0_16, %c0_17, %c0_18] : memref<2x16x16x4xbf16, #tpu.memory_space<vmem>>, vector<2x15x16x4xbf16>
    %c0_19 = arith.constant 0 : index
    %c1_20 = arith.constant 1 : index
    %c0_21 = arith.constant 0 : index
    %c4 = arith.constant 4 : index
    %7 = vector.load %arg5[%c0_19, %c1_20, %c0_21, %c4] : memref<2x16x16x36xbf16, #tpu.memory_space<vmem>>, vector<2x15x16x4xbf16>
    tpu.vector_store %arg5[%c0_19, %c1_20, %c0_21, %c4], %6 {strides = array<i32>} : memref<2x16x16x36xbf16, #tpu.memory_space<vmem>>, vector<2x15x16x4xbf16>,
    %c0_22 = arith.constant 0 : index
    %c0_23 = arith.constant 0 : index
    %c1_24 = arith.constant 1 : index
    %c0_25 = arith.constant 0 : index
    %8 = vector.load %arg1[%c0_22, %c0_23, %c1_24, %c0_25] : memref<2x16x16x4xbf16, #tpu.memory_space<vmem>>, vector<2x15x15x4xbf16>
    %c0_26 = arith.constant 0 : index
    %c1_27 = arith.constant 1 : index
    %c0_28 = arith.constant 0 : index
    %c8 = arith.constant 8 : index
    %9 = vector.load %arg5[%c0_26, %c1_27, %c0_28, %c8] : memref<2x16x16x36xbf16, #tpu.memory_space<vmem>>, vector<2x15x15x4xbf16>
    tpu.vector_store %arg5[%c0_26, %c1_27, %c0_28, %c8], %8 {strides = array<i32>} : memref<2x16x16x36xbf16, #tpu.memory_space<vmem>>, vector<2x15x15x4xbf16>,
    %c0_29 = arith.constant 0 : index
    %c0_30 = arith.constant 0 : index
    %c0_31 = arith.constant 0 : index
    %c0_32 = arith.constant 0 : index
    %10 = vector.load %arg1[%c0_29, %c0_30, %c0_31, %c0_32] : memref<2x16x16x4xbf16, #tpu.memory_space<vmem>>, vector<2x16x15x4xbf16>
    %c0_33 = arith.constant 0 : index
    %c0_34 = arith.constant 0 : index
    %c1_35 = arith.constant 1 : index
    %c12 = arith.constant 12 : index
    %11 = vector.load %arg5[%c0_33, %c0_34, %c1_35, %c12] : memref<2x16x16x36xbf16, #tpu.memory_space<vmem>>, vector<2x16x15x4xbf16>
    tpu.vector_store %arg5[%c0_33, %c0_34, %c1_35, %c12], %10 {strides = array<i32>} : memref<2x16x16x36xbf16, #tpu.memory_space<vmem>>, vector<2x16x15x4xbf16>,
    %c0_36 = arith.constant 0 : index
    %c0_37 = arith.constant 0 : index
    %c0_38 = arith.constant 0 : index
    %c0_39 = arith.constant 0 : index
    %12 = vector.load %arg1[%c0_36, %c0_37, %c0_38, %c0_39] : memref<2x16x16x4xbf16, #tpu.memory_space<vmem>>, vector<2x16x16x4xbf16>
    %c0_40 = arith.constant 0 : index
    %c0_41 = arith.constant 0 : index
    %c0_42 = arith.constant 0 : index
    %c16 = arith.constant 16 : index
    %13 = vector.load %arg5[%c0_40, %c0_41, %c0_42, %c16] : memref<2x16x16x36xbf16, #tpu.memory_space<vmem>>, vector<2x16x16x4xbf16>
    tpu.vector_store %arg5[%c0_40, %c0_41, %c0_42, %c16], %12 {strides = array<i32>} : memref<2x16x16x36xbf16, #tpu.memory_space<vmem>>, vector<2x16x16x4xbf16>,
    %c0_43 = arith.constant 0 : index
    %c0_44 = arith.constant 0 : index
    %c1_45 = arith.constant 1 : index
    %c0_46 = arith.constant 0 : index
    %14 = vector.load %arg1[%c0_43, %c0_44, %c1_45, %c0_46] : memref<2x16x16x4xbf16, #tpu.memory_space<vmem>>, vector<2x16x15x4xbf16>
    %c0_47 = arith.constant 0 : index
    %c0_48 = arith.constant 0 : index
    %c0_49 = arith.constant 0 : index
    %c20 = arith.constant 20 : index
    %15 = vector.load %arg5[%c0_47, %c0_48, %c0_49, %c20] : memref<2x16x16x36xbf16, #tpu.memory_space<vmem>>, vector<2x16x15x4xbf16>
    tpu.vector_store %arg5[%c0_47, %c0_48, %c0_49, %c20], %14 {strides = array<i32>} : memref<2x16x16x36xbf16, #tpu.memory_space<vmem>>, vector<2x16x15x4xbf16>,
    %c0_50 = arith.constant 0 : index
    %c1_51 = arith.constant 1 : index
    %c0_52 = arith.constant 0 : index
    %c0_53 = arith.constant 0 : index
    %16 = vector.load %arg1[%c0_50, %c1_51, %c0_52, %c0_53] : memref<2x16x16x4xbf16, #tpu.memory_space<vmem>>, vector<2x15x15x4xbf16>
    %c0_54 = arith.constant 0 : index
    %c0_55 = arith.constant 0 : index
    %c1_56 = arith.constant 1 : index
    %c24 = arith.constant 24 : index
    %17 = vector.load %arg5[%c0_54, %c0_55, %c1_56, %c24] : memref<2x16x16x36xbf16, #tpu.memory_space<vmem>>, vector<2x15x15x4xbf16>
    tpu.vector_store %arg5[%c0_54, %c0_55, %c1_56, %c24], %16 {strides = array<i32>} : memref<2x16x16x36xbf16, #tpu.memory_space<vmem>>, vector<2x15x15x4xbf16>,
    %c0_57 = arith.constant 0 : index
    %c1_58 = arith.constant 1 : index
    %c0_59 = arith.constant 0 : index
    %c0_60 = arith.constant 0 : index
    %18 = vector.load %arg1[%c0_57, %c1_58, %c0_59, %c0_60] : memref<2x16x16x4xbf16, #tpu.memory_space<vmem>>, vector<2x15x16x4xbf16>
    %c0_61 = arith.constant 0 : index
    %c0_62 = arith.constant 0 : index
    %c0_63 = arith.constant 0 : index
    %c28 = arith.constant 28 : index
    %19 = vector.load %arg5[%c0_61, %c0_62, %c0_63, %c28] : memref<2x16x16x36xbf16, #tpu.memory_space<vmem>>, vector<2x15x16x4xbf16>
    tpu.vector_store %arg5[%c0_61, %c0_62, %c0_63, %c28], %18 {strides = array<i32>} : memref<2x16x16x36xbf16, #tpu.memory_space<vmem>>, vector<2x15x16x4xbf16>,
    %c0_64 = arith.constant 0 : index
    %c1_65 = arith.constant 1 : index
    %c1_66 = arith.constant 1 : index
    %c0_67 = arith.constant 0 : index
    %20 = vector.load %arg1[%c0_64, %c1_65, %c1_66, %c0_67] : memref<2x16x16x4xbf16, #tpu.memory_space<vmem>>, vector<2x15x15x4xbf16>
    %c0_68 = arith.constant 0 : index
    %c0_69 = arith.constant 0 : index
    %c0_70 = arith.constant 0 : index
    %c32 = arith.constant 32 : index
    %21 = vector.load %arg5[%c0_68, %c0_69, %c0_70, %c32] : memref<2x16x16x36xbf16, #tpu.memory_space<vmem>>, vector<2x15x15x4xbf16>
    tpu.vector_store %arg5[%c0_68, %c0_69, %c0_70, %c32], %20 {strides = array<i32>} : memref<2x16x16x36xbf16, #tpu.memory_space<vmem>>, vector<2x15x15x4xbf16>,
    %c0_71 = arith.constant 0 : index
    %c0_72 = arith.constant 0 : index
    %c0_73 = arith.constant 0 : index
    %c0_74 = arith.constant 0 : index
    %22 = vector.load %arg5[%c0_71, %c0_72, %c0_73, %c0_74] : memref<2x16x16x36xbf16, #tpu.memory_space<vmem>>, vector<2x16x16x36xbf16>
    %23 = vector.shape_cast %22 : vector<2x16x16x36xbf16> to vector<512x36xbf16>
    %c0_75 = arith.constant 0 : index
    %c0_76 = arith.constant 0 : index
    %24 = vector.load %arg2[%c0_75, %c0_76] : memref<36x8xbf16, #tpu.memory_space<vmem>>, vector<36x8xbf16>
    %cst_77 = arith.constant dense<0.000000e+00> : vector<512x8xf32>
    %25 = tpu.matmul %23, %24, %cst_77 {dimension_numbers = #tpu.dot_dimension_numbers<[1], [0], [0], [1], [0, 0, 1, 1], [], []>} : vector<512x36xbf16>, vector<36x8xbf16>, vector<512x8xf32> -> vector<512x8xf32>
    %c0_78 = arith.constant 0 : index
    %c0_79 = arith.constant 0 : index
    %26 = vector.load %arg3[%c0_78, %c0_79] : memref<1x8xf32, #tpu.memory_space<vmem>>, vector<1x8xf32>
    %27 = vector.broadcast %26 : vector<1x8xf32> to vector<512x8xf32>
    %28 = arith.addf %25, %27 : vector<512x8xf32>
    %cst_80 = arith.constant 0.000000e+00 : f32
    %29 = vector.broadcast %cst_80 : f32 to vector<512x8xf32>
    %30 = arith.cmpf oge, %28, %29 : vector<512x8xf32>
    %cst_81 = arith.constant 2.000000e-01 : f32
    %31 = vector.broadcast %cst_81 : f32 to vector<512x8xf32>
    %32 = arith.mulf %31, %28 : vector<512x8xf32>
    %33 = arith.select %30, %28, %32 : vector<512x8xi1>, vector<512x8xf32>
    %34 = vector.shape_cast %33 : vector<512x8xf32> to vector<2x16x16x8xf32>
    %c0_82 = arith.constant 0 : index
    %c1_83 = arith.constant 1 : index
    %c1_84 = arith.constant 1 : index
    %c0_85 = arith.constant 0 : index
    %35 = vector.load %arg6[%c0_82, %c1_83, %c1_84, %c0_85] : memref<2x18x18x8xf32, #tpu.memory_space<vmem>>, vector<2x16x16x8xf32>
    tpu.vector_store %arg6[%c0_82, %c1_83, %c1_84, %c0_85], %34 {strides = array<i32>} : memref<2x18x18x8xf32, #tpu.memory_space<vmem>>, vector<2x16x16x8xf32>,
    %c0_86 = arith.constant 0 : index
    %c0_87 = arith.constant 0 : index
    %c0_88 = arith.constant 0 : index
    %c0_89 = arith.constant 0 : index
    %36 = tpu.strided_load %arg6[%c0_86, %c0_87, %c0_88, %c0_89] {strides = array<i32: 1, 1, 2, 1>} : memref<2x18x18x8xf32, #tpu.memory_space<vmem>>, vector<2x18x8x8xf32>
    %c0_90 = arith.constant 0 : index
    %c0_91 = arith.constant 0 : index
    %c1_92 = arith.constant 1 : index
    %c0_93 = arith.constant 0 : index
    %37 = tpu.strided_load %arg6[%c0_90, %c0_91, %c1_92, %c0_93] {strides = array<i32: 1, 1, 2, 1>} : memref<2x18x18x8xf32, #tpu.memory_space<vmem>>, vector<2x18x8x8xf32>
    %cst_94 = arith.constant 3.000000e+00 : f32
    %38 = vector.broadcast %cst_94 : f32 to vector<2x18x8x8xf32>
    %39 = arith.mulf %38, %37 : vector<2x18x8x8xf32>
    %40 = arith.addf %36, %39 : vector<2x18x8x8xf32>
    %c0_95 = arith.constant 0 : index
    %c0_96 = arith.constant 0 : index
    %c2 = arith.constant 2 : index
    %c0_97 = arith.constant 0 : index
    %41 = tpu.strided_load %arg6[%c0_95, %c0_96, %c2, %c0_97] {strides = array<i32: 1, 1, 2, 1>} : memref<2x18x18x8xf32, #tpu.memory_space<vmem>>, vector<2x18x8x8xf32>
    %cst_98 = arith.constant 3.000000e+00 : f32
    %42 = vector.broadcast %cst_98 : f32 to vector<2x18x8x8xf32>
    %43 = arith.mulf %42, %41 : vector<2x18x8x8xf32>
    %44 = arith.addf %40, %43 : vector<2x18x8x8xf32>
    %c0_99 = arith.constant 0 : index
    %c0_100 = arith.constant 0 : index
    %c3 = arith.constant 3 : index
    %c0_101 = arith.constant 0 : index
    %45 = tpu.strided_load %arg6[%c0_99, %c0_100, %c3, %c0_101] {strides = array<i32: 1, 1, 2, 1>} : memref<2x18x18x8xf32, #tpu.memory_space<vmem>>, vector<2x18x8x8xf32>
    %46 = arith.addf %44, %45 : vector<2x18x8x8xf32>
    %cst_102 = arith.constant 1.250000e-01 : f32
    %47 = vector.broadcast %cst_102 : f32 to vector<2x18x8x8xf32>
    %48 = arith.mulf %46, %47 : vector<2x18x8x8xf32>
    %c0_103 = arith.constant 0 : index
    %c0_104 = arith.constant 0 : index
    %c0_105 = arith.constant 0 : index
    %c0_106 = arith.constant 0 : index
    %49 = vector.load %arg7[%c0_103, %c0_104, %c0_105, %c0_106] : memref<2x18x8x8xf32, #tpu.memory_space<vmem>>, vector<2x18x8x8xf32>
    tpu.vector_store %arg7[%c0_103, %c0_104, %c0_105, %c0_106], %48 {strides = array<i32>} : memref<2x18x8x8xf32, #tpu.memory_space<vmem>>, vector<2x18x8x8xf32>,
    %c0_107 = arith.constant 0 : index
    %c0_108 = arith.constant 0 : index
    %c0_109 = arith.constant 0 : index
    %c0_110 = arith.constant 0 : index
    %50 = tpu.strided_load %arg7[%c0_107, %c0_108, %c0_109, %c0_110] {strides = array<i32: 1, 2, 1, 1>} : memref<2x18x8x8xf32, #tpu.memory_space<vmem>>, vector<2x8x8x8xf32>
    %c0_111 = arith.constant 0 : index
    %c1_112 = arith.constant 1 : index
    %c0_113 = arith.constant 0 : index
    %c0_114 = arith.constant 0 : index
    %51 = tpu.strided_load %arg7[%c0_111, %c1_112, %c0_113, %c0_114] {strides = array<i32: 1, 2, 1, 1>} : memref<2x18x8x8xf32, #tpu.memory_space<vmem>>, vector<2x8x8x8xf32>
    %cst_115 = arith.constant 3.000000e+00 : f32
    %52 = vector.broadcast %cst_115 : f32 to vector<2x8x8x8xf32>
    %53 = arith.mulf %52, %51 : vector<2x8x8x8xf32>
    %54 = arith.addf %50, %53 : vector<2x8x8x8xf32>
    %c0_116 = arith.constant 0 : index
    %c2_117 = arith.constant 2 : index
    %c0_118 = arith.constant 0 : index
    %c0_119 = arith.constant 0 : index
    %55 = tpu.strided_load %arg7[%c0_116, %c2_117, %c0_118, %c0_119] {strides = array<i32: 1, 2, 1, 1>} : memref<2x18x8x8xf32, #tpu.memory_space<vmem>>, vector<2x8x8x8xf32>
    %cst_120 = arith.constant 3.000000e+00 : f32
    %56 = vector.broadcast %cst_120 : f32 to vector<2x8x8x8xf32>
    %57 = arith.mulf %56, %55 : vector<2x8x8x8xf32>
    %58 = arith.addf %54, %57 : vector<2x8x8x8xf32>
    %c0_121 = arith.constant 0 : index
    %c3_122 = arith.constant 3 : index
    %c0_123 = arith.constant 0 : index
    %c0_124 = arith.constant 0 : index
    %59 = tpu.strided_load %arg7[%c0_121, %c3_122, %c0_123, %c0_124] {strides = array<i32: 1, 2, 1, 1>} : memref<2x18x8x8xf32, #tpu.memory_space<vmem>>, vector<2x8x8x8xf32>
    %60 = arith.addf %58, %59 : vector<2x8x8x8xf32>
    %cst_125 = arith.constant 1.250000e-01 : f32
    %61 = vector.broadcast %cst_125 : f32 to vector<2x8x8x8xf32>
    %62 = arith.mulf %60, %61 : vector<2x8x8x8xf32>
    %cst_126 = arith.constant 0.000000e+00 : f32
    %63 = vector.broadcast %cst_126 : f32 to vector<2x8x8x8xf32>
    %64 = arith.cmpf oge, %62, %63 : vector<2x8x8x8xf32>
    %cst_127 = arith.constant 2.000000e-01 : f32
    %65 = vector.broadcast %cst_127 : f32 to vector<2x8x8x8xf32>
    %66 = arith.mulf %65, %62 : vector<2x8x8x8xf32>
    %67 = arith.select %64, %62, %66 : vector<2x8x8x8xi1>, vector<2x8x8x8xf32>
    %68 = vector.shape_cast %67 : vector<2x8x8x8xf32> to vector<2x64x8xf32>
    %69 = vector.extract_strided_slice %68 {offsets = [0, 0, 0], sizes = [1, 64, 8], strides = [1, 1, 1]} : vector<2x64x8xf32> to vector<1x64x8xf32>
    %70 = vector.shape_cast %69 : vector<1x64x8xf32> to vector<64x8xf32>
    %71 = tpu.transpose %70, [1, 0] : vector<64x8xf32> -> vector<8x64xf32>
    %c0_128 = arith.constant 0 : index
    %c0_129 = arith.constant 0 : index
    %c0_130 = arith.constant 0 : index
    %72 = vector.load %arg4[%c0_128, %c0_129, %c0_130] : memref<2x8x64xf32, #tpu.memory_space<vmem>>, vector<1x8x64xf32>
    %73 = vector.shape_cast %72 : vector<1x8x64xf32> to vector<8x64xf32>
    %74 = vector.shape_cast %71 : vector<8x64xf32> to vector<1x8x64xf32>
    tpu.vector_store %arg4[%c0_128, %c0_129, %c0_130], %74 {strides = array<i32>} : memref<2x8x64xf32, #tpu.memory_space<vmem>>, vector<1x8x64xf32>,
    %75 = vector.extract_strided_slice %68 {offsets = [1, 0, 0], sizes = [1, 64, 8], strides = [1, 1, 1]} : vector<2x64x8xf32> to vector<1x64x8xf32>
    %76 = vector.shape_cast %75 : vector<1x64x8xf32> to vector<64x8xf32>
    %77 = tpu.transpose %76, [1, 0] : vector<64x8xf32> -> vector<8x64xf32>
    %c1_131 = arith.constant 1 : index
    %c0_132 = arith.constant 0 : index
    %c0_133 = arith.constant 0 : index
    %78 = vector.load %arg4[%c1_131, %c0_132, %c0_133] : memref<2x8x64xf32, #tpu.memory_space<vmem>>, vector<1x8x64xf32>
    %79 = vector.shape_cast %78 : vector<1x8x64xf32> to vector<8x64xf32>
    %80 = vector.shape_cast %77 : vector<8x64xf32> to vector<1x8x64xf32>
    tpu.vector_store %arg4[%c1_131, %c0_132, %c0_133], %80 {strides = array<i32>} : memref<2x8x64xf32, #tpu.memory_space<vmem>>, vector<1x8x64xf32>,
    return
  }
  func.func @transform_0(%arg0: i32) -> (i32, i32, i32, i32) {
    %c0_i32 = arith.constant 0 : i32
    %c0_i32_0 = arith.constant 0 : i32
    %c0_i32_1 = arith.constant 0 : i32
    %c0_i32_2 = arith.constant 0 : i32
    return %arg0, %c0_i32, %c0_i32_0, %c0_i32_1 : i32, i32, i32, i32
  }
  func.func @transform_1(%arg0: i32) -> (i32, i32) {
    %c0_i32 = arith.constant 0 : i32
    %c0_i32_0 = arith.constant 0 : i32
    %c0_i32_1 = arith.constant 0 : i32
    return %c0_i32, %c0_i32_0 : i32, i32
  }
  func.func @transform_2(%arg0: i32) -> (i32, i32) {
    %c0_i32 = arith.constant 0 : i32
    %c0_i32_0 = arith.constant 0 : i32
    %c0_i32_1 = arith.constant 0 : i32
    return %c0_i32, %c0_i32_0 : i32, i32
  }
  func.func @transform_3(%arg0: i32) -> (i32, i32, i32) {
    %c0_i32 = arith.constant 0 : i32
    %c0_i32_0 = arith.constant 0 : i32
    %c0_i32_1 = arith.constant 0 : i32
    return %arg0, %c0_i32, %c0_i32_0 : i32, i32, i32
  }
}

</mosaic_0001>

<llo_original>
// kernel: downblock_pallas.1
$region0: #{downblock_pallas.1}
  #allocation0 [shape = 'u32[]', space=smem, size = 0x4, offset = 0x4, fixed_abs, tag = 'smem constant byte address 0x4 - core index']
  #allocation1 [shape = 'u32[144,128]{1,0:T(1,128)}', space=vmem, size = 0x12000, scoped, tag = 'internal scratch']
  #allocation2 [shape = 'bf16[2,16,16,36]{3,2,1,0:T(16,128)(2,1)}', space=vmem, size = 0x20000, scoped, tag = 'scratch operand']
  #allocation3 [shape = 'f32[2,18,18,8]{3,2,1,0:T(8,128)}', space=vmem, size = 0x6c000, scoped, tag = 'scratch operand']
  #allocation4 [shape = 'f32[2,18,8,8]{3,2,1,0:T(8,128)}', space=vmem, size = 0x24000, scoped, tag = 'scratch operand']
  %s0 = inlined_call_operand.vmem [shape: bf16[2,16,16,4], index: 0, kind: input, shape index: {}]
  %s1 = inlined_call_operand.vmem [shape: bf16[36,8], index: 1, kind: input, shape index: {}]
  %s2 = inlined_call_operand.vmem [shape: f32[1,8], index: 2, kind: input, shape index: {}]
  %s3 = inlined_call_operand.vmem [shape: f32[2,8,64], index: 3, kind: output, shape index: {}]
  %s4 = sld [smem:[#allocation0]]
  $region22: #{downblock_pallas.1} parent=0
    _
  %s6 = ssub.s32 1, %s4
  %s7 = scalar_select 0, %s6, %s4
  // Predicated region
  $region2: #{downblock_pallas.1} parent=0 // pred_check
    _
  $region3: #{downblock_pallas.1} parent=0 // pred_check_branch
    %9 = sbr.rel (0) target = $region5
  $region4: #{downblock_pallas.1} parent=0 // pred_region
    _
  $region5: #{downblock_pallas.1} parent=0 // pred_fallthru
    _
  // Predicated region
  $region6: #{downblock_pallas.1} parent=0 // pred_check
    _
  $region7: #{downblock_pallas.1} parent=0 // pred_check_branch
    %11 = sbr.rel (0) target = $region9
  $region8: #{downblock_pallas.1} parent=0 // pred_region
    _
  $region9: #{downblock_pallas.1} parent=0 // pred_fallthru
    _
  // Predicated region
  $region10: #{downblock_pallas.1} parent=0 // pred_check
    _
  $region11: #{downblock_pallas.1} parent=0 // pred_check_branch
    %13 = sbr.rel (0) target = $region13
  $region12: #{downblock_pallas.1} parent=0 // pred_region
    _
  $region13: #{downblock_pallas.1} parent=0 // pred_fallthru
    _
  %vm15 = vcmask 293888
  %16 = vst.msk [vmem:[#allocation2] sm:$0xff] %vm15, 0
  %17 = vst.msk [vmem:[#allocation2 + $0x8] sm:$0xff] %vm15, 0
  %18 = vst.msk [vmem:[#allocation2 + $0x10] sm:$0xff] %vm15, 0
  %19 = vst.msk [vmem:[#allocation2 + $0x18] sm:$0xff] %vm15, 0
  %20 = vst.msk [vmem:[#allocation2 + $0x20] sm:$0xff] %vm15, 0
  %21 = vst.msk [vmem:[#allocation2 + $0x28] sm:$0xff] %vm15, 0
  %22 = vst.msk [vmem:[#allocation2 + $0x30] sm:$0xff] %vm15, 0
  %23 = vst.msk [vmem:[#allocation2 + $0x38] sm:$0xff] %vm15, 0
  %24 = vst.msk [vmem:[#allocation2 + $0x40] sm:$0xff] %vm15, 0
  %25 = vst.msk [vmem:[#allocation2 + $0x48] sm:$0xff] %vm15, 0
  %26 = vst.msk [vmem:[#allocation2 + $0x50] sm:$0xff] %vm15, 0
  %27 = vst.msk [vmem:[#allocation2 + $0x58] sm:$0xff] %vm15, 0
  %28 = vst.msk [vmem:[#allocation2 + $0x60] sm:$0xff] %vm15, 0
  %29 = vst.msk [vmem:[#allocation2 + $0x68] sm:$0xff] %vm15, 0
  %30 = vst.msk [vmem:[#allocation2 + $0x70] sm:$0xff] %vm15, 0
  %31 = vst.msk [vmem:[#allocation2 + $0x78] sm:$0xff] %vm15, 0
  %32 = vst.msk [vmem:[#allocation2 + $0x80] sm:$0xff] %vm15, 0
  %33 = vst.msk [vmem:[#allocation2 + $0x88] sm:$0xff] %vm15, 0
  %34 = vst.msk [vmem:[#allocation2 + $0x90] sm:$0xff] %vm15, 0
  %35 = vst.msk [vmem:[#allocation2 + $0x98] sm:$0xff] %vm15, 0
  %36 = vst.msk [vmem:[#allocation2 + $0xa0] sm:$0xff] %vm15, 0
  %37 = vst.msk [vmem:[#allocation2 + $0xa8] sm:$0xff] %vm15, 0
  %38 = vst.msk [vmem:[#allocation2 + $0xb0] sm:$0xff] %vm15, 0
  %39 = vst.msk [vmem:[#allocation2 + $0xb8] sm:$0xff] %vm15, 0
  %40 = vst.msk [vmem:[#allocation2 + $0xc0] sm:$0xff] %vm15, 0
  %41 = vst.msk [vmem:[#allocation2 + $0xc8] sm:$0xff] %vm15, 0
  %42 = vst.msk [vmem:[#allocation2 + $0xd0] sm:$0xff] %vm15, 0
  %43 = vst.msk [vmem:[#allocation2 + $0xd8] sm:$0xff] %vm15, 0
  %44 = vst.msk [vmem:[#allocation2 + $0xe0] sm:$0xff] %vm15, 0
  %45 = vst.msk [vmem:[#allocation2 + $0xe8] sm:$0xff] %vm15, 0
  %46 = vst.msk [vmem:[#allocation2 + $0xf0] sm:$0xff] %vm15, 0
  %47 = vst.msk [vmem:[#allocation2 + $0xf8] sm:$0xff] %vm15, 0
  %vm48 = vcmask 64512
  %49 = vst.msk [vmem:[#allocation3] sm:$0xff] %vm48, 0.0
  %50 = vst.msk [vmem:[#allocation3 + $0x8] sm:$0xff] %vm48, 0.0
  %vm51 = vcmask 58368
  %52 = vst.msk [vmem:[#allocation3 + $0x10] sm:$0x3] %vm51, 0.0
  %53 = vst.msk [vmem:[#allocation3 + $0x18] sm:$0xff] %vm48, 0.0
  %54 = vst.msk [vmem:[#allocation3 + $0x20] sm:$0xff] %vm48, 0.0
  %55 = vst.msk [vmem:[#allocation3 + $0x28] sm:$0x3] %vm51, 0.0
  %56 = vst.msk [vmem:[#allocation3 + $0x30] sm:$0xff] %vm48, 0.0
  %57 = vst.msk [vmem:[#allocation3 + $0x38] sm:$0xff] %vm48, 0.0
  %58 = vst.msk [vmem:[#allocation3 + $0x40] sm:$0x3] %vm51, 0.0
  %59 = vst.msk [vmem:[#allocation3 + $0x48] sm:$0xff] %vm48, 0.0
  %60 = vst.msk [vmem:[#allocation3 + $0x50] sm:$0xff] %vm48, 0.0
  %61 = vst.msk [vmem:[#allocation3 + $0x58] sm:$0x3] %vm51, 0.0
  %62 = vst.msk [vmem:[#allocation3 + $0x60] sm:$0xff] %vm48, 0.0
  %63 = vst.msk [vmem:[#allocation3 + $0x68] sm:$0xff] %vm48, 0.0
  %64 = vst.msk [vmem:[#allocation3 + $0x70] sm:$0x3] %vm51, 0.0
  %65 = vst.msk [vmem:[#allocation3 + $0x78] sm:$0xff] %vm48, 0.0
  %66 = vst.msk [vmem:[#allocation3 + $0x80] sm:$0xff] %vm48, 0.0
  %67 = vst.msk [vmem:[#allocation3 + $0x88] sm:$0x3] %vm51, 0.0
  %68 = vst.msk [vmem:[#allocation3 + $0x90] sm:$0xff] %vm48, 0.0
  %69 = vst.msk [vmem:[#allocation3 + $0x98] sm:$0xff] %vm48, 0.0
  %70 = vst.msk [vmem:[#allocation3 + $0xa0] sm:$0x3] %vm51, 0.0
  %71 = vst.msk [vmem:[#allocation3 + $0xa8] sm:$0xff] %vm48, 0.0
  %72 = vst.msk [vmem:[#allocation3 + $0xb0] sm:$0xff] %vm48, 0.0
  %73 = vst.msk [vmem:[#allocation3 + $0xb8] sm:$0x3] %vm51, 0.0
  %74 = vst.msk [vmem:[#allocation3 + $0xc0] sm:$0xff] %vm48, 0.0
  %75 = vst.msk [vmem:[#allocation3 + $0xc8] sm:$0xff] %vm48, 0.0
  %76 = vst.msk [vmem:[#allocation3 + $0xd0] sm:$0x3] %vm51, 0.0
  %77 = vst.msk [vmem:[#allocation3 + $0xd8] sm:$0xff] %vm48, 0.0
  %78 = vst.msk [vmem:[#allocation3 + $0xe0] sm:$0xff] %vm48, 0.0
  %79 = vst.msk [vmem:[#allocation3 + $0xe8] sm:$0x3] %vm51, 0.0
  %80 = vst.msk [vmem:[#allocation3 + $0xf0] sm:$0xff] %vm48, 0.0
  %81 = vst.msk [vmem:[#allocation3 + $0xf8] sm:$0xff] %vm48, 0.0
  %82 = vst.msk [vmem:[#allocation3 + $0x100] sm:$0x3] %vm51, 0.0
  %83 = vst.msk [vmem:[#allocation3 + $0x108] sm:$0xff] %vm48, 0.0
  %84 = vst.msk [vmem:[#allocation3 + $0x110] sm:$0xff] %vm48, 0.0
  %85 = vst.msk [vmem:[#allocation3 + $0x118] sm:$0x3] %vm51, 0.0
  %86 = vst.msk [vmem:[#allocation3 + $0x120] sm:$0xff] %vm48, 0.0
  %87 = vst.msk [vmem:[#allocation3 + $0x128] sm:$0xff] %vm48, 0.0
  %88 = vst.msk [vmem:[#allocation3 + $0x130] sm:$0x3] %vm51, 0.0
  %89 = vst.msk [vmem:[#allocation3 + $0x138] sm:$0xff] %vm48, 0.0
  %90 = vst.msk [vmem:[#allocation3 + $0x140] sm:$0xff] %vm48, 0.0
  %91 = vst.msk [vmem:[#allocation3 + $0x148] sm:$0x3] %vm51, 0.0
  %92 = vst.msk [vmem:[#allocation3 + $0x150] sm:$0xff] %vm48, 0.0
  %93 = vst.msk [vmem:[#allocation3 + $0x158] sm:$0xff] %vm48, 0.0
  %94 = vst.msk [vmem:[#allocation3 + $0x160] sm:$0x3] %vm51, 0.0
  %95 = vst.msk [vmem:[#allocation3 + $0x168] sm:$0xff] %vm48, 0.0
  %96 = vst.msk [vmem:[#allocation3 + $0x170] sm:$0xff] %vm48, 0.0
  %97 = vst.msk [vmem:[#allocation3 + $0x178] sm:$0x3] %vm51, 0.0
  %98 = vst.msk [vmem:[#allocation3 + $0x180] sm:$0xff] %vm48, 0.0
  %99 = vst.msk [vmem:[#allocation3 + $0x188] sm:$0xff] %vm48, 0.0
  %100 = vst.msk [vmem:[#allocation3 + $0x190] sm:$0x3] %vm51, 0.0
  %101 = vst.msk [vmem:[#allocation3 + $0x198] sm:$0xff] %vm48, 0.0
  %102 = vst.msk [vmem:[#allocation3 + $0x1a0] sm:$0xff] %vm48, 0.0
  %103 = vst.msk [vmem:[#allocation3 + $0x1a8] sm:$0x3] %vm51, 0.0
  %104 = vst.msk [vmem:[#allocation3 + $0x1b0] sm:$0xff] %vm48, 0.0
  %105 = vst.msk [vmem:[#allocation3 + $0x1b8] sm:$0xff] %vm48, 0.0
  %106 = vst.msk [vmem:[#allocation3 + $0x1c0] sm:$0x3] %vm51, 0.0
  %107 = vst.msk [vmem:[#allocation3 + $0x1c8] sm:$0xff] %vm48, 0.0
  %108 = vst.msk [vmem:[#allocation3 + $0x1d0] sm:$0xff] %vm48, 0.0
  %109 = vst.msk [vmem:[#allocation3 + $0x1d8] sm:$0x3] %vm51, 0.0
  %110 = vst.msk [vmem:[#allocation3 + $0x1e0] sm:$0xff] %vm48, 0.0
  %111 = vst.msk [vmem:[#allocation3 + $0x1e8] sm:$0xff] %vm48, 0.0
  %112 = vst.msk [vmem:[#allocation3 + $0x1f0] sm:$0x3] %vm51, 0.0
  %113 = vst.msk [vmem:[#allocation3 + $0x1f8] sm:$0xff] %vm48, 0.0
  %114 = vst.msk [vmem:[#allocation3 + $0x200] sm:$0xff] %vm48, 0.0
  %115 = vst.msk [vmem:[#allocation3 + $0x208] sm:$0x3] %vm51, 0.0
  %116 = vst.msk [vmem:[#allocation3 + $0x210] sm:$0xff] %vm48, 0.0
  %117 = vst.msk [vmem:[#allocation3 + $0x218] sm:$0xff] %vm48, 0.0
  %118 = vst.msk [vmem:[#allocation3 + $0x220] sm:$0x3] %vm51, 0.0
  %119 = vst.msk [vmem:[#allocation3 + $0x228] sm:$0xff] %vm48, 0.0
  %120 = vst.msk [vmem:[#allocation3 + $0x230] sm:$0xff] %vm48, 0.0
  %121 = vst.msk [vmem:[#allocation3 + $0x238] sm:$0x3] %vm51, 0.0
  %122 = vst.msk [vmem:[#allocation3 + $0x240] sm:$0xff] %vm48, 0.0
  %123 = vst.msk [vmem:[#allocation3 + $0x248] sm:$0xff] %vm48, 0.0
  %124 = vst.msk [vmem:[#allocation3 + $0x250] sm:$0x3] %vm51, 0.0
  %125 = vst.msk [vmem:[#allocation3 + $0x258] sm:$0xff] %vm48, 0.0
  %126 = vst.msk [vmem:[#allocation3 + $0x260] sm:$0xff] %vm48, 0.0
  %127 = vst.msk [vmem:[#allocation3 + $0x268] sm:$0x3] %vm51, 0.0
  %128 = vst.msk [vmem:[#allocation3 + $0x270] sm:$0xff] %vm48, 0.0
  %129 = vst.msk [vmem:[#allocation3 + $0x278] sm:$0xff] %vm48, 0.0
  %130 = vst.msk [vmem:[#allocation3 + $0x280] sm:$0x3] %vm51, 0.0
  %131 = vst.msk [vmem:[#allocation3 + $0x288] sm:$0xff] %vm48, 0.0
  %132 = vst.msk [vmem:[#allocation3 + $0x290] sm:$0xff] %vm48, 0.0
  %133 = vst.msk [vmem:[#allocation3 + $0x298] sm:$0x3] %vm51, 0.0
  %134 = vst.msk [vmem:[#allocation3 + $0x2a0] sm:$0xff] %vm48, 0.0
  %135 = vst.msk [vmem:[#allocation3 + $0x2a8] sm:$0xff] %vm48, 0.0
  %136 = vst.msk [vmem:[#allocation3 + $0x2b0] sm:$0x3] %vm51, 0.0
  %137 = vst.msk [vmem:[#allocation3 + $0x2b8] sm:$0xff] %vm48, 0.0
  %138 = vst.msk [vmem:[#allocation3 + $0x2c0] sm:$0xff] %vm48, 0.0
  %139 = vst.msk [vmem:[#allocation3 + $0x2c8] sm:$0x3] %vm51, 0.0
  %140 = vst.msk [vmem:[#allocation3 + $0x2d0] sm:$0xff] %vm48, 0.0
  %141 = vst.msk [vmem:[#allocation3 + $0x2d8] sm:$0xff] %vm48, 0.0
  %142 = vst.msk [vmem:[#allocation3 + $0x2e0] sm:$0x3] %vm51, 0.0
  %143 = vst.msk [vmem:[#allocation3 + $0x2e8] sm:$0xff] %vm48, 0.0
  %144 = vst.msk [vmem:[#allocation3 + $0x2f0] sm:$0xff] %vm48, 0.0
  %145 = vst.msk [vmem:[#allocation3 + $0x2f8] sm:$0x3] %vm51, 0.0
  %146 = vst.msk [vmem:[#allocation3 + $0x300] sm:$0xff] %vm48, 0.0
  %147 = vst.msk [vmem:[#allocation3 + $0x308] sm:$0xff] %vm48, 0.0
  %148 = vst.msk [vmem:[#allocation3 + $0x310] sm:$0x3] %vm51, 0.0
  %149 = vst.msk [vmem:[#allocation3 + $0x318] sm:$0xff] %vm48, 0.0
  %150 = vst.msk [vmem:[#allocation3 + $0x320] sm:$0xff] %vm48, 0.0
  %151 = vst.msk [vmem:[#allocation3 + $0x328] sm:$0x3] %vm51, 0.0
  %152 = vst.msk [vmem:[#allocation3 + $0x330] sm:$0xff] %vm48, 0.0
  %153 = vst.msk [vmem:[#allocation3 + $0x338] sm:$0xff] %vm48, 0.0
  %154 = vst.msk [vmem:[#allocation3 + $0x340] sm:$0x3] %vm51, 0.0
  %155 = vst.msk [vmem:[#allocation3 + $0x348] sm:$0xff] %vm48, 0.0
  %156 = vst.msk [vmem:[#allocation3 + $0x350] sm:$0xff] %vm48, 0.0
  %157 = vst.msk [vmem:[#allocation3 + $0x358] sm:$0x3] %vm51, 0.0
  %v158 = vld [vmem:[%s0] sm:$0xf]
  %v159 = vld [vmem:[%s0 + $0x4] sm:$0xf]
  %v160 = vld [vmem:[%s0 + $0x8] sm:$0xf]
  %v161 = vld [vmem:[%s0 + $0xc] sm:$0xf]
  %v162 = vld [vmem:[%s0 + $0x10] sm:$0xf]
  %v163 = vld [vmem:[%s0 + $0x14] sm:$0xf]
  %v164 = vld [vmem:[%s0 + $0x18] sm:$0xf]
  %v165 = vld [vmem:[%s0 + $0x1c] sm:$0xf]
  %v166 = vld [vmem:[%s0 + $0x20] sm:$0xf]
  %v167 = vld [vmem:[%s0 + $0x24] sm:$0xf]
  %v168 = vld [vmem:[%s0 + $0x28] sm:$0xf]
  %v169 = vld [vmem:[%s0 + $0x2c] sm:$0xf]
  %v170 = vld [vmem:[%s0 + $0x30] sm:$0xf]
  %v171 = vld [vmem:[%s0 + $0x34] sm:$0xf]
  %v172 = vld [vmem:[%s0 + $0x38] sm:$0xf]
  %v173 = vld [vmem:[%s0 + $0x3c] sm:$0xf]
  %v174 = vld [vmem:[%s0 + $0x40] sm:$0xf]
  %v175 = vld [vmem:[%s0 + $0x44] sm:$0xf]
  %v176 = vld [vmem:[%s0 + $0x48] sm:$0xf]
  %v177 = vld [vmem:[%s0 + $0x4c] sm:$0xf]
  %v178 = vld [vmem:[%s0 + $0x50] sm:$0xf]
  %v179 = vld [vmem:[%s0 + $0x54] sm:$0xf]
  %v180 = vld [vmem:[%s0 + $0x58] sm:$0xf]
  %v181 = vld [vmem:[%s0 + $0x5c] sm:$0xf]
  %v182 = vld [vmem:[%s0 + $0x60] sm:$0xf]
  %v183 = vld [vmem:[%s0 + $0x64] sm:$0xf]
  %v184 = vld [vmem:[%s0 + $0x68] sm:$0xf]
  %v185 = vld [vmem:[%s0 + $0x6c] sm:$0xf]
  %v186 = vld [vmem:[%s0 + $0x70] sm:$0xf]
  %v187 = vld [vmem:[%s0 + $0x74] sm:$0xf]
  %v188 = vld [vmem:[%s0 + $0x80] sm:$0xf]
  %v189 = vld [vmem:[%s0 + $0x84] sm:$0xf]
  %v190 = vld [vmem:[%s0 + $0x88] sm:$0xf]
  %v191 = vld [vmem:[%s0 + $0x8c] sm:$0xf]
  %v192 = vld [vmem:[%s0 + $0x90] sm:$0xf]
  %v193 = vld [vmem:[%s0 + $0x94] sm:$0xf]
  %v194 = vld [vmem:[%s0 + $0x98] sm:$0xf]
  %v195 = vld [vmem:[%s0 + $0x9c] sm:$0xf]
  %v196 = vld [vmem:[%s0 + $0xa0] sm:$0xf]
  %v197 = vld [vmem:[%s0 + $0xa4] sm:$0xf]
  %v198 = vld [vmem:[%s0 + $0xa8] sm:$0xf]
  %v199 = vld [vmem:[%s0 + $0xac] sm:$0xf]
  %v200 = vld [vmem:[%s0 + $0xb0] sm:$0xf]
  %v201 = vld [vmem:[%s0 + $0xb4] sm:$0xf]
  %v202 = vld [vmem:[%s0 + $0xb8] sm:$0xf]
  %v203 = vld [vmem:[%s0 + $0xbc] sm:$0xf]
  %v204 = vld [vmem:[%s0 + $0xc0] sm:$0xf]
  %v205 = vld [vmem:[%s0 + $0xc4] sm:$0xf]
  %v206 = vld [vmem:[%s0 + $0xc8] sm:$0xf]
  %v207 = vld [vmem:[%s0 + $0xcc] sm:$0xf]
  %v208 = vld [vmem:[%s0 + $0xd0] sm:$0xf]
  %v209 = vld [vmem:[%s0 + $0xd4] sm:$0xf]
  %v210 = vld [vmem:[%s0 + $0xd8] sm:$0xf]
  %v211 = vld [vmem:[%s0 + $0xdc] sm:$0xf]
  %v212 = vld [vmem:[%s0 + $0xe0] sm:$0xf]
  %v213 = vld [vmem:[%s0 + $0xe4] sm:$0xf]
  %v214 = vld [vmem:[%s0 + $0xe8] sm:$0xf]
  %v215 = vld [vmem:[%s0 + $0xec] sm:$0xf]
  %v216 = vld [vmem:[%s0 + $0xf0] sm:$0xf]
  %v217 = vld [vmem:[%s0 + $0xf4] sm:$0xf]
  %v278 = vunpack.c.l.b16 %v158
  %v279 = vunpack.c.l.b16 %v159
  %v280 = vunpack.c.l.b16 %v160
  %v281 = vunpack.c.l.b16 %v161
  %v282 = vunpack.c.l.b16 %v162
  %v283 = vunpack.c.l.b16 %v163
  %v284 = vunpack.c.l.b16 %v164
  %v285 = vunpack.c.l.b16 %v165
  %v286 = vunpack.c.l.b16 %v166
  %v287 = vunpack.c.l.b16 %v167
  %v288 = vunpack.c.l.b16 %v168
  %v289 = vunpack.c.l.b16 %v169
  %v290 = vunpack.c.l.b16 %v170
  %v291 = vunpack.c.l.b16 %v171
  %v292 = vunpack.c.l.b16 %v172
  %v293 = vunpack.c.l.b16 %v173
  %v294 = vunpack.c.l.b16 %v174
  %v295 = vunpack.c.l.b16 %v175
  %v296 = vunpack.c.l.b16 %v176
  %v297 = vunpack.c.l.b16 %v177
  %v298 = vunpack.c.l.b16 %v178
  %v299 = vunpack.c.l.b16 %v179
  %v300 = vunpack.c.l.b16 %v180
  %v301 = vunpack.c.l.b16 %v181
  %v302 = vunpack.c.l.b16 %v182
  %v303 = vunpack.c.l.b16 %v183
  %v304 = vunpack.c.l.b16 %v184
  %v305 = vunpack.c.l.b16 %v185
  %v306 = vunpack.c.l.b16 %v186
  %v307 = vunpack.c.l.b16 %v187
  %v308 = vunpack.c.l.b16 %v188
  %v309 = vunpack.c.l.b16 %v189
  %v310 = vunpack.c.l.b16 %v190
  %v311 = vunpack.c.l.b16 %v191
  %v312 = vunpack.c.l.b16 %v192
  %v313 = vunpack.c.l.b16 %v193
  %v314 = vunpack.c.l.b16 %v194
  %v315 = vunpack.c.l.b16 %v195
  %v316 = vunpack.c.l.b16 %v196
  %v317 = vunpack.c.l.b16 %v197
  %v318 = vunpack.c.l.b16 %v198
  %v319 = vunpack.c.l.b16 %v199
  %v320 = vunpack.c.l.b16 %v200
  %v321 = vunpack.c.l.b16 %v201
  %v322 = vunpack.c.l.b16 %v202
  %v323 = vunpack.c.l.b16 %v203
  %v324 = vunpack.c.l.b16 %v204
  %v325 = vunpack.c.l.b16 %v205
  %v326 = vunpack.c.l.b16 %v206
  %v327 = vunpack.c.l.b16 %v207
  %v328 = vunpack.c.l.b16 %v208
  %v329 = vunpack.c.l.b16 %v209
  %v330 = vunpack.c.l.b16 %v210
  %v331 = vunpack.c.l.b16 %v211
  %v332 = vunpack.c.l.b16 %v212
  %v333 = vunpack.c.l.b16 %v213
  %v334 = vunpack.c.l.b16 %v214
  %v335 = vunpack.c.l.b16 %v215
  %v336 = vunpack.c.l.b16 %v216
  %v337 = vunpack.c.l.b16 %v217
  %v338 = vpack.c.b16 %v279, %v278
  %v339 = vpack.c.b16 %v281, %v280
  %v340 = vpack.c.b16 %v283, %v282
  %v341 = vpack.c.b16 %v285, %v284
  %v342 = vpack.c.b16 %v287, %v286
  %v343 = vpack.c.b16 %v289, %v288
  %v344 = vpack.c.b16 %v291, %v290
  %v345 = vpack.c.b16 %v293, %v292
  %v346 = vpack.c.b16 %v295, %v294
  %v347 = vpack.c.b16 %v297, %v296
  %v348 = vpack.c.b16 %v299, %v298
  %v349 = vpack.c.b16 %v301, %v300
  %v350 = vpack.c.b16 %v303, %v302
  %v351 = vpack.c.b16 %v305, %v304
  %v352 = vpack.c.b16 %v307, %v306
  %v353 = vpack.c.b16 %v309, %v308
  %v354 = vpack.c.b16 %v311, %v310
  %v355 = vpack.c.b16 %v313, %v312
  %v356 = vpack.c.b16 %v315, %v314
  %v357 = vpack.c.b16 %v317, %v316
  %v358 = vpack.c.b16 %v319, %v318
  %v359 = vpack.c.b16 %v321, %v320
  %v360 = vpack.c.b16 %v323, %v322
  %v361 = vpack.c.b16 %v325, %v324
  %v362 = vpack.c.b16 %v327, %v326
  %v363 = vpack.c.b16 %v329, %v328
  %v364 = vpack.c.b16 %v331, %v330
  %v365 = vpack.c.b16 %v333, %v332
  %v366 = vpack.c.b16 %v335, %v334
  %v367 = vpack.c.b16 %v337, %v336
  %v369 = vshrl.u32 %v338, 16
  %v371 = vrot.slane %v369, 7
  %v372 = vshll.u32 %v338, 16
  %v374 = vor.u32 %v371, %v372
  %v376 = vshrl.u32 %v339, 16
  %v378 = vrot.slane %v376, 7
  %v379 = vshll.u32 %v339, 16
  %v381 = vor.u32 %v378, %v379
  %v383 = vshrl.u32 %v340, 16
  %v385 = vrot.slane %v383, 7
  %v386 = vshll.u32 %v340, 16
  %v388 = vor.u32 %v385, %v386
  %v390 = vshrl.u32 %v341, 16
  %v392 = vrot.slane %v390, 7
  %v393 = vshll.u32 %v341, 16
  %v395 = vor.u32 %v392, %v393
  %v397 = vshrl.u32 %v342, 16
  %v399 = vrot.slane %v397, 7
  %v400 = vshll.u32 %v342, 16
  %v402 = vor.u32 %v399, %v400
  %v404 = vshrl.u32 %v343, 16
  %v406 = vrot.slane %v404, 7
  %v407 = vshll.u32 %v343, 16
  %v409 = vor.u32 %v406, %v407
  %v411 = vshrl.u32 %v344, 16
  %v413 = vrot.slane %v411, 7
  %v414 = vshll.u32 %v344, 16
  %v416 = vor.u32 %v413, %v414
  %v418 = vshrl.u32 %v345, 16
  %v420 = vrot.slane %v418, 7
  %v421 = vshll.u32 %v345, 16
  %v423 = vor.u32 %v420, %v421
  %v425 = vshrl.u32 %v346, 16
  %v427 = vrot.slane %v425, 7
  %v428 = vshll.u32 %v346, 16
  %v430 = vor.u32 %v427, %v428
  %v432 = vshrl.u32 %v347, 16
  %v434 = vrot.slane %v432, 7
  %v435 = vshll.u32 %v347, 16
  %v437 = vor.u32 %v434, %v435
  %v439 = vshrl.u32 %v348, 16
  %v441 = vrot.slane %v439, 7
  %v442 = vshll.u32 %v348, 16
  %v444 = vor.u32 %v441, %v442
  %v446 = vshrl.u32 %v349, 16
  %v448 = vrot.slane %v446, 7
  %v449 = vshll.u32 %v349, 16
  %v451 = vor.u32 %v448, %v449
  %v453 = vshrl.u32 %v350, 16
  %v455 = vrot.slane %v453, 7
  %v456 = vshll.u32 %v350, 16
  %v458 = vor.u32 %v455, %v456
  %v460 = vshrl.u32 %v351, 16
  %v462 = vrot.slane %v460, 7
  %v463 = vshll.u32 %v351, 16
  %v465 = vor.u32 %v462, %v463
  %v467 = vshrl.u32 %v352, 16
  %v469 = vrot.slane %v467, 7
  %v470 = vshll.u32 %v352, 16
  %v472 = vor.u32 %v469, %v470
  %v474 = vshrl.u32 %v353, 16
  %v476 = vrot.slane %v474, 7
  %v477 = vshll.u32 %v353, 16
  %v479 = vor.u32 %v476, %v477
  %v481 = vshrl.u32 %v354, 16
  %v483 = vrot.slane %v481, 7
  %v484 = vshll.u32 %v354, 16
  %v486 = vor.u32 %v483, %v484
  %v488 = vshrl.u32 %v355, 16
  %v490 = vrot.slane %v488, 7
  %v491 = vshll.u32 %v355, 16
  %v493 = vor.u32 %v490, %v491
  %v495 = vshrl.u32 %v356, 16
  %v497 = vrot.slane %v495, 7
  %v498 = vshll.u32 %v356, 16
  %v500 = vor.u32 %v497, %v498
  %v502 = vshrl.u32 %v357, 16
  %v504 = vrot.slane %v502, 7
  %v505 = vshll.u32 %v357, 16
  %v507 = vor.u32 %v504, %v505
  %v509 = vshrl.u32 %v358, 16
  %v511 = vrot.slane %v509, 7
  %v512 = vshll.u32 %v358, 16
  %v514 = vor.u32 %v511, %v512
  %v516 = vshrl.u32 %v359, 16
  %v518 = vrot.slane %v516, 7
  %v519 = vshll.u32 %v359, 16
  %v521 = vor.u32 %v518, %v519
  %v523 = vshrl.u32 %v360, 16
  %v525 = vrot.slane %v523, 7
  %v526 = vshll.u32 %v360, 16
  %v528 = vor.u32 %v525, %v526
  %v530 = vshrl.u32 %v361, 16
  %v532 = vrot.slane %v530, 7
  %v533 = vshll.u32 %v361, 16
  %v535 = vor.u32 %v532, %v533
  %v537 = vshrl.u32 %v362, 16
  %v539 = vrot.slane %v537, 7
  %v540 = vshll.u32 %v362, 16
  %v542 = vor.u32 %v539, %v540
  %v544 = vshrl.u32 %v363, 16
  %v546 = vrot.slane %v544, 7
  %v547 = vshll.u32 %v363, 16
  %v549 = vor.u32 %v546, %v547
  %v551 = vshrl.u32 %v364, 16
  %v553 = vrot.slane %v551, 7
  %v554 = vshll.u32 %v364, 16
  %v556 = vor.u32 %v553, %v554
  %v558 = vshrl.u32 %v365, 16
  %v560 = vrot.slane %v558, 7
  %v561 = vshll.u32 %v365, 16
  %v563 = vor.u32 %v560, %v561
  %v565 = vshrl.u32 %v366, 16
  %v567 = vrot.slane %v565, 7
  %v568 = vshll.u32 %v366, 16
  %v570 = vor.u32 %v567, %v568
  %v572 = vshrl.u32 %v367, 16
  %v574 = vrot.slane %v572, 7
  %v575 = vshll.u32 %v367, 16
  %v577 = vor.u32 %v574, %v575
  %s608 = scalar_lea.vmem [#allocation2], 8
  %vm609 = vcmask 31744
  %vm610 = vsmask.f32 7938
  %vm611 = vmand %vm609, %vm610
  %v612 = vld [vmem:[%s608] sm:$0xff]
  %v613 = vsel %vm611, %v374, %v612
  %614 = vst [vmem:[%s608] sm:$0xff] %v613
  %v615 = vld [vmem:[%s608 + $0x8] sm:$0xff]
  %v616 = vsel %vm611, %v381, %v615
  %617 = vst [vmem:[%s608 + $0x8] sm:$0xff] %v616
  %v618 = vld [vmem:[%s608 + $0x10] sm:$0xff]
  %v619 = vsel %vm611, %v388, %v618
  %620 = vst [vmem:[%s608 + $0x10] sm:$0xff] %v619
  %v621 = vld [vmem:[%s608 + $0x18] sm:$0xff]
  %v622 = vsel %vm611, %v395, %v621
  %623 = vst [vmem:[%s608 + $0x18] sm:$0xff] %v622
  %v624 = vld [vmem:[%s608 + $0x20] sm:$0xff]
  %v625 = vsel %vm611, %v402, %v624
  %626 = vst [vmem:[%s608 + $0x20] sm:$0xff] %v625
  %v627 = vld [vmem:[%s608 + $0x28] sm:$0xff]
  %v628 = vsel %vm611, %v409, %v627
  %629 = vst [vmem:[%s608 + $0x28] sm:$0xff] %v628
  %v630 = vld [vmem:[%s608 + $0x30] sm:$0xff]
  %v631 = vsel %vm611, %v416, %v630
  %632 = vst [vmem:[%s608 + $0x30] sm:$0xff] %v631
  %v633 = vld [vmem:[%s608 + $0x38] sm:$0xff]
  %v634 = vsel %vm611, %v423, %v633
  %635 = vst [vmem:[%s608 + $0x38] sm:$0xff] %v634
  %v636 = vld [vmem:[%s608 + $0x40] sm:$0xff]
  %v637 = vsel %vm611, %v430, %v636
  %638 = vst [vmem:[%s608 + $0x40] sm:$0xff] %v637
  %v639 = vld [vmem:[%s608 + $0x48] sm:$0xff]
  %v640 = vsel %vm611, %v437, %v639
  %641 = vst [vmem:[%s608 + $0x48] sm:$0xff] %v640
  %v642 = vld [vmem:[%s608 + $0x50] sm:$0xff]
  %v643 = vsel %vm611, %v444, %v642
  %644 = vst [vmem:[%s608 + $0x50] sm:$0xff] %v643
  %v645 = vld [vmem:[%s608 + $0x58] sm:$0xff]
  %v646 = vsel %vm611, %v451, %v645
  %647 = vst [vmem:[%s608 + $0x58] sm:$0xff] %v646
  %v648 = vld [vmem:[%s608 + $0x60] sm:$0xff]
  %v649 = vsel %vm611, %v458, %v648
  %650 = vst [vmem:[%s608 + $0x60] sm:$0xff] %v649
  %v651 = vld [vmem:[%s608 + $0x68] sm:$0xff]
  %v652 = vsel %vm611, %v465, %v651
  %653 = vst [vmem:[%s608 + $0x68] sm:$0xff] %v652
  %v654 = vld [vmem:[%s608 + $0x70] sm:$0xff]
  %v655 = vsel %vm611, %v472, %v654
  %656 = vst [vmem:[%s608 + $0x70] sm:$0xff] %v655
  %v657 = vld [vmem:[%s608 + $0x80] sm:$0xff]
  %v658 = vsel %vm611, %v479, %v657
  %659 = vst [vmem:[%s608 + $0x80] sm:$0xff] %v658
  %v660 = vld [vmem:[%s608 + $0x88] sm:$0xff]
  %v661 = vsel %vm611, %v486, %v660
  %662 = vst [vmem:[%s608 + $0x88] sm:$0xff] %v661
  %v663 = vld [vmem:[%s608 + $0x90] sm:$0xff]
  %v664 = vsel %vm611, %v493, %v663
  %665 = vst [vmem:[%s608 + $0x90] sm:$0xff] %v664
  %v666 = vld [vmem:[%s608 + $0x98] sm:$0xff]
  %v667 = vsel %vm611, %v500, %v666
  %668 = vst [vmem:[%s608 + $0x98] sm:$0xff] %v667
  %v669 = vld [vmem:[%s608 + $0xa0] sm:$0xff]
  %v670 = vsel %vm611, %v507, %v669
  %671 = vst [vmem:[%s608 + $0xa0] sm:$0xff] %v670
  %v672 = vld [vmem:[%s608 + $0xa8] sm:$0xff]
  %v673 = vsel %vm611, %v514, %v672
  %674 = vst [vmem:[%s608 + $0xa8] sm:$0xff] %v673
  %v675 = vld [vmem:[%s608 + $0xb0] sm:$0xff]
  %v676 = vsel %vm611, %v521, %v675
  %677 = vst [vmem:[%s608 + $0xb0] sm:$0xff] %v676
  %v678 = vld [vmem:[%s608 + $0xb8] sm:$0xff]
  %v679 = vsel %vm611, %v528, %v678
  %680 = vst [vmem:[%s608 + $0xb8] sm:$0xff] %v679
  %v681 = vld [vmem:[%s608 + $0xc0] sm:$0xff]
  %v682 = vsel %vm611, %v535, %v681
  %683 = vst [vmem:[%s608 + $0xc0] sm:$0xff] %v682
  %v684 = vld [vmem:[%s608 + $0xc8] sm:$0xff]
  %v685 = vsel %vm611, %v542, %v684
  %686 = vst [vmem:[%s608 + $0xc8] sm:$0xff] %v685
  %v687 = vld [vmem:[%s608 + $0xd0] sm:$0xff]
  %v688 = vsel %vm611, %v549, %v687
  %689 = vst [vmem:[%s608 + $0xd0] sm:$0xff] %v688
  %v690 = vld [vmem:[%s608 + $0xd8] sm:$0xff]
  %v691 = vsel %vm611, %v556, %v690
  %692 = vst [vmem:[%s608 + $0xd8] sm:$0xff] %v691
  %v693 = vld [vmem:[%s608 + $0xe0] sm:$0xff]
  %v694 = vsel %vm611, %v563, %v693
  %695 = vst [vmem:[%s608 + $0xe0] sm:$0xff] %v694
  %v696 = vld [vmem:[%s608 + $0xe8] sm:$0xff]
  %v697 = vsel %vm611, %v570, %v696
  %698 = vst [vmem:[%s608 + $0xe8] sm:$0xff] %v697
  %v699 = vld [vmem:[%s608 + $0xf0] sm:$0xff]
  %v700 = vsel %vm611, %v577, %v699
  %701 = vst [vmem:[%s608 + $0xf0] sm:$0xff] %v700
  %v702 = vld [vmem:[%s0] sm:$0xf]
  %v703 = vld [vmem:[%s0 + $0x4] sm:$0xf]
  %v704 = vld [vmem:[%s0 + $0x8] sm:$0xf]
  %v705 = vld [vmem:[%s0 + $0xc] sm:$0xf]
  %v706 = vld [vmem:[%s0 + $0x10] sm:$0xf]
  %v707 = vld [vmem:[%s0 + $0x14] sm:$0xf]
  %v708 = vld [vmem:[%s0 + $0x18] sm:$0xf]
  %v709 = vld [vmem:[%s0 + $0x1c] sm:$0xf]
  %v710 = vld [vmem:[%s0 + $0x20] sm:$0xf]
  %v711 = vld [vmem:[%s0 + $0x24] sm:$0xf]
  %v712 = vld [vmem:[%s0 + $0x28] sm:$0xf]
  %v713 = vld [vmem:[%s0 + $0x2c] sm:$0xf]
  %v714 = vld [vmem:[%s0 + $0x30] sm:$0xf]
  %v715 = vld [vmem:[%s0 + $0x34] sm:$0xf]
  %v716 = vld [vmem:[%s0 + $0x38] sm:$0xf]
  %v717 = vld [vmem:[%s0 + $0x3c] sm:$0xf]
  %v718 = vld [vmem:[%s0 + $0x40] sm:$0xf]
  %v719 = vld [vmem:[%s0 + $0x44] sm:$0xf]
  %v720 = vld [vmem:[%s0 + $0x48] sm:$0xf]
  %v721 = vld [vmem:[%s0 + $0x4c] sm:$0xf]
  %v722 = vld [vmem:[%s0 + $0x50] sm:$0xf]
  %v723 = vld [vmem:[%s0 + $0x54] sm:$0xf]
  %v724 = vld [vmem:[%s0 + $0x58] sm:$0xf]
  %v725 = vld [vmem:[%s0 + $0x5c] sm:$0xf]
  %v726 = vld [vmem:[%s0 + $0x60] sm:$0xf]
  %v727 = vld [vmem:[%s0 + $0x64] sm:$0xf]
  %v728 = vld [vmem:[%s0 + $0x68] sm:$0xf]
  %v729 = vld [vmem:[%s0 + $0x6c] sm:$0xf]
  %v730 = vld [vmem:[%s0 + $0x70] sm:$0xf]
  %v731 = vld [vmem:[%s0 + $0x74] sm:$0xf]
  %v732 = vld [vmem:[%s0 + $0x80] sm:$0xf]
  %v733 = vld [vmem:[%s0 + $0x84] sm:$0xf]
  %v734 = vld [vmem:[%s0 + $0x88] sm:$0xf]
  %v735 = vld [vmem:[%s0 + $0x8c] sm:$0xf]
  %v736 = vld [vmem:[%s0 + $0x90] sm:$0xf]
  %v737 = vld [vmem:[%s0 + $0x94] sm:$0xf]
  %v738 = vld [vmem:[%s0 + $0x98] sm:$0xf]
  %v739 = vld [vmem:[%s0 + $0x9c] sm:$0xf]
  %v740 = vld [vmem:[%s0 + $0xa0] sm:$0xf]
  %v741 = vld [vmem:[%s0 + $0xa4] sm:$0xf]
  %v742 = vld [vmem:[%s0 + $0xa8] sm:$0xf]
  %v743 = vld [vmem:[%s0 + $0xac] sm:$0xf]
  %v744 = vld [vmem:[%s0 + $0xb0] sm:$0xf]
  %v745 = vld [vmem:[%s0 + $0xb4] sm:$0xf]
  %v746 = vld [vmem:[%s0 + $0xb8] sm:$0xf]
  %v747 = vld [vmem:[%s0 + $0xbc] sm:$0xf]
  %v748 = vld [vmem:[%s0 + $0xc0] sm:$0xf]
  %v749 = vld [vmem:[%s0 + $0xc4] sm:$0xf]
  %v750 = vld [vmem:[%s0 + $0xc8] sm:$0xf]
  %v751 = vld [vmem:[%s0 + $0xcc] sm:$0xf]
  %v752 = vld [vmem:[%s0 + $0xd0] sm:$0xf]
  %v753 = vld [vmem:[%s0 + $0xd4] sm:$0xf]
  %v754 = vld [vmem:[%s0 + $0xd8] sm:$0xf]
  %v755 = vld [vmem:[%s0 + $0xdc] sm:$0xf]
  %v756 = vld [vmem:[%s0 + $0xe0] sm:$0xf]
  %v757 = vld [vmem:[%s0 + $0xe4] sm:$0xf]
  %v758 = vld [vmem:[%s0 + $0xe8] sm:$0xf]
  %v759 = vld [vmem:[%s0 + $0xec] sm:$0xf]
  %v760 = vld [vmem:[%s0 + $0xf0] sm:$0xf]
  %v761 = vld [vmem:[%s0 + $0xf4] sm:$0xf]
  %v822 = vunpack.c.l.b16 %v702
  %v823 = vunpack.c.l.b16 %v703
  %v824 = vunpack.c.l.b16 %v704
  %v825 = vunpack.c.l.b16 %v705
  %v826 = vunpack.c.l.b16 %v706
  %v827 = vunpack.c.l.b16 %v707
  %v828 = vunpack.c.l.b16 %v708
  %v829 = vunpack.c.l.b16 %v709
  %v830 = vunpack.c.l.b16 %v710
  %v831 = vunpack.c.l.b16 %v711
  %v832 = vunpack.c.l.b16 %v712
  %v833 = vunpack.c.l.b16 %v713
  %v834 = vunpack.c.l.b16 %v714
  %v835 = vunpack.c.l.b16 %v715
  %v836 = vunpack.c.l.b16 %v716
  %v837 = vunpack.c.l.b16 %v717
  %v838 = vunpack.c.l.b16 %v718
  %v839 = vunpack.c.l.b16 %v719
  %v840 = vunpack.c.l.b16 %v720
  %v841 = vunpack.c.l.b16 %v721
  %v842 = vunpack.c.l.b16 %v722
  %v843 = vunpack.c.l.b16 %v723
  %v844 = vunpack.c.l.b16 %v724
  %v845 = vunpack.c.l.b16 %v725
  %v846 = vunpack.c.l.b16 %v726
  %v847 = vunpack.c.l.b16 %v727
  %v848 = vunpack.c.l.b16 %v728
  %v849 = vunpack.c.l.b16 %v729
  %v850 = vunpack.c.l.b16 %v730
  %v851 = vunpack.c.l.b16 %v731
  %v852 = vunpack.c.l.b16 %v732
  %v853 = vunpack.c.l.b16 %v733
  %v854 = vunpack.c.l.b16 %v734
  %v855 = vunpack.c.l.b16 %v735
  %v856 = vunpack.c.l.b16 %v736
  %v857 = vunpack.c.l.b16 %v737
  %v858 = vunpack.c.l.b16 %v738
  %v859 = vunpack.c.l.b16 %v739
  %v860 = vunpack.c.l.b16 %v740
  %v861 = vunpack.c.l.b16 %v741
  %v862 = vunpack.c.l.b16 %v742
  %v863 = vunpack.c.l.b16 %v743
  %v864 = vunpack.c.l.b16 %v744
  %v865 = vunpack.c.l.b16 %v745
  %v866 = vunpack.c.l.b16 %v746
  %v867 = vunpack.c.l.b16 %v747
  %v868 = vunpack.c.l.b16 %v748
  %v869 = vunpack.c.l.b16 %v749
  %v870 = vunpack.c.l.b16 %v750
  %v871 = vunpack.c.l.b16 %v751
  %v872 = vunpack.c.l.b16 %v752
  %v873 = vunpack.c.l.b16 %v753
  %v874 = vunpack.c.l.b16 %v754
  %v875 = vunpack.c.l.b16 %v755
  %v876 = vunpack.c.l.b16 %v756
  %v877 = vunpack.c.l.b16 %v757
  %v878 = vunpack.c.l.b16 %v758
  %v879 = vunpack.c.l.b16 %v759
  %v880 = vunpack.c.l.b16 %v760
  %v881 = vunpack.c.l.b16 %v761
  %v882 = vpack.c.b16 %v823, %v822
  %v883 = vpack.c.b16 %v825, %v824
  %v884 = vpack.c.b16 %v827, %v826
  %v885 = vpack.c.b16 %v829, %v828
  %v886 = vpack.c.b16 %v831, %v830
  %v887 = vpack.c.b16 %v833, %v832
  %v888 = vpack.c.b16 %v835, %v834
  %v889 = vpack.c.b16 %v837, %v836
  %v890 = vpack.c.b16 %v839, %v838
  %v891 = vpack.c.b16 %v841, %v840
  %v892 = vpack.c.b16 %v843, %v842
  %v893 = vpack.c.b16 %v845, %v844
  %v894 = vpack.c.b16 %v847, %v846
  %v895 = vpack.c.b16 %v849, %v848
  %v896 = vpack.c.b16 %v851, %v850
  %v897 = vpack.c.b16 %v853, %v852
  %v898 = vpack.c.b16 %v855, %v854
  %v899 = vpack.c.b16 %v857, %v856
  %v900 = vpack.c.b16 %v859, %v858
  %v901 = vpack.c.b16 %v861, %v860
  %v902 = vpack.c.b16 %v863, %v862
  %v903 = vpack.c.b16 %v865, %v864
  %v904 = vpack.c.b16 %v867, %v866
  %v905 = vpack.c.b16 %v869, %v868
  %v906 = vpack.c.b16 %v871, %v870
  %v907 = vpack.c.b16 %v873, %v872
  %v908 = vpack.c.b16 %v875, %v874
  %v909 = vpack.c.b16 %v877, %v876
  %v910 = vpack.c.b16 %v879, %v878
  %v911 = vpack.c.b16 %v881, %v880
  %912 = vrot.lane.b32.xlu0 %v882, 4
  %v913 = vpop.permute.xlu0 %912
  %914 = vrot.lane.b32.xlu0 %v883, 4
  %v915 = vpop.permute.xlu0 %914
  %916 = vrot.lane.b32.xlu0 %v884, 4
  %v917 = vpop.permute.xlu0 %916
  %918 = vrot.lane.b32.xlu0 %v885, 4
  %v919 = vpop.permute.xlu0 %918
  %920 = vrot.lane.b32.xlu0 %v886, 4
  %v921 = vpop.permute.xlu0 %920
  %922 = vrot.lane.b32.xlu0 %v887, 4
  %v923 = vpop.permute.xlu0 %922
  %924 = vrot.lane.b32.xlu0 %v888, 4
  %v925 = vpop.permute.xlu0 %924
  %926 = vrot.lane.b32.xlu0 %v889, 4
  %v927 = vpop.permute.xlu0 %926
  %928 = vrot.lane.b32.xlu0 %v890, 4
  %v929 = vpop.permute.xlu0 %928
  %930 = vrot.lane.b32.xlu0 %v891, 4
  %v931 = vpop.permute.xlu0 %930
  %932 = vrot.lane.b32.xlu0 %v892, 4
  %v933 = vpop.permute.xlu0 %932
  %934 = vrot.lane.b32.xlu0 %v893, 4
  %v935 = vpop.permute.xlu0 %934
  %936 = vrot.lane.b32.xlu0 %v894, 4
  %v937 = vpop.permute.xlu0 %936
  %938 = vrot.lane.b32.xlu0 %v895, 4
  %v939 = vpop.permute.xlu0 %938
  %940 = vrot.lane.b32.xlu0 %v896, 4
  %v941 = vpop.permute.xlu0 %940
  %942 = vrot.lane.b32.xlu0 %v897, 4
  %v943 = vpop.permute.xlu0 %942
  %944 = vrot.lane.b32.xlu0 %v898, 4
  %v945 = vpop.permute.xlu0 %944
  %946 = vrot.lane.b32.xlu0 %v899, 4
  %v947 = vpop.permute.xlu0 %946
  %948 = vrot.lane.b32.xlu0 %v900, 4
  %v949 = vpop.permute.xlu0 %948
  %950 = vrot.lane.b32.xlu0 %v901, 4
  %v951 = vpop.permute.xlu0 %950
  %952 = vrot.lane.b32.xlu0 %v902, 4
  %v953 = vpop.permute.xlu0 %952
  %954 = vrot.lane.b32.xlu0 %v903, 4
  %v955 = vpop.permute.xlu0 %954
  %956 = vrot.lane.b32.xlu0 %v904, 4
  %v957 = vpop.permute.xlu0 %956
  %958 = vrot.lane.b32.xlu0 %v905, 4
  %v959 = vpop.permute.xlu0 %958
  %960 = vrot.lane.b32.xlu0 %v906, 4
  %v961 = vpop.permute.xlu0 %960
  %962 = vrot.lane.b32.xlu0 %v907, 4
  %v963 = vpop.permute.xlu0 %962
  %964 = vrot.lane.b32.xlu0 %v908, 4
  %v965 = vpop.permute.xlu0 %964
  %966 = vrot.lane.b32.xlu0 %v909, 4
  %v967 = vpop.permute.xlu0 %966
  %968 = vrot.lane.b32.xlu0 %v910, 4
  %v969 = vpop.permute.xlu0 %968
  %970 = vrot.lane.b32.xlu0 %v911, 4
  %v971 = vpop.permute.xlu0 %970
  %vm1002 = vcmask 64544
  %1003 = vst.msk [vmem:[%s608] sm:$0xff] %vm1002, %v913
  %1004 = vst.msk [vmem:[%s608 + $0x8] sm:$0xff] %vm1002, %v915
  %1005 = vst.msk [vmem:[%s608 + $0x10] sm:$0xff] %vm1002, %v917
  %1006 = vst.msk [vmem:[%s608 + $0x18] sm:$0xff] %vm1002, %v919
  %1007 = vst.msk [vmem:[%s608 + $0x20] sm:$0xff] %vm1002, %v921
  %1008 = vst.msk [vmem:[%s608 + $0x28] sm:$0xff] %vm1002, %v923
  %1009 = vst.msk [vmem:[%s608 + $0x30] sm:$0xff] %vm1002, %v925
  %1010 = vst.msk [vmem:[%s608 + $0x38] sm:$0xff] %vm1002, %v927
  %1011 = vst.msk [vmem:[%s608 + $0x40] sm:$0xff] %vm1002, %v929
  %1012 = vst.msk [vmem:[%s608 + $0x48] sm:$0xff] %vm1002, %v931
  %1013 = vst.msk [vmem:[%s608 + $0x50] sm:$0xff] %vm1002, %v933
  %1014 = vst.msk [vmem:[%s608 + $0x58] sm:$0xff] %vm1002, %v935
  %1015 = vst.msk [vmem:[%s608 + $0x60] sm:$0xff] %vm1002, %v937
  %1016 = vst.msk [vmem:[%s608 + $0x68] sm:$0xff] %vm1002, %v939
  %1017 = vst.msk [vmem:[%s608 + $0x70] sm:$0xff] %vm1002, %v941
  %1018 = vst.msk [vmem:[%s608 + $0x80] sm:$0xff] %vm1002, %v943
  %1019 = vst.msk [vmem:[%s608 + $0x88] sm:$0xff] %vm1002, %v945
  %1020 = vst.msk [vmem:[%s608 + $0x90] sm:$0xff] %vm1002, %v947
  %1021 = vst.msk [vmem:[%s608 + $0x98] sm:$0xff] %vm1002, %v949
  %1022 = vst.msk [vmem:[%s608 + $0xa0] sm:$0xff] %vm1002, %v951
  %1023 = vst.msk [vmem:[%s608 + $0xa8] sm:$0xff] %vm1002, %v953
  %1024 = vst.msk [vmem:[%s608 + $0xb0] sm:$0xff] %vm1002, %v955
  %1025 = vst.msk [vmem:[%s608 + $0xb8] sm:$0xff] %vm1002, %v957
  %1026 = vst.msk [vmem:[%s608 + $0xc0] sm:$0xff] %vm1002, %v959
  %1027 = vst.msk [vmem:[%s608 + $0xc8] sm:$0xff] %vm1002, %v961
  %1028 = vst.msk [vmem:[%s608 + $0xd0] sm:$0xff] %vm1002, %v963
  %1029 = vst.msk [vmem:[%s608 + $0xd8] sm:$0xff] %vm1002, %v965
  %1030 = vst.msk [vmem:[%s608 + $0xe0] sm:$0xff] %vm1002, %v967
  %1031 = vst.msk [vmem:[%s608 + $0xe8] sm:$0xff] %vm1002, %v969
  %1032 = vst.msk [vmem:[%s608 + $0xf0] sm:$0xff] %vm1002, %v971
  %v1033 = vld [vmem:[%s0] sm:$0xf]
  %v1034 = vld [vmem:[%s0 + $0x4] sm:$0xf]
  %v1035 = vld [vmem:[%s0 + $0x8] sm:$0xf]
  %v1036 = vld [vmem:[%s0 + $0xc] sm:$0xf]
  %v1037 = vld [vmem:[%s0 + $0x10] sm:$0xf]
  %v1038 = vld [vmem:[%s0 + $0x14] sm:$0xf]
  %v1039 = vld [vmem:[%s0 + $0x18] sm:$0xf]
  %v1040 = vld [vmem:[%s0 + $0x1c] sm:$0xf]
  %v1041 = vld [vmem:[%s0 + $0x20] sm:$0xf]
  %v1042 = vld [vmem:[%s0 + $0x24] sm:$0xf]
  %v1043 = vld [vmem:[%s0 + $0x28] sm:$0xf]
  %v1044 = vld [vmem:[%s0 + $0x2c] sm:$0xf]
  %v1045 = vld [vmem:[%s0 + $0x30] sm:$0xf]
  %v1046 = vld [vmem:[%s0 + $0x34] sm:$0xf]
  %v1047 = vld [vmem:[%s0 + $0x38] sm:$0xf]
  %v1048 = vld [vmem:[%s0 + $0x3c] sm:$0xf]
  %v1049 = vld [vmem:[%s0 + $0x40] sm:$0xf]
  %v1050 = vld [vmem:[%s0 + $0x44] sm:$0xf]
  %v1051 = vld [vmem:[%s0 + $0x48] sm:$0xf]
  %v1052 = vld [vmem:[%s0 + $0x4c] sm:$0xf]
  %v1053 = vld [vmem:[%s0 + $0x50] sm:$0xf]
  %v1054 = vld [vmem:[%s0 + $0x54] sm:$0xf]
  %v1055 = vld [vmem:[%s0 + $0x58] sm:$0xf]
  %v1056 = vld [vmem:[%s0 + $0x5c] sm:$0xf]
  %v1057 = vld [vmem:[%s0 + $0x60] sm:$0xf]
  %v1058 = vld [vmem:[%s0 + $0x64] sm:$0xf]
  %v1059 = vld [vmem:[%s0 + $0x68] sm:$0xf]
  %v1060 = vld [vmem:[%s0 + $0x6c] sm:$0xf]
  %v1061 = vld [vmem:[%s0 + $0x70] sm:$0xf]
  %v1062 = vld [vmem:[%s0 + $0x74] sm:$0xf]
  %v1063 = vld [vmem:[%s0 + $0x80] sm:$0xf]
  %v1064 = vld [vmem:[%s0 + $0x84] sm:$0xf]
  %v1065 = vld [vmem:[%s0 + $0x88] sm:$0xf]
  %v1066 = vld [vmem:[%s0 + $0x8c] sm:$0xf]
  %v1067 = vld [vmem:[%s0 + $0x90] sm:$0xf]
  %v1068 = vld [vmem:[%s0 + $0x94] sm:$0xf]
  %v1069 = vld [vmem:[%s0 + $0x98] sm:$0xf]
  %v1070 = vld [vmem:[%s0 + $0x9c] sm:$0xf]
  %v1071 = vld [vmem:[%s0 + $0xa0] sm:$0xf]
  %v1072 = vld [vmem:[%s0 + $0xa4] sm:$0xf]
  %v1073 = vld [vmem:[%s0 + $0xa8] sm:$0xf]
  %v1074 = vld [vmem:[%s0 + $0xac] sm:$0xf]
  %v1075 = vld [vmem:[%s0 + $0xb0] sm:$0xf]
  %v1076 = vld [vmem:[%s0 + $0xb4] sm:$0xf]
  %v1077 = vld [vmem:[%s0 + $0xb8] sm:$0xf]
  %v1078 = vld [vmem:[%s0 + $0xbc] sm:$0xf]
  %v1079 = vld [vmem:[%s0 + $0xc0] sm:$0xf]
  %v1080 = vld [vmem:[%s0 + $0xc4] sm:$0xf]
  %v1081 = vld [vmem:[%s0 + $0xc8] sm:$0xf]
  %v1082 = vld [vmem:[%s0 + $0xcc] sm:$0xf]
  %v1083 = vld [vmem:[%s0 + $0xd0] sm:$0xf]
  %v1084 = vld [vmem:[%s0 + $0xd4] sm:$0xf]
  %v1085 = vld [vmem:[%s0 + $0xd8] sm:$0xf]
  %v1086 = vld [vmem:[%s0 + $0xdc] sm:$0xf]
  %v1087 = vld [vmem:[%s0 + $0xe0] sm:$0xf]
  %v1088 = vld [vmem:[%s0 + $0xe4] sm:$0xf]
  %v1089 = vld [vmem:[%s0 + $0xe8] sm:$0xf]
  %v1090 = vld [vmem:[%s0 + $0xec] sm:$0xf]
  %v1091 = vld [vmem:[%s0 + $0xf0] sm:$0xf]
  %v1092 = vld [vmem:[%s0 + $0xf4] sm:$0xf]
  %v1153 = vunpack.c.l.b16 %v1033
  %v1154 = vunpack.c.l.b16 %v1034
  %v1155 = vunpack.c.l.b16 %v1035
  %v1156 = vunpack.c.l.b16 %v1036
  %v1157 = vunpack.c.l.b16 %v1037
  %v1158 = vunpack.c.l.b16 %v1038
  %v1159 = vunpack.c.l.b16 %v1039
  %v1160 = vunpack.c.l.b16 %v1040
  %v1161 = vunpack.c.l.b16 %v1041
  %v1162 = vunpack.c.l.b16 %v1042
  %v1163 = vunpack.c.l.b16 %v1043
  %v1164 = vunpack.c.l.b16 %v1044
  %v1165 = vunpack.c.l.b16 %v1045
  %v1166 = vunpack.c.l.b16 %v1046
  %v1167 = vunpack.c.l.b16 %v1047
  %v1168 = vunpack.c.l.b16 %v1048
  %v1169 = vunpack.c.l.b16 %v1049
  %v1170 = vunpack.c.l.b16 %v1050
  %v1171 = vunpack.c.l.b16 %v1051
  %v1172 = vunpack.c.l.b16 %v1052
  %v1173 = vunpack.c.l.b16 %v1053
  %v1174 = vunpack.c.l.b16 %v1054
  %v1175 = vunpack.c.l.b16 %v1055
  %v1176 = vunpack.c.l.b16 %v1056
  %v1177 = vunpack.c.l.b16 %v1057
  %v1178 = vunpack.c.l.b16 %v1058
  %v1179 = vunpack.c.l.b16 %v1059
  %v1180 = vunpack.c.l.b16 %v1060
  %v1181 = vunpack.c.l.b16 %v1061
  %v1182 = vunpack.c.l.b16 %v1062
  %v1183 = vunpack.c.l.b16 %v1063
  %v1184 = vunpack.c.l.b16 %v1064
  %v1185 = vunpack.c.l.b16 %v1065
  %v1186 = vunpack.c.l.b16 %v1066
  %v1187 = vunpack.c.l.b16 %v1067
  %v1188 = vunpack.c.l.b16 %v1068
  %v1189 = vunpack.c.l.b16 %v1069
  %v1190 = vunpack.c.l.b16 %v1070
  %v1191 = vunpack.c.l.b16 %v1071
  %v1192 = vunpack.c.l.b16 %v1072
  %v1193 = vunpack.c.l.b16 %v1073
  %v1194 = vunpack.c.l.b16 %v1074
  %v1195 = vunpack.c.l.b16 %v1075
  %v1196 = vunpack.c.l.b16 %v1076
  %v1197 = vunpack.c.l.b16 %v1077
  %v1198 = vunpack.c.l.b16 %v1078
  %v1199 = vunpack.c.l.b16 %v1079
  %v1200 = vunpack.c.l.b16 %v1080
  %v1201 = vunpack.c.l.b16 %v1081
  %v1202 = vunpack.c.l.b16 %v1082
  %v1203 = vunpack.c.l.b16 %v1083
  %v1204 = vunpack.c.l.b16 %v1084
  %v1205 = vunpack.c.l.b16 %v1085
  %v1206 = vunpack.c.l.b16 %v1086
  %v1207 = vunpack.c.l.b16 %v1087
  %v1208 = vunpack.c.l.b16 %v1088
  %v1209 = vunpack.c.l.b16 %v1089
  %v1210 = vunpack.c.l.b16 %v1090
  %v1211 = vunpack.c.l.b16 %v1091
  %v1212 = vunpack.c.l.b16 %v1092
  %v1213 = vpack.c.b16 %v1154, %v1153
  %v1214 = vpack.c.b16 %v1156, %v1155
  %v1215 = vpack.c.b16 %v1158, %v1157
  %v1216 = vpack.c.b16 %v1160, %v1159
  %v1217 = vpack.c.b16 %v1162, %v1161
  %v1218 = vpack.c.b16 %v1164, %v1163
  %v1219 = vpack.c.b16 %v1166, %v1165
  %v1220 = vpack.c.b16 %v1168, %v1167
  %v1221 = vpack.c.b16 %v1170, %v1169
  %v1222 = vpack.c.b16 %v1172, %v1171
  %v1223 = vpack.c.b16 %v1174, %v1173
  %v1224 = vpack.c.b16 %v1176, %v1175
  %v1225 = vpack.c.b16 %v1178, %v1177
  %v1226 = vpack.c.b16 %v1180, %v1179
  %v1227 = vpack.c.b16 %v1182, %v1181
  %v1228 = vpack.c.b16 %v1184, %v1183
  %v1229 = vpack.c.b16 %v1186, %v1185
  %v1230 = vpack.c.b16 %v1188, %v1187
  %v1231 = vpack.c.b16 %v1190, %v1189
  %v1232 = vpack.c.b16 %v1192, %v1191
  %v1233 = vpack.c.b16 %v1194, %v1193
  %v1234 = vpack.c.b16 %v1196, %v1195
  %v1235 = vpack.c.b16 %v1198, %v1197
  %v1236 = vpack.c.b16 %v1200, %v1199
  %v1237 = vpack.c.b16 %v1202, %v1201
  %v1238 = vpack.c.b16 %v1204, %v1203
  %v1239 = vpack.c.b16 %v1206, %v1205
  %v1240 = vpack.c.b16 %v1208, %v1207
  %v1241 = vpack.c.b16 %v1210, %v1209
  %v1242 = vpack.c.b16 %v1212, %v1211
  %v1244 = vshrl.u32 %v1213, 16
  %v1246 = vshll.u32 %v1213, 16
  %v1248 = vrot.slane %v1246, 1
  %v1249 = vor.u32 %v1244, %v1248
  %v1251 = vshrl.u32 %v1214, 16
  %v1253 = vshll.u32 %v1214, 16
  %v1255 = vrot.slane %v1253, 1
  %v1256 = vor.u32 %v1251, %v1255
  %v1258 = vshrl.u32 %v1215, 16
  %v1260 = vshll.u32 %v1215, 16
  %v1262 = vrot.slane %v1260, 1
  %v1263 = vor.u32 %v1258, %v1262
  %v1265 = vshrl.u32 %v1216, 16
  %v1267 = vshll.u32 %v1216, 16
  %v1269 = vrot.slane %v1267, 1
  %v1270 = vor.u32 %v1265, %v1269
  %v1272 = vshrl.u32 %v1217, 16
  %v1274 = vshll.u32 %v1217, 16
  %v1276 = vrot.slane %v1274, 1
  %v1277 = vor.u32 %v1272, %v1276
  %v1279 = vshrl.u32 %v1218, 16
  %v1281 = vshll.u32 %v1218, 16
  %v1283 = vrot.slane %v1281, 1
  %v1284 = vor.u32 %v1279, %v1283
  %v1286 = vshrl.u32 %v1219, 16
  %v1288 = vshll.u32 %v1219, 16
  %v1290 = vrot.slane %v1288, 1
  %v1291 = vor.u32 %v1286, %v1290
  %v1293 = vshrl.u32 %v1220, 16
  %v1295 = vshll.u32 %v1220, 16
  %v1297 = vrot.slane %v1295, 1
  %v1298 = vor.u32 %v1293, %v1297
  %v1300 = vshrl.u32 %v1221, 16
  %v1302 = vshll.u32 %v1221, 16
  %v1304 = vrot.slane %v1302, 1
  %v1305 = vor.u32 %v1300, %v1304
  %v1307 = vshrl.u32 %v1222, 16
  %v1309 = vshll.u32 %v1222, 16
  %v1311 = vrot.slane %v1309, 1
  %v1312 = vor.u32 %v1307, %v1311
  %v1314 = vshrl.u32 %v1223, 16
  %v1316 = vshll.u32 %v1223, 16
  %v1318 = vrot.slane %v1316, 1
  %v1319 = vor.u32 %v1314, %v1318
  %v1321 = vshrl.u32 %v1224, 16
  %v1323 = vshll.u32 %v1224, 16
  %v1325 = vrot.slane %v1323, 1
  %v1326 = vor.u32 %v1321, %v1325
  %v1328 = vshrl.u32 %v1225, 16
  %v1330 = vshll.u32 %v1225, 16
  %v1332 = vrot.slane %v1330, 1
  %v1333 = vor.u32 %v1328, %v1332
  %v1335 = vshrl.u32 %v1226, 16
  %v1337 = vshll.u32 %v1226, 16
  %v1339 = vrot.slane %v1337, 1
  %v1340 = vor.u32 %v1335, %v1339
  %v1342 = vshrl.u32 %v1227, 16
  %v1344 = vshll.u32 %v1227, 16
  %v1346 = vrot.slane %v1344, 1
  %v1347 = vor.u32 %v1342, %v1346
  %v1349 = vshrl.u32 %v1228, 16
  %v1351 = vshll.u32 %v1228, 16
  %v1353 = vrot.slane %v1351, 1
  %v1354 = vor.u32 %v1349, %v1353
  %v1356 = vshrl.u32 %v1229, 16
  %v1358 = vshll.u32 %v1229, 16
  %v1360 = vrot.slane %v1358, 1
  %v1361 = vor.u32 %v1356, %v1360
  %v1363 = vshrl.u32 %v1230, 16
  %v1365 = vshll.u32 %v1230, 16
  %v1367 = vrot.slane %v1365, 1
  %v1368 = vor.u32 %v1363, %v1367
  %v1370 = vshrl.u32 %v1231, 16
  %v1372 = vshll.u32 %v1231, 16
  %v1374 = vrot.slane %v1372, 1
  %v1375 = vor.u32 %v1370, %v1374
  %v1377 = vshrl.u32 %v1232, 16
  %v1379 = vshll.u32 %v1232, 16
  %v1381 = vrot.slane %v1379, 1
  %v1382 = vor.u32 %v1377, %v1381
  %v1384 = vshrl.u32 %v1233, 16
  %v1386 = vshll.u32 %v1233, 16
  %v1388 = vrot.slane %v1386, 1
  %v1389 = vor.u32 %v1384, %v1388
  %v1391 = vshrl.u32 %v1234, 16
  %v1393 = vshll.u32 %v1234, 16
  %v1395 = vrot.slane %v1393, 1
  %v1396 = vor.u32 %v1391, %v1395
  %v1398 = vshrl.u32 %v1235, 16
  %v1400 = vshll.u32 %v1235, 16
  %v1402 = vrot.slane %v1400, 1
  %v1403 = vor.u32 %v1398, %v1402
  %v1405 = vshrl.u32 %v1236, 16
  %v1407 = vshll.u32 %v1236, 16
  %v1409 = vrot.slane %v1407, 1
  %v1410 = vor.u32 %v1405, %v1409
  %v1412 = vshrl.u32 %v1237, 16
  %v1414 = vshll.u32 %v1237, 16
  %v1416 = vrot.slane %v1414, 1
  %v1417 = vor.u32 %v1412, %v1416
  %v1419 = vshrl.u32 %v1238, 16
  %v1421 = vshll.u32 %v1238, 16
  %v1423 = vrot.slane %v1421, 1
  %v1424 = vor.u32 %v1419, %v1423
  %v1426 = vshrl.u32 %v1239, 16
  %v1428 = vshll.u32 %v1239, 16
  %v1430 = vrot.slane %v1428, 1
  %v1431 = vor.u32 %v1426, %v1430
  %v1433 = vshrl.u32 %v1240, 16
  %v1435 = vshll.u32 %v1240, 16
  %v1437 = vrot.slane %v1435, 1
  %v1438 = vor.u32 %v1433, %v1437
  %v1440 = vshrl.u32 %v1241, 16
  %v1442 = vshll.u32 %v1241, 16
  %v1444 = vrot.slane %v1442, 1
  %v1445 = vor.u32 %v1440, %v1444
  %v1447 = vshrl.u32 %v1242, 16
  %v1449 = vshll.u32 %v1242, 16
  %v1451 = vrot.slane %v1449, 1
  %v1452 = vor.u32 %v1447, %v1451
  %1453 = vrot.lane.b32.xlu0 %v1249, 8
  %v1454 = vpop.permute.xlu0 %1453
  %1455 = vrot.lane.b32.xlu0 %v1256, 8
  %v1456 = vpop.permute.xlu0 %1455
  %1457 = vrot.lane.b32.xlu0 %v1263, 8
  %v1458 = vpop.permute.xlu0 %1457
  %1459 = vrot.lane.b32.xlu0 %v1270, 8
  %v1460 = vpop.permute.xlu0 %1459
  %1461 = vrot.lane.b32.xlu0 %v1277, 8
  %v1462 = vpop.permute.xlu0 %1461
  %1463 = vrot.lane.b32.xlu0 %v1284, 8
  %v1464 = vpop.permute.xlu0 %1463
  %1465 = vrot.lane.b32.xlu0 %v1291, 8
  %v1466 = vpop.permute.xlu0 %1465
  %1467 = vrot.lane.b32.xlu0 %v1298, 8
  %v1468 = vpop.permute.xlu0 %1467
  %1469 = vrot.lane.b32.xlu0 %v1305, 8
  %v1470 = vpop.permute.xlu0 %1469
  %1471 = vrot.lane.b32.xlu0 %v1312, 8
  %v1472 = vpop.permute.xlu0 %1471
  %1473 = vrot.lane.b32.xlu0 %v1319, 8
  %v1474 = vpop.permute.xlu0 %1473
  %1475 = vrot.lane.b32.xlu0 %v1326, 8
  %v1476 = vpop.permute.xlu0 %1475
  %1477 = vrot.lane.b32.xlu0 %v1333, 8
  %v1478 = vpop.permute.xlu0 %1477
  %1479 = vrot.lane.b32.xlu0 %v1340, 8
  %v1480 = vpop.permute.xlu0 %1479
  %1481 = vrot.lane.b32.xlu0 %v1347, 8
  %v1482 = vpop.permute.xlu0 %1481
  %1483 = vrot.lane.b32.xlu0 %v1354, 8
  %v1484 = vpop.permute.xlu0 %1483
  %1485 = vrot.lane.b32.xlu0 %v1361, 8
  %v1486 = vpop.permute.xlu0 %1485
  %1487 = vrot.lane.b32.xlu0 %v1368, 8
  %v1488 = vpop.permute.xlu0 %1487
  %1489 = vrot.lane.b32.xlu0 %v1375, 8
  %v1490 = vpop.permute.xlu0 %1489
  %1491 = vrot.lane.b32.xlu0 %v1382, 8
  %v1492 = vpop.permute.xlu0 %1491
  %1493 = vrot.lane.b32.xlu0 %v1389, 8
  %v1494 = vpop.permute.xlu0 %1493
  %1495 = vrot.lane.b32.xlu0 %v1396, 8
  %v1496 = vpop.permute.xlu0 %1495
  %1497 = vrot.lane.b32.xlu0 %v1403, 8
  %v1498 = vpop.permute.xlu0 %1497
  %1499 = vrot.lane.b32.xlu0 %v1410, 8
  %v1500 = vpop.permute.xlu0 %1499
  %1501 = vrot.lane.b32.xlu0 %v1417, 8
  %v1502 = vpop.permute.xlu0 %1501
  %1503 = vrot.lane.b32.xlu0 %v1424, 8
  %v1504 = vpop.permute.xlu0 %1503
  %1505 = vrot.lane.b32.xlu0 %v1431, 8
  %v1506 = vpop.permute.xlu0 %1505
  %1507 = vrot.lane.b32.xlu0 %v1438, 8
  %v1508 = vpop.permute.xlu0 %1507
  %1509 = vrot.lane.b32.xlu0 %v1445, 8
  %v1510 = vpop.permute.xlu0 %1509
  %1511 = vrot.lane.b32.xlu0 %v1452, 8
  %v1512 = vpop.permute.xlu0 %1511
  %vm1543 = vcmask 97344
  %vm1544 = vsmask.f32 7424
  %vm1545 = vmand %vm1543, %vm1544
  %v1546 = vld [vmem:[%s608] sm:$0xff]
  %v1547 = vsel %vm1545, %v1454, %v1546
  %1548 = vst [vmem:[%s608] sm:$0xff] %v1547
  %v1549 = vld [vmem:[%s608 + $0x8] sm:$0xff]
  %v1550 = vsel %vm1545, %v1456, %v1549
  %1551 = vst [vmem:[%s608 + $0x8] sm:$0xff] %v1550
  %v1552 = vld [vmem:[%s608 + $0x10] sm:$0xff]
  %v1553 = vsel %vm1545, %v1458, %v1552
  %1554 = vst [vmem:[%s608 + $0x10] sm:$0xff] %v1553
  %v1555 = vld [vmem:[%s608 + $0x18] sm:$0xff]
  %v1556 = vsel %vm1545, %v1460, %v1555
  %1557 = vst [vmem:[%s608 + $0x18] sm:$0xff] %v1556
  %v1558 = vld [vmem:[%s608 + $0x20] sm:$0xff]
  %v1559 = vsel %vm1545, %v1462, %v1558
  %1560 = vst [vmem:[%s608 + $0x20] sm:$0xff] %v1559
  %v1561 = vld [vmem:[%s608 + $0x28] sm:$0xff]
  %v1562 = vsel %vm1545, %v1464, %v1561
  %1563 = vst [vmem:[%s608 + $0x28] sm:$0xff] %v1562
  %v1564 = vld [vmem:[%s608 + $0x30] sm:$0xff]
  %v1565 = vsel %vm1545, %v1466, %v1564
  %1566 = vst [vmem:[%s608 + $0x30] sm:$0xff] %v1565
  %v1567 = vld [vmem:[%s608 + $0x38] sm:$0xff]
  %v1568 = vsel %vm1545, %v1468, %v1567
  %1569 = vst [vmem:[%s608 + $0x38] sm:$0xff] %v1568
  %v1570 = vld [vmem:[%s608 + $0x40] sm:$0xff]
  %v1571 = vsel %vm1545, %v1470, %v1570
  %1572 = vst [vmem:[%s608 + $0x40] sm:$0xff] %v1571
  %v1573 = vld [vmem:[%s608 + $0x48] sm:$0xff]
  %v1574 = vsel %vm1545, %v1472, %v1573
  %1575 = vst [vmem:[%s608 + $0x48] sm:$0xff] %v1574
  %v1576 = vld [vmem:[%s608 + $0x50] sm:$0xff]
  %v1577 = vsel %vm1545, %v1474, %v1576
  %1578 = vst [vmem:[%s608 + $0x50] sm:$0xff] %v1577
  %v1579 = vld [vmem:[%s608 + $0x58] sm:$0xff]
  %v1580 = vsel %vm1545, %v1476, %v1579
  %1581 = vst [vmem:[%s608 + $0x58] sm:$0xff] %v1580
  %v1582 = vld [vmem:[%s608 + $0x60] sm:$0xff]
  %v1583 = vsel %vm1545, %v1478, %v1582
  %1584 = vst [vmem:[%s608 + $0x60] sm:$0xff] %v1583
  %v1585 = vld [vmem:[%s608 + $0x68] sm:$0xff]
  %v1586 = vsel %vm1545, %v1480, %v1585
  %1587 = vst [vmem:[%s608 + $0x68] sm:$0xff] %v1586
  %v1588 = vld [vmem:[%s608 + $0x70] sm:$0xff]
  %v1589 = vsel %vm1545, %v1482, %v1588
  %1590 = vst [vmem:[%s608 + $0x70] sm:$0xff] %v1589
  %v1591 = vld [vmem:[%s608 + $0x80] sm:$0xff]
  %v1592 = vsel %vm1545, %v1484, %v1591
  %1593 = vst [vmem:[%s608 + $0x80] sm:$0xff] %v1592
  %v1594 = vld [vmem:[%s608 + $0x88] sm:$0xff]
  %v1595 = vsel %vm1545, %v1486, %v1594
  %1596 = vst [vmem:[%s608 + $0x88] sm:$0xff] %v1595
  %v1597 = vld [vmem:[%s608 + $0x90] sm:$0xff]
  %v1598 = vsel %vm1545, %v1488, %v1597
  %1599 = vst [vmem:[%s608 + $0x90] sm:$0xff] %v1598
  %v1600 = vld [vmem:[%s608 + $0x98] sm:$0xff]
  %v1601 = vsel %vm1545, %v1490, %v1600
  %1602 = vst [vmem:[%s608 + $0x98] sm:$0xff] %v1601
  %v1603 = vld [vmem:[%s608 + $0xa0] sm:$0xff]
  %v1604 = vsel %vm1545, %v1492, %v1603
  %1605 = vst [vmem:[%s608 + $0xa0] sm:$0xff] %v1604
  %v1606 = vld [vmem:[%s608 + $0xa8] sm:$0xff]
  %v1607 = vsel %vm1545, %v1494, %v1606
  %1608 = vst [vmem:[%s608 + $0xa8] sm:$0xff] %v1607
  %v1609 = vld [vmem:[%s608 + $0xb0] sm:$0xff]
  %v1610 = vsel %vm1545, %v1496, %v1609
  %1611 = vst [vmem:[%s608 + $0xb0] sm:$0xff] %v1610
  %v1612 = vld [vmem:[%s608 + $0xb8] sm:$0xff]
  %v1613 = vsel %vm1545, %v1498, %v1612
  %1614 = vst [vmem:[%s608 + $0xb8] sm:$0xff] %v1613
  %v1615 = vld [vmem:[%s608 + $0xc0] sm:$0xff]
  %v1616 = vsel %vm1545, %v1500, %v1615
  %1617 = vst [vmem:[%s608 + $0xc0] sm:$0xff] %v1616
  %v1618 = vld [vmem:[%s608 + $0xc8] sm:$0xff]
  %v1619 = vsel %vm1545, %v1502, %v1618
  %1620 = vst [vmem:[%s608 + $0xc8] sm:$0xff] %v1619
  %v1621 = vld [vmem:[%s608 + $0xd0] sm:$0xff]
  %v1622 = vsel %vm1545, %v1504, %v1621
  %1623 = vst [vmem:[%s608 + $0xd0] sm:$0xff] %v1622
  %v1624 = vld [vmem:[%s608 + $0xd8] sm:$0xff]
  %v1625 = vsel %vm1545, %v1506, %v1624
  %1626 = vst [vmem:[%s608 + $0xd8] sm:$0xff] %v1625
  %v1627 = vld [vmem:[%s608 + $0xe0] sm:$0xff]
  %v1628 = vsel %vm1545, %v1508, %v1627
  %1629 = vst [vmem:[%s608 + $0xe0] sm:$0xff] %v1628
  %v1630 = vld [vmem:[%s608 + $0xe8] sm:$0xff]
  %v1631 = vsel %vm1545, %v1510, %v1630
  %1632 = vst [vmem:[%s608 + $0xe8] sm:$0xff] %v1631
  %v1633 = vld [vmem:[%s608 + $0xf0] sm:$0xff]
  %v1634 = vsel %vm1545, %v1512, %v1633
  %1635 = vst [vmem:[%s608 + $0xf0] sm:$0xff] %v1634
  %v1636 = vld [vmem:[%s0] sm:$0xf]
  %v1637 = vld [vmem:[%s0 + $0x4] sm:$0xf]
  %v1638 = vld [vmem:[%s0 + $0x8] sm:$0xf]
  %v1639 = vld [vmem:[%s0 + $0xc] sm:$0xf]
  %v1640 = vld [vmem:[%s0 + $0x10] sm:$0xf]
  %v1641 = vld [vmem:[%s0 + $0x14] sm:$0xf]
  %v1642 = vld [vmem:[%s0 + $0x18] sm:$0xf]
  %v1643 = vld [vmem:[%s0 + $0x1c] sm:$0xf]
  %v1644 = vld [vmem:[%s0 + $0x20] sm:$0xf]
  %v1645 = vld [vmem:[%s0 + $0x24] sm:$0xf]
  %v1646 = vld [vmem:[%s0 + $0x28] sm:$0xf]
  %v1647 = vld [vmem:[%s0 + $0x2c] sm:$0xf]
  %v1648 = vld [vmem:[%s0 + $0x30] sm:$0xf]
  %v1649 = vld [vmem:[%s0 + $0x34] sm:$0xf]
  %v1650 = vld [vmem:[%s0 + $0x38] sm:$0xf]
  %v1651 = vld [vmem:[%s0 + $0x3c] sm:$0xf]
  %v1652 = vld [vmem:[%s0 + $0x40] sm:$0xf]
  %v1653 = vld [vmem:[%s0 + $0x44] sm:$0xf]
  %v1654 = vld [vmem:[%s0 + $0x48] sm:$0xf]
  %v1655 = vld [vmem:[%s0 + $0x4c] sm:$0xf]
  %v1656 = vld [vmem:[%s0 + $0x50] sm:$0xf]
  %v1657 = vld [vmem:[%s0 + $0x54] sm:$0xf]
  %v1658 = vld [vmem:[%s0 + $0x58] sm:$0xf]
  %v1659 = vld [vmem:[%s0 + $0x5c] sm:$0xf]
  %v1660 = vld [vmem:[%s0 + $0x60] sm:$0xf]
  %v1661 = vld [vmem:[%s0 + $0x64] sm:$0xf]
  %v1662 = vld [vmem:[%s0 + $0x68] sm:$0xf]
  %v1663 = vld [vmem:[%s0 + $0x6c] sm:$0xf]
  %v1664 = vld [vmem:[%s0 + $0x70] sm:$0xf]
  %v1665 = vld [vmem:[%s0 + $0x74] sm:$0xf]
  %v1666 = vld [vmem:[%s0 + $0x78] sm:$0xf]
  %v1667 = vld [vmem:[%s0 + $0x7c] sm:$0xf]
  %v1668 = vld [vmem:[%s0 + $0x80] sm:$0xf]
  %v1669 = vld [vmem:[%s0 + $0x84] sm:$0xf]
  %v1670 = vld [vmem:[%s0 + $0x88] sm:$0xf]
  %v1671 = vld [vmem:[%s0 + $0x8c] sm:$0xf]
  %v1672 = vld [vmem:[%s0 + $0x90] sm:$0xf]
  %v1673 = vld [vmem:[%s0 + $0x94] sm:$0xf]
  %v1674 = vld [vmem:[%s0 + $0x98] sm:$0xf]
  %v1675 = vld [vmem:[%s0 + $0x9c] sm:$0xf]
  %v1676 = vld [vmem:[%s0 + $0xa0] sm:$0xf]
  %v1677 = vld [vmem:[%s0 + $0xa4] sm:$0xf]
  %v1678 = vld [vmem:[%s0 + $0xa8] sm:$0xf]
  %v1679 = vld [vmem:[%s0 + $0xac] sm:$0xf]
  %v1680 = vld [vmem:[%s0 + $0xb0] sm:$0xf]
  %v1681 = vld [vmem:[%s0 + $0xb4] sm:$0xf]
  %v1682 = vld [vmem:[%s0 + $0xb8] sm:$0xf]
  %v1683 = vld [vmem:[%s0 + $0xbc] sm:$0xf]
  %v1684 = vld [vmem:[%s0 + $0xc0] sm:$0xf]
  %v1685 = vld [vmem:[%s0 + $0xc4] sm:$0xf]
  %v1686 = vld [vmem:[%s0 + $0xc8] sm:$0xf]
  %v1687 = vld [vmem:[%s0 + $0xcc] sm:$0xf]
  %v1688 = vld [vmem:[%s0 + $0xd0] sm:$0xf]
  %v1689 = vld [vmem:[%s0 + $0xd4] sm:$0xf]
  %v1690 = vld [vmem:[%s0 + $0xd8] sm:$0xf]
  %v1691 = vld [vmem:[%s0 + $0xdc] sm:$0xf]
  %v1692 = vld [vmem:[%s0 + $0xe0] sm:$0xf]
  %v1693 = vld [vmem:[%s0 + $0xe4] sm:$0xf]
  %v1694 = vld [vmem:[%s0 + $0xe8] sm:$0xf]
  %v1695 = vld [vmem:[%s0 + $0xec] sm:$0xf]
  %v1696 = vld [vmem:[%s0 + $0xf0] sm:$0xf]
  %v1697 = vld [vmem:[%s0 + $0xf4] sm:$0xf]
  %v1698 = vld [vmem:[%s0 + $0xf8] sm:$0xf]
  %v1699 = vld [vmem:[%s0 + $0xfc] sm:$0xf]
  %v1764 = vunpack.c.l.b16 %v1636
  %v1765 = vunpack.c.l.b16 %v1637
  %v1766 = vunpack.c.l.b16 %v1638
  %v1767 = vunpack.c.l.b16 %v1639
  %v1768 = vunpack.c.l.b16 %v1640
  %v1769 = vunpack.c.l.b16 %v1641
  %v1770 = vunpack.c.l.b16 %v1642
  %v1771 = vunpack.c.l.b16 %v1643
  %v1772 = vunpack.c.l.b16 %v1644
  %v1773 = vunpack.c.l.b16 %v1645
  %v1774 = vunpack.c.l.b16 %v1646
  %v1775 = vunpack.c.l.b16 %v1647
  %v1776 = vunpack.c.l.b16 %v1648
  %v1777 = vunpack.c.l.b16 %v1649
  %v1778 = vunpack.c.l.b16 %v1650
  %v1779 = vunpack.c.l.b16 %v1651
  %v1780 = vunpack.c.l.b16 %v1652
  %v1781 = vunpack.c.l.b16 %v1653
  %v1782 = vunpack.c.l.b16 %v1654
  %v1783 = vunpack.c.l.b16 %v1655
  %v1784 = vunpack.c.l.b16 %v1656
  %v1785 = vunpack.c.l.b16 %v1657
  %v1786 = vunpack.c.l.b16 %v1658
  %v1787 = vunpack.c.l.b16 %v1659
  %v1788 = vunpack.c.l.b16 %v1660
  %v1789 = vunpack.c.l.b16 %v1661
  %v1790 = vunpack.c.l.b16 %v1662
  %v1791 = vunpack.c.l.b16 %v1663
  %v1792 = vunpack.c.l.b16 %v1664
  %v1793 = vunpack.c.l.b16 %v1665
  %v1794 = vunpack.c.l.b16 %v1666
  %v1795 = vunpack.c.l.b16 %v1667
  %v1796 = vunpack.c.l.b16 %v1668
  %v1797 = vunpack.c.l.b16 %v1669
  %v1798 = vunpack.c.l.b16 %v1670
  %v1799 = vunpack.c.l.b16 %v1671
  %v1800 = vunpack.c.l.b16 %v1672
  %v1801 = vunpack.c.l.b16 %v1673
  %v1802 = vunpack.c.l.b16 %v1674
  %v1803 = vunpack.c.l.b16 %v1675
  %v1804 = vunpack.c.l.b16 %v1676
  %v1805 = vunpack.c.l.b16 %v1677
  %v1806 = vunpack.c.l.b16 %v1678
  %v1807 = vunpack.c.l.b16 %v1679
  %v1808 = vunpack.c.l.b16 %v1680
  %v1809 = vunpack.c.l.b16 %v1681
  %v1810 = vunpack.c.l.b16 %v1682
  %v1811 = vunpack.c.l.b16 %v1683
  %v1812 = vunpack.c.l.b16 %v1684
  %v1813 = vunpack.c.l.b16 %v1685
  %v1814 = vunpack.c.l.b16 %v1686
  %v1815 = vunpack.c.l.b16 %v1687
  %v1816 = vunpack.c.l.b16 %v1688
  %v1817 = vunpack.c.l.b16 %v1689
  %v1818 = vunpack.c.l.b16 %v1690
  %v1819 = vunpack.c.l.b16 %v1691
  %v1820 = vunpack.c.l.b16 %v1692
  %v1821 = vunpack.c.l.b16 %v1693
  %v1822 = vunpack.c.l.b16 %v1694
  %v1823 = vunpack.c.l.b16 %v1695
  %v1824 = vunpack.c.l.b16 %v1696
  %v1825 = vunpack.c.l.b16 %v1697
  %v1826 = vunpack.c.l.b16 %v1698
  %v1827 = vunpack.c.l.b16 %v1699
  %v1828 = vpack.c.b16 %v1765, %v1764
  %v1829 = vpack.c.b16 %v1767, %v1766
  %v1830 = vpack.c.b16 %v1769, %v1768
  %v1831 = vpack.c.b16 %v1771, %v1770
  %v1832 = vpack.c.b16 %v1773, %v1772
  %v1833 = vpack.c.b16 %v1775, %v1774
  %v1834 = vpack.c.b16 %v1777, %v1776
  %v1835 = vpack.c.b16 %v1779, %v1778
  %v1836 = vpack.c.b16 %v1781, %v1780
  %v1837 = vpack.c.b16 %v1783, %v1782
  %v1838 = vpack.c.b16 %v1785, %v1784
  %v1839 = vpack.c.b16 %v1787, %v1786
  %v1840 = vpack.c.b16 %v1789, %v1788
  %v1841 = vpack.c.b16 %v1791, %v1790
  %v1842 = vpack.c.b16 %v1793, %v1792
  %v1843 = vpack.c.b16 %v1795, %v1794
  %v1844 = vpack.c.b16 %v1797, %v1796
  %v1845 = vpack.c.b16 %v1799, %v1798
  %v1846 = vpack.c.b16 %v1801, %v1800
  %v1847 = vpack.c.b16 %v1803, %v1802
  %v1848 = vpack.c.b16 %v1805, %v1804
  %v1849 = vpack.c.b16 %v1807, %v1806
  %v1850 = vpack.c.b16 %v1809, %v1808
  %v1851 = vpack.c.b16 %v1811, %v1810
  %v1852 = vpack.c.b16 %v1813, %v1812
  %v1853 = vpack.c.b16 %v1815, %v1814
  %v1854 = vpack.c.b16 %v1817, %v1816
  %v1855 = vpack.c.b16 %v1819, %v1818
  %v1856 = vpack.c.b16 %v1821, %v1820
  %v1857 = vpack.c.b16 %v1823, %v1822
  %v1858 = vpack.c.b16 %v1825, %v1824
  %v1859 = vpack.c.b16 %v1827, %v1826
  %v1861 = vshrl.u32 %v1828, 16
  %v1863 = vrot.slane %v1861, 7
  %v1864 = vshll.u32 %v1828, 16
  %v1866 = vor.u32 %v1863, %v1864
  %v1868 = vshrl.u32 %v1829, 16
  %v1870 = vrot.slane %v1868, 7
  %v1871 = vshll.u32 %v1829, 16
  %v1873 = vor.u32 %v1870, %v1871
  %v1875 = vshrl.u32 %v1830, 16
  %v1877 = vrot.slane %v1875, 7
  %v1878 = vshll.u32 %v1830, 16
  %v1880 = vor.u32 %v1877, %v1878
  %v1882 = vshrl.u32 %v1831, 16
  %v1884 = vrot.slane %v1882, 7
  %v1885 = vshll.u32 %v1831, 16
  %v1887 = vor.u32 %v1884, %v1885
  %v1889 = vshrl.u32 %v1832, 16
  %v1891 = vrot.slane %v1889, 7
  %v1892 = vshll.u32 %v1832, 16
  %v1894 = vor.u32 %v1891, %v1892
  %v1896 = vshrl.u32 %v1833, 16
  %v1898 = vrot.slane %v1896, 7
  %v1899 = vshll.u32 %v1833, 16
  %v1901 = vor.u32 %v1898, %v1899
  %v1903 = vshrl.u32 %v1834, 16
  %v1905 = vrot.slane %v1903, 7
  %v1906 = vshll.u32 %v1834, 16
  %v1908 = vor.u32 %v1905, %v1906
  %v1910 = vshrl.u32 %v1835, 16
  %v1912 = vrot.slane %v1910, 7
  %v1913 = vshll.u32 %v1835, 16
  %v1915 = vor.u32 %v1912, %v1913
  %v1917 = vshrl.u32 %v1836, 16
  %v1919 = vrot.slane %v1917, 7
  %v1920 = vshll.u32 %v1836, 16
  %v1922 = vor.u32 %v1919, %v1920
  %v1924 = vshrl.u32 %v1837, 16
  %v1926 = vrot.slane %v1924, 7
  %v1927 = vshll.u32 %v1837, 16
  %v1929 = vor.u32 %v1926, %v1927
  %v1931 = vshrl.u32 %v1838, 16
  %v1933 = vrot.slane %v1931, 7
  %v1934 = vshll.u32 %v1838, 16
  %v1936 = vor.u32 %v1933, %v1934
  %v1938 = vshrl.u32 %v1839, 16
  %v1940 = vrot.slane %v1938, 7
  %v1941 = vshll.u32 %v1839, 16
  %v1943 = vor.u32 %v1940, %v1941
  %v1945 = vshrl.u32 %v1840, 16
  %v1947 = vrot.slane %v1945, 7
  %v1948 = vshll.u32 %v1840, 16
  %v1950 = vor.u32 %v1947, %v1948
  %v1952 = vshrl.u32 %v1841, 16
  %v1954 = vrot.slane %v1952, 7
  %v1955 = vshll.u32 %v1841, 16
  %v1957 = vor.u32 %v1954, %v1955
  %v1959 = vshrl.u32 %v1842, 16
  %v1961 = vrot.slane %v1959, 7
  %v1962 = vshll.u32 %v1842, 16
  %v1964 = vor.u32 %v1961, %v1962
  %v1966 = vshrl.u32 %v1843, 16
  %v1968 = vrot.slane %v1966, 7
  %v1969 = vshll.u32 %v1843, 16
  %v1971 = vor.u32 %v1968, %v1969
  %v1973 = vshrl.u32 %v1844, 16
  %v1975 = vrot.slane %v1973, 7
  %v1976 = vshll.u32 %v1844, 16
  %v1978 = vor.u32 %v1975, %v1976
  %v1980 = vshrl.u32 %v1845, 16
  %v1982 = vrot.slane %v1980, 7
  %v1983 = vshll.u32 %v1845, 16
  %v1985 = vor.u32 %v1982, %v1983
  %v1987 = vshrl.u32 %v1846, 16
  %v1989 = vrot.slane %v1987, 7
  %v1990 = vshll.u32 %v1846, 16
  %v1992 = vor.u32 %v1989, %v1990
  %v1994 = vshrl.u32 %v1847, 16
  %v1996 = vrot.slane %v1994, 7
  %v1997 = vshll.u32 %v1847, 16
  %v1999 = vor.u32 %v1996, %v1997
  %v2001 = vshrl.u32 %v1848, 16
  %v2003 = vrot.slane %v2001, 7
  %v2004 = vshll.u32 %v1848, 16
  %v2006 = vor.u32 %v2003, %v2004
  %v2008 = vshrl.u32 %v1849, 16
  %v2010 = vrot.slane %v2008, 7
  %v2011 = vshll.u32 %v1849, 16
  %v2013 = vor.u32 %v2010, %v2011
  %v2015 = vshrl.u32 %v1850, 16
  %v2017 = vrot.slane %v2015, 7
  %v2018 = vshll.u32 %v1850, 16
  %v2020 = vor.u32 %v2017, %v2018
  %v2022 = vshrl.u32 %v1851, 16
  %v2024 = vrot.slane %v2022, 7
  %v2025 = vshll.u32 %v1851, 16
  %v2027 = vor.u32 %v2024, %v2025
  %v2029 = vshrl.u32 %v1852, 16
  %v2031 = vrot.slane %v2029, 7
  %v2032 = vshll.u32 %v1852, 16
  %v2034 = vor.u32 %v2031, %v2032
  %v2036 = vshrl.u32 %v1853, 16
  %v2038 = vrot.slane %v2036, 7
  %v2039 = vshll.u32 %v1853, 16
  %v2041 = vor.u32 %v2038, %v2039
  %v2043 = vshrl.u32 %v1854, 16
  %v2045 = vrot.slane %v2043, 7
  %v2046 = vshll.u32 %v1854, 16
  %v2048 = vor.u32 %v2045, %v2046
  %v2050 = vshrl.u32 %v1855, 16
  %v2052 = vrot.slane %v2050, 7
  %v2053 = vshll.u32 %v1855, 16
  %v2055 = vor.u32 %v2052, %v2053
  %v2057 = vshrl.u32 %v1856, 16
  %v2059 = vrot.slane %v2057, 7
  %v2060 = vshll.u32 %v1856, 16
  %v2062 = vor.u32 %v2059, %v2060
  %v2064 = vshrl.u32 %v1857, 16
  %v2066 = vrot.slane %v2064, 7
  %v2067 = vshll.u32 %v1857, 16
  %v2069 = vor.u32 %v2066, %v2067
  %v2071 = vshrl.u32 %v1858, 16
  %v2073 = vrot.slane %v2071, 7
  %v2074 = vshll.u32 %v1858, 16
  %v2076 = vor.u32 %v2073, %v2074
  %v2078 = vshrl.u32 %v1859, 16
  %v2080 = vrot.slane %v2078, 7
  %v2081 = vshll.u32 %v1859, 16
  %v2083 = vor.u32 %v2080, %v2081
  %2084 = vrot.lane.b32.xlu0 %v1866, 12
  %v2085 = vpop.permute.xlu0 %2084
  %2086 = vrot.lane.b32.xlu0 %v1873, 12
  %v2087 = vpop.permute.xlu0 %2086
  %2088 = vrot.lane.b32.xlu0 %v1880, 12
  %v2089 = vpop.permute.xlu0 %2088
  %2090 = vrot.lane.b32.xlu0 %v1887, 12
  %v2091 = vpop.permute.xlu0 %2090
  %2092 = vrot.lane.b32.xlu0 %v1894, 12
  %v2093 = vpop.permute.xlu0 %2092
  %2094 = vrot.lane.b32.xlu0 %v1901, 12
  %v2095 = vpop.permute.xlu0 %2094
  %2096 = vrot.lane.b32.xlu0 %v1908, 12
  %v2097 = vpop.permute.xlu0 %2096
  %2098 = vrot.lane.b32.xlu0 %v1915, 12
  %v2099 = vpop.permute.xlu0 %2098
  %2100 = vrot.lane.b32.xlu0 %v1922, 12
  %v2101 = vpop.permute.xlu0 %2100
  %2102 = vrot.lane.b32.xlu0 %v1929, 12
  %v2103 = vpop.permute.xlu0 %2102
  %2104 = vrot.lane.b32.xlu0 %v1936, 12
  %v2105 = vpop.permute.xlu0 %2104
  %2106 = vrot.lane.b32.xlu0 %v1943, 12
  %v2107 = vpop.permute.xlu0 %2106
  %2108 = vrot.lane.b32.xlu0 %v1950, 12
  %v2109 = vpop.permute.xlu0 %2108
  %2110 = vrot.lane.b32.xlu0 %v1957, 12
  %v2111 = vpop.permute.xlu0 %2110
  %2112 = vrot.lane.b32.xlu0 %v1964, 12
  %v2113 = vpop.permute.xlu0 %2112
  %2114 = vrot.lane.b32.xlu0 %v1971, 12
  %v2115 = vpop.permute.xlu0 %2114
  %2116 = vrot.lane.b32.xlu0 %v1978, 12
  %v2117 = vpop.permute.xlu0 %2116
  %2118 = vrot.lane.b32.xlu0 %v1985, 12
  %v2119 = vpop.permute.xlu0 %2118
  %2120 = vrot.lane.b32.xlu0 %v1992, 12
  %v2121 = vpop.permute.xlu0 %2120
  %2122 = vrot.lane.b32.xlu0 %v1999, 12
  %v2123 = vpop.permute.xlu0 %2122
  %2124 = vrot.lane.b32.xlu0 %v2006, 12
  %v2125 = vpop.permute.xlu0 %2124
  %2126 = vrot.lane.b32.xlu0 %v2013, 12
  %v2127 = vpop.permute.xlu0 %2126
  %2128 = vrot.lane.b32.xlu0 %v2020, 12
  %v2129 = vpop.permute.xlu0 %2128
  %2130 = vrot.lane.b32.xlu0 %v2027, 12
  %v2131 = vpop.permute.xlu0 %2130
  %2132 = vrot.lane.b32.xlu0 %v2034, 12
  %v2133 = vpop.permute.xlu0 %2132
  %2134 = vrot.lane.b32.xlu0 %v2041, 12
  %v2135 = vpop.permute.xlu0 %2134
  %2136 = vrot.lane.b32.xlu0 %v2048, 12
  %v2137 = vpop.permute.xlu0 %2136
  %2138 = vrot.lane.b32.xlu0 %v2055, 12
  %v2139 = vpop.permute.xlu0 %2138
  %2140 = vrot.lane.b32.xlu0 %v2062, 12
  %v2141 = vpop.permute.xlu0 %2140
  %2142 = vrot.lane.b32.xlu0 %v2069, 12
  %v2143 = vpop.permute.xlu0 %2142
  %2144 = vrot.lane.b32.xlu0 %v2076, 12
  %v2145 = vpop.permute.xlu0 %2144
  %2146 = vrot.lane.b32.xlu0 %v2083, 12
  %v2147 = vpop.permute.xlu0 %2146
  %vm2180 = vcmask 130144
  %vm2181 = vmand %vm2180, %vm610
  %v2182 = vld [vmem:[#allocation2] sm:$0xff]
  %v2183 = vsel %vm2181, %v2085, %v2182
  %2184 = vst [vmem:[#allocation2] sm:$0xff] %v2183
  %v2185 = vld [vmem:[#allocation2 + $0x8] sm:$0xff]
  %v2186 = vsel %vm2181, %v2087, %v2185
  %2187 = vst [vmem:[#allocation2 + $0x8] sm:$0xff] %v2186
  %v2188 = vld [vmem:[#allocation2 + $0x10] sm:$0xff]
  %v2189 = vsel %vm2181, %v2089, %v2188
  %2190 = vst [vmem:[#allocation2 + $0x10] sm:$0xff] %v2189
  %v2191 = vld [vmem:[#allocation2 + $0x18] sm:$0xff]
  %v2192 = vsel %vm2181, %v2091, %v2191
  %2193 = vst [vmem:[#allocation2 + $0x18] sm:$0xff] %v2192
  %v2194 = vld [vmem:[#allocation2 + $0x20] sm:$0xff]
  %v2195 = vsel %vm2181, %v2093, %v2194
  %2196 = vst [vmem:[#allocation2 + $0x20] sm:$0xff] %v2195
  %v2197 = vld [vmem:[#allocation2 + $0x28] sm:$0xff]
  %v2198 = vsel %vm2181, %v2095, %v2197
  %2199 = vst [vmem:[#allocation2 + $0x28] sm:$0xff] %v2198
  %v2200 = vld [vmem:[#allocation2 + $0x30] sm:$0xff]
  %v2201 = vsel %vm2181, %v2097, %v2200
  %2202 = vst [vmem:[#allocation2 + $0x30] sm:$0xff] %v2201
  %v2203 = vld [vmem:[#allocation2 + $0x38] sm:$0xff]
  %v2204 = vsel %vm2181, %v2099, %v2203
  %2205 = vst [vmem:[#allocation2 + $0x38] sm:$0xff] %v2204
  %v2206 = vld [vmem:[#allocation2 + $0x40] sm:$0xff]
  %v2207 = vsel %vm2181, %v2101, %v2206
  %2208 = vst [vmem:[#allocation2 + $0x40] sm:$0xff] %v2207
  %v2209 = vld [vmem:[#allocation2 + $0x48] sm:$0xff]
  %v2210 = vsel %vm2181, %v2103, %v2209
  %2211 = vst [vmem:[#allocation2 + $0x48] sm:$0xff] %v2210
  %v2212 = vld [vmem:[#allocation2 + $0x50] sm:$0xff]
  %v2213 = vsel %vm2181, %v2105, %v2212
  %2214 = vst [vmem:[#allocation2 + $0x50] sm:$0xff] %v2213
  %v2215 = vld [vmem:[#allocation2 + $0x58] sm:$0xff]
  %v2216 = vsel %vm2181, %v2107, %v2215
  %2217 = vst [vmem:[#allocation2 + $0x58] sm:$0xff] %v2216
  %v2218 = vld [vmem:[#allocation2 + $0x60] sm:$0xff]
  %v2219 = vsel %vm2181, %v2109, %v2218
  %2220 = vst [vmem:[#allocation2 + $0x60] sm:$0xff] %v2219
  %v2221 = vld [vmem:[#allocation2 + $0x68] sm:$0xff]
  %v2222 = vsel %vm2181, %v2111, %v2221
  %2223 = vst [vmem:[#allocation2 + $0x68] sm:$0xff] %v2222
  %v2224 = vld [vmem:[#allocation2 + $0x70] sm:$0xff]
  %v2225 = vsel %vm2181, %v2113, %v2224
  %2226 = vst [vmem:[#allocation2 + $0x70] sm:$0xff] %v2225
  %v2227 = vld [vmem:[#allocation2 + $0x78] sm:$0xff]
  %v2228 = vsel %vm2181, %v2115, %v2227
  %2229 = vst [vmem:[#allocation2 + $0x78] sm:$0xff] %v2228
  %v2230 = vld [vmem:[#allocation2 + $0x80] sm:$0xff]
  %v2231 = vsel %vm2181, %v2117, %v2230
  %2232 = vst [vmem:[#allocation2 + $0x80] sm:$0xff] %v2231
  %v2233 = vld [vmem:[#allocation2 + $0x88] sm:$0xff]
  %v2234 = vsel %vm2181, %v2119, %v2233
  %2235 = vst [vmem:[#allocation2 + $0x88] sm:$0xff] %v2234
  %v2236 = vld [vmem:[#allocation2 + $0x90] sm:$0xff]
  %v2237 = vsel %vm2181, %v2121, %v2236
  %2238 = vst [vmem:[#allocation2 + $0x90] sm:$0xff] %v2237
  %v2239 = vld [vmem:[#allocation2 + $0x98] sm:$0xff]
  %v2240 = vsel %vm2181, %v2123, %v2239
  %2241 = vst [vmem:[#allocation2 + $0x98] sm:$0xff] %v2240
  %v2242 = vld [vmem:[#allocation2 + $0xa0] sm:$0xff]
  %v2243 = vsel %vm2181, %v2125, %v2242
  %2244 = vst [vmem:[#allocation2 + $0xa0] sm:$0xff] %v2243
  %v2245 = vld [vmem:[#allocation2 + $0xa8] sm:$0xff]
  %v2246 = vsel %vm2181, %v2127, %v2245
  %2247 = vst [vmem:[#allocation2 + $0xa8] sm:$0xff] %v2246
  %v2248 = vld [vmem:[#allocation2 + $0xb0] sm:$0xff]
  %v2249 = vsel %vm2181, %v2129, %v2248
  %2250 = vst [vmem:[#allocation2 + $0xb0] sm:$0xff] %v2249
  %v2251 = vld [vmem:[#allocation2 + $0xb8] sm:$0xff]
  %v2252 = vsel %vm2181, %v2131, %v2251
  %2253 = vst [vmem:[#allocation2 + $0xb8] sm:$0xff] %v2252
  %v2254 = vld [vmem:[#allocation2 + $0xc0] sm:$0xff]
  %v2255 = vsel %vm2181, %v2133, %v2254
  %2256 = vst [vmem:[#allocation2 + $0xc0] sm:$0xff] %v2255
  %v2257 = vld [vmem:[#allocation2 + $0xc8] sm:$0xff]
  %v2258 = vsel %vm2181, %v2135, %v2257
  %2259 = vst [vmem:[#allocation2 + $0xc8] sm:$0xff] %v2258
  %v2260 = vld [vmem:[#allocation2 + $0xd0] sm:$0xff]
  %v2261 = vsel %vm2181, %v2137, %v2260
  %2262 = vst [vmem:[#allocation2 + $0xd0] sm:$0xff] %v2261
  %v2263 = vld [vmem:[#allocation2 + $0xd8] sm:$0xff]
  %v2264 = vsel %vm2181, %v2139, %v2263
  %2265 = vst [vmem:[#allocation2 + $0xd8] sm:$0xff] %v2264
  %v2266 = vld [vmem:[#allocation2 + $0xe0] sm:$0xff]
  %v2267 = vsel %vm2181, %v2141, %v2266
  %2268 = vst [vmem:[#allocation2 + $0xe0] sm:$0xff] %v2267
  %v2269 = vld [vmem:[#allocation2 + $0xe8] sm:$0xff]
  %v2270 = vsel %vm2181, %v2143, %v2269
  %2271 = vst [vmem:[#allocation2 + $0xe8] sm:$0xff] %v2270
  %v2272 = vld [vmem:[#allocation2 + $0xf0] sm:$0xff]
  %v2273 = vsel %vm2181, %v2145, %v2272
  %2274 = vst [vmem:[#allocation2 + $0xf0] sm:$0xff] %v2273
  %v2275 = vld [vmem:[#allocation2 + $0xf8] sm:$0xff]
  %v2276 = vsel %vm2181, %v2147, %v2275
  %2277 = vst [vmem:[#allocation2 + $0xf8] sm:$0xff] %v2276
  %v2278 = vld [vmem:[%s0] sm:$0xf]
  %v2279 = vld [vmem:[%s0 + $0x4] sm:$0xf]
  %v2280 = vld [vmem:[%s0 + $0x8] sm:$0xf]
  %v2281 = vld [vmem:[%s0 + $0xc] sm:$0xf]
  %v2282 = vld [vmem:[%s0 + $0x10] sm:$0xf]
  %v2283 = vld [vmem:[%s0 + $0x14] sm:$0xf]
  %v2284 = vld [vmem:[%s0 + $0x18] sm:$0xf]
  %v2285 = vld [vmem:[%s0 + $0x1c] sm:$0xf]
  %v2286 = vld [vmem:[%s0 + $0x20] sm:$0xf]
  %v2287 = vld [vmem:[%s0 + $0x24] sm:$0xf]
  %v2288 = vld [vmem:[%s0 + $0x28] sm:$0xf]
  %v2289 = vld [vmem:[%s0 + $0x2c] sm:$0xf]
  %v2290 = vld [vmem:[%s0 + $0x30] sm:$0xf]
  %v2291 = vld [vmem:[%s0 + $0x34] sm:$0xf]
  %v2292 = vld [vmem:[%s0 + $0x38] sm:$0xf]
  %v2293 = vld [vmem:[%s0 + $0x3c] sm:$0xf]
  %v2294 = vld [vmem:[%s0 + $0x40] sm:$0xf]
  %v2295 = vld [vmem:[%s0 + $0x44] sm:$0xf]
  %v2296 = vld [vmem:[%s0 + $0x48] sm:$0xf]
  %v2297 = vld [vmem:[%s0 + $0x4c] sm:$0xf]
  %v2298 = vld [vmem:[%s0 + $0x50] sm:$0xf]
  %v2299 = vld [vmem:[%s0 + $0x54] sm:$0xf]
  %v2300 = vld [vmem:[%s0 + $0x58] sm:$0xf]
  %v2301 = vld [vmem:[%s0 + $0x5c] sm:$0xf]
  %v2302 = vld [vmem:[%s0 + $0x60] sm:$0xf]
  %v2303 = vld [vmem:[%s0 + $0x64] sm:$0xf]
  %v2304 = vld [vmem:[%s0 + $0x68] sm:$0xf]
  %v2305 = vld [vmem:[%s0 + $0x6c] sm:$0xf]
  %v2306 = vld [vmem:[%s0 + $0x70] sm:$0xf]
  %v2307 = vld [vmem:[%s0 + $0x74] sm:$0xf]
  %v2308 = vld [vmem:[%s0 + $0x78] sm:$0xf]
  %v2309 = vld [vmem:[%s0 + $0x7c] sm:$0xf]
  %v2310 = vld [vmem:[%s0 + $0x80] sm:$0xf]
  %v2311 = vld [vmem:[%s0 + $0x84] sm:$0xf]
  %v2312 = vld [vmem:[%s0 + $0x88] sm:$0xf]
  %v2313 = vld [vmem:[%s0 + $0x8c] sm:$0xf]
  %v2314 = vld [vmem:[%s0 + $0x90] sm:$0xf]
  %v2315 = vld [vmem:[%s0 + $0x94] sm:$0xf]
  %v2316 = vld [vmem:[%s0 + $0x98] sm:$0xf]
  %v2317 = vld [vmem:[%s0 + $0x9c] sm:$0xf]
  %v2318 = vld [vmem:[%s0 + $0xa0] sm:$0xf]
  %v2319 = vld [vmem:[%s0 + $0xa4] sm:$0xf]
  %v2320 = vld [vmem:[%s0 + $0xa8] sm:$0xf]
  %v2321 = vld [vmem:[%s0 + $0xac] sm:$0xf]
  %v2322 = vld [vmem:[%s0 + $0xb0] sm:$0xf]
  %v2323 = vld [vmem:[%s0 + $0xb4] sm:$0xf]
  %v2324 = vld [vmem:[%s0 + $0xb8] sm:$0xf]
  %v2325 = vld [vmem:[%s0 + $0xbc] sm:$0xf]
  %v2326 = vld [vmem:[%s0 + $0xc0] sm:$0xf]
  %v2327 = vld [vmem:[%s0 + $0xc4] sm:$0xf]
  %v2328 = vld [vmem:[%s0 + $0xc8] sm:$0xf]
  %v2329 = vld [vmem:[%s0 + $0xcc] sm:$0xf]
  %v2330 = vld [vmem:[%s0 + $0xd0] sm:$0xf]
  %v2331 = vld [vmem:[%s0 + $0xd4] sm:$0xf]
  %v2332 = vld [vmem:[%s0 + $0xd8] sm:$0xf]
  %v2333 = vld [vmem:[%s0 + $0xdc] sm:$0xf]
  %v2334 = vld [vmem:[%s0 + $0xe0] sm:$0xf]
  %v2335 = vld [vmem:[%s0 + $0xe4] sm:$0xf]
  %v2336 = vld [vmem:[%s0 + $0xe8] sm:$0xf]
  %v2337 = vld [vmem:[%s0 + $0xec] sm:$0xf]
  %v2338 = vld [vmem:[%s0 + $0xf0] sm:$0xf]
  %v2339 = vld [vmem:[%s0 + $0xf4] sm:$0xf]
  %v2340 = vld [vmem:[%s0 + $0xf8] sm:$0xf]
  %v2341 = vld [vmem:[%s0 + $0xfc] sm:$0xf]
  %v2406 = vunpack.c.l.b16 %v2278
  %v2407 = vunpack.c.l.b16 %v2279
  %v2408 = vunpack.c.l.b16 %v2280
  %v2409 = vunpack.c.l.b16 %v2281
  %v2410 = vunpack.c.l.b16 %v2282
  %v2411 = vunpack.c.l.b16 %v2283
  %v2412 = vunpack.c.l.b16 %v2284
  %v2413 = vunpack.c.l.b16 %v2285
  %v2414 = vunpack.c.l.b16 %v2286
  %v2415 = vunpack.c.l.b16 %v2287
  %v2416 = vunpack.c.l.b16 %v2288
  %v2417 = vunpack.c.l.b16 %v2289
  %v2418 = vunpack.c.l.b16 %v2290
  %v2419 = vunpack.c.l.b16 %v2291
  %v2420 = vunpack.c.l.b16 %v2292
  %v2421 = vunpack.c.l.b16 %v2293
  %v2422 = vunpack.c.l.b16 %v2294
  %v2423 = vunpack.c.l.b16 %v2295
  %v2424 = vunpack.c.l.b16 %v2296
  %v2425 = vunpack.c.l.b16 %v2297
  %v2426 = vunpack.c.l.b16 %v2298
  %v2427 = vunpack.c.l.b16 %v2299
  %v2428 = vunpack.c.l.b16 %v2300
  %v2429 = vunpack.c.l.b16 %v2301
  %v2430 = vunpack.c.l.b16 %v2302
  %v2431 = vunpack.c.l.b16 %v2303
  %v2432 = vunpack.c.l.b16 %v2304
  %v2433 = vunpack.c.l.b16 %v2305
  %v2434 = vunpack.c.l.b16 %v2306
  %v2435 = vunpack.c.l.b16 %v2307
  %v2436 = vunpack.c.l.b16 %v2308
  %v2437 = vunpack.c.l.b16 %v2309
  %v2438 = vunpack.c.l.b16 %v2310
  %v2439 = vunpack.c.l.b16 %v2311
  %v2440 = vunpack.c.l.b16 %v2312
  %v2441 = vunpack.c.l.b16 %v2313
  %v2442 = vunpack.c.l.b16 %v2314
  %v2443 = vunpack.c.l.b16 %v2315
  %v2444 = vunpack.c.l.b16 %v2316
  %v2445 = vunpack.c.l.b16 %v2317
  %v2446 = vunpack.c.l.b16 %v2318
  %v2447 = vunpack.c.l.b16 %v2319
  %v2448 = vunpack.c.l.b16 %v2320
  %v2449 = vunpack.c.l.b16 %v2321
  %v2450 = vunpack.c.l.b16 %v2322
  %v2451 = vunpack.c.l.b16 %v2323
  %v2452 = vunpack.c.l.b16 %v2324
  %v2453 = vunpack.c.l.b16 %v2325
  %v2454 = vunpack.c.l.b16 %v2326
  %v2455 = vunpack.c.l.b16 %v2327
  %v2456 = vunpack.c.l.b16 %v2328
  %v2457 = vunpack.c.l.b16 %v2329
  %v2458 = vunpack.c.l.b16 %v2330
  %v2459 = vunpack.c.l.b16 %v2331
  %v2460 = vunpack.c.l.b16 %v2332
  %v2461 = vunpack.c.l.b16 %v2333
  %v2462 = vunpack.c.l.b16 %v2334
  %v2463 = vunpack.c.l.b16 %v2335
  %v2464 = vunpack.c.l.b16 %v2336
  %v2465 = vunpack.c.l.b16 %v2337
  %v2466 = vunpack.c.l.b16 %v2338
  %v2467 = vunpack.c.l.b16 %v2339
  %v2468 = vunpack.c.l.b16 %v2340
  %v2469 = vunpack.c.l.b16 %v2341
  %v2470 = vpack.c.b16 %v2407, %v2406
  %v2471 = vpack.c.b16 %v2409, %v2408
  %v2472 = vpack.c.b16 %v2411, %v2410
  %v2473 = vpack.c.b16 %v2413, %v2412
  %v2474 = vpack.c.b16 %v2415, %v2414
  %v2475 = vpack.c.b16 %v2417, %v2416
  %v2476 = vpack.c.b16 %v2419, %v2418
  %v2477 = vpack.c.b16 %v2421, %v2420
  %v2478 = vpack.c.b16 %v2423, %v2422
  %v2479 = vpack.c.b16 %v2425, %v2424
  %v2480 = vpack.c.b16 %v2427, %v2426
  %v2481 = vpack.c.b16 %v2429, %v2428
  %v2482 = vpack.c.b16 %v2431, %v2430
  %v2483 = vpack.c.b16 %v2433, %v2432
  %v2484 = vpack.c.b16 %v2435, %v2434
  %v2485 = vpack.c.b16 %v2437, %v2436
  %v2486 = vpack.c.b16 %v2439, %v2438
  %v2487 = vpack.c.b16 %v2441, %v2440
  %v2488 = vpack.c.b16 %v2443, %v2442
  %v2489 = vpack.c.b16 %v2445, %v2444
  %v2490 = vpack.c.b16 %v2447, %v2446
  %v2491 = vpack.c.b16 %v2449, %v2448
  %v2492 = vpack.c.b16 %v2451, %v2450
  %v2493 = vpack.c.b16 %v2453, %v2452
  %v2494 = vpack.c.b16 %v2455, %v2454
  %v2495 = vpack.c.b16 %v2457, %v2456
  %v2496 = vpack.c.b16 %v2459, %v2458
  %v2497 = vpack.c.b16 %v2461, %v2460
  %v2498 = vpack.c.b16 %v2463, %v2462
  %v2499 = vpack.c.b16 %v2465, %v2464
  %v2500 = vpack.c.b16 %v2467, %v2466
  %v2501 = vpack.c.b16 %v2469, %v2468
  %2502 = vrot.lane.b32.xlu0 %v2470, 16
  %v2503 = vpop.permute.xlu0 %2502
  %2504 = vrot.lane.b32.xlu0 %v2471, 16
  %v2505 = vpop.permute.xlu0 %2504
  %2506 = vrot.lane.b32.xlu0 %v2472, 16
  %v2507 = vpop.permute.xlu0 %2506
  %2508 = vrot.lane.b32.xlu0 %v2473, 16
  %v2509 = vpop.permute.xlu0 %2508
  %2510 = vrot.lane.b32.xlu0 %v2474, 16
  %v2511 = vpop.permute.xlu0 %2510
  %2512 = vrot.lane.b32.xlu0 %v2475, 16
  %v2513 = vpop.permute.xlu0 %2512
  %2514 = vrot.lane.b32.xlu0 %v2476, 16
  %v2515 = vpop.permute.xlu0 %2514
  %2516 = vrot.lane.b32.xlu0 %v2477, 16
  %v2517 = vpop.permute.xlu0 %2516
  %2518 = vrot.lane.b32.xlu0 %v2478, 16
  %v2519 = vpop.permute.xlu0 %2518
  %2520 = vrot.lane.b32.xlu0 %v2479, 16
  %v2521 = vpop.permute.xlu0 %2520
  %2522 = vrot.lane.b32.xlu0 %v2480, 16
  %v2523 = vpop.permute.xlu0 %2522
  %2524 = vrot.lane.b32.xlu0 %v2481, 16
  %v2525 = vpop.permute.xlu0 %2524
  %2526 = vrot.lane.b32.xlu0 %v2482, 16
  %v2527 = vpop.permute.xlu0 %2526
  %2528 = vrot.lane.b32.xlu0 %v2483, 16
  %v2529 = vpop.permute.xlu0 %2528
  %2530 = vrot.lane.b32.xlu0 %v2484, 16
  %v2531 = vpop.permute.xlu0 %2530
  %2532 = vrot.lane.b32.xlu0 %v2485, 16
  %v2533 = vpop.permute.xlu0 %2532
  %2534 = vrot.lane.b32.xlu0 %v2486, 16
  %v2535 = vpop.permute.xlu0 %2534
  %2536 = vrot.lane.b32.xlu0 %v2487, 16
  %v2537 = vpop.permute.xlu0 %2536
  %2538 = vrot.lane.b32.xlu0 %v2488, 16
  %v2539 = vpop.permute.xlu0 %2538
  %2540 = vrot.lane.b32.xlu0 %v2489, 16
  %v2541 = vpop.permute.xlu0 %2540
  %2542 = vrot.lane.b32.xlu0 %v2490, 16
  %v2543 = vpop.permute.xlu0 %2542
  %2544 = vrot.lane.b32.xlu0 %v2491, 16
  %v2545 = vpop.permute.xlu0 %2544
  %2546 = vrot.lane.b32.xlu0 %v2492, 16
  %v2547 = vpop.permute.xlu0 %2546
  %2548 = vrot.lane.b32.xlu0 %v2493, 16
  %v2549 = vpop.permute.xlu0 %2548
  %2550 = vrot.lane.b32.xlu0 %v2494, 16
  %v2551 = vpop.permute.xlu0 %2550
  %2552 = vrot.lane.b32.xlu0 %v2495, 16
  %v2553 = vpop.permute.xlu0 %2552
  %2554 = vrot.lane.b32.xlu0 %v2496, 16
  %v2555 = vpop.permute.xlu0 %2554
  %2556 = vrot.lane.b32.xlu0 %v2497, 16
  %v2557 = vpop.permute.xlu0 %2556
  %2558 = vrot.lane.b32.xlu0 %v2498, 16
  %v2559 = vpop.permute.xlu0 %2558
  %2560 = vrot.lane.b32.xlu0 %v2499, 16
  %v2561 = vpop.permute.xlu0 %2560
  %2562 = vrot.lane.b32.xlu0 %v2500, 16
  %v2563 = vpop.permute.xlu0 %2562
  %2564 = vrot.lane.b32.xlu0 %v2501, 16
  %v2565 = vpop.permute.xlu0 %2564
  %vm2598 = vcmask 162944
  %2599 = vst.msk [vmem:[#allocation2] sm:$0xff] %vm2598, %v2503
  %2600 = vst.msk [vmem:[#allocation2 + $0x8] sm:$0xff] %vm2598, %v2505
  %2601 = vst.msk [vmem:[#allocation2 + $0x10] sm:$0xff] %vm2598, %v2507
  %2602 = vst.msk [vmem:[#allocation2 + $0x18] sm:$0xff] %vm2598, %v2509
  %2603 = vst.msk [vmem:[#allocation2 + $0x20] sm:$0xff] %vm2598, %v2511
  %2604 = vst.msk [vmem:[#allocation2 + $0x28] sm:$0xff] %vm2598, %v2513
  %2605 = vst.msk [vmem:[#allocation2 + $0x30] sm:$0xff] %vm2598, %v2515
  %2606 = vst.msk [vmem:[#allocation2 + $0x38] sm:$0xff] %vm2598, %v2517
  %2607 = vst.msk [vmem:[#allocation2 + $0x40] sm:$0xff] %vm2598, %v2519
  %2608 = vst.msk [vmem:[#allocation2 + $0x48] sm:$0xff] %vm2598, %v2521
  %2609 = vst.msk [vmem:[#allocation2 + $0x50] sm:$0xff] %vm2598, %v2523
  %2610 = vst.msk [vmem:[#allocation2 + $0x58] sm:$0xff] %vm2598, %v2525
  %2611 = vst.msk [vmem:[#allocation2 + $0x60] sm:$0xff] %vm2598, %v2527
  %2612 = vst.msk [vmem:[#allocation2 + $0x68] sm:$0xff] %vm2598, %v2529
  %2613 = vst.msk [vmem:[#allocation2 + $0x70] sm:$0xff] %vm2598, %v2531
  %2614 = vst.msk [vmem:[#allocation2 + $0x78] sm:$0xff] %vm2598, %v2533
  %2615 = vst.msk [vmem:[#allocation2 + $0x80] sm:$0xff] %vm2598, %v2535
  %2616 = vst.msk [vmem:[#allocation2 + $0x88] sm:$0xff] %vm2598, %v2537
  %2617 = vst.msk [vmem:[#allocation2 + $0x90] sm:$0xff] %vm2598, %v2539
  %2618 = vst.msk [vmem:[#allocation2 + $0x98] sm:$0xff] %vm2598, %v2541
  %2619 = vst.msk [vmem:[#allocation2 + $0xa0] sm:$0xff] %vm2598, %v2543
  %2620 = vst.msk [vmem:[#allocation2 + $0xa8] sm:$0xff] %vm2598, %v2545
  %2621 = vst.msk [vmem:[#allocation2 + $0xb0] sm:$0xff] %vm2598, %v2547
  %2622 = vst.msk [vmem:[#allocation2 + $0xb8] sm:$0xff] %vm2598, %v2549
  %2623 = vst.msk [vmem:[#allocation2 + $0xc0] sm:$0xff] %vm2598, %v2551
  %2624 = vst.msk [vmem:[#allocation2 + $0xc8] sm:$0xff] %vm2598, %v2553
  %2625 = vst.msk [vmem:[#allocation2 + $0xd0] sm:$0xff] %vm2598, %v2555
  %2626 = vst.msk [vmem:[#allocation2 + $0xd8] sm:$0xff] %vm2598, %v2557
  %2627 = vst.msk [vmem:[#allocation2 + $0xe0] sm:$0xff] %vm2598, %v2559
  %2628 = vst.msk [vmem:[#allocation2 + $0xe8] sm:$0xff] %vm2598, %v2561
  %2629 = vst.msk [vmem:[#allocation2 + $0xf0] sm:$0xff] %vm2598, %v2563
  %2630 = vst.msk [vmem:[#allocation2 + $0xf8] sm:$0xff] %vm2598, %v2565
  %v2631 = vld [vmem:[%s0] sm:$0xf]
  %v2632 = vld [vmem:[%s0 + $0x4] sm:$0xf]
  %v2633 = vld [vmem:[%s0 + $0x8] sm:$0xf]
  %v2634 = vld [vmem:[%s0 + $0xc] sm:$0xf]
  %v2635 = vld [vmem:[%s0 + $0x10] sm:$0xf]
  %v2636 = vld [vmem:[%s0 + $0x14] sm:$0xf]
  %v2637 = vld [vmem:[%s0 + $0x18] sm:$0xf]
  %v2638 = vld [vmem:[%s0 + $0x1c] sm:$0xf]
  %v2639 = vld [vmem:[%s0 + $0x20] sm:$0xf]
  %v2640 = vld [vmem:[%s0 + $0x24] sm:$0xf]
  %v2641 = vld [vmem:[%s0 + $0x28] sm:$0xf]
  %v2642 = vld [vmem:[%s0 + $0x2c] sm:$0xf]
  %v2643 = vld [vmem:[%s0 + $0x30] sm:$0xf]
  %v2644 = vld [vmem:[%s0 + $0x34] sm:$0xf]
  %v2645 = vld [vmem:[%s0 + $0x38] sm:$0xf]
  %v2646 = vld [vmem:[%s0 + $0x3c] sm:$0xf]
  %v2647 = vld [vmem:[%s0 + $0x40] sm:$0xf]
  %v2648 = vld [vmem:[%s0 + $0x44] sm:$0xf]
  %v2649 = vld [vmem:[%s0 + $0x48] sm:$0xf]
  %v2650 = vld [vmem:[%s0 + $0x4c] sm:$0xf]
  %v2651 = vld [vmem:[%s0 + $0x50] sm:$0xf]
  %v2652 = vld [vmem:[%s0 + $0x54] sm:$0xf]
  %v2653 = vld [vmem:[%s0 + $0x58] sm:$0xf]
  %v2654 = vld [vmem:[%s0 + $0x5c] sm:$0xf]
  %v2655 = vld [vmem:[%s0 + $0x60] sm:$0xf]
  %v2656 = vld [vmem:[%s0 + $0x64] sm:$0xf]
  %v2657 = vld [vmem:[%s0 + $0x68] sm:$0xf]
  %v2658 = vld [vmem:[%s0 + $0x6c] sm:$0xf]
  %v2659 = vld [vmem:[%s0 + $0x70] sm:$0xf]
  %v2660 = vld [vmem:[%s0 + $0x74] sm:$0xf]
  %v2661 = vld [vmem:[%s0 + $0x78] sm:$0xf]
  %v2662 = vld [vmem:[%s0 + $0x7c] sm:$0xf]
  %v2663 = vld [vmem:[%s0 + $0x80] sm:$0xf]
  %v2664 = vld [vmem:[%s0 + $0x84] sm:$0xf]
  %v2665 = vld [vmem:[%s0 + $0x88] sm:$0xf]
  %v2666 = vld [vmem:[%s0 + $0x8c] sm:$0xf]
  %v2667 = vld [vmem:[%s0 + $0x90] sm:$0xf]
  %v2668 = vld [vmem:[%s0 + $0x94] sm:$0xf]
  %v2669 = vld [vmem:[%s0 + $0x98] sm:$0xf]
  %v2670 = vld [vmem:[%s0 + $0x9c] sm:$0xf]
  %v2671 = vld [vmem:[%s0 + $0xa0] sm:$0xf]
  %v2672 = vld [vmem:[%s0 + $0xa4] sm:$0xf]
  %v2673 = vld [vmem:[%s0 + $0xa8] sm:$0xf]
  %v2674 = vld [vmem:[%s0 + $0xac] sm:$0xf]
  %v2675 = vld [vmem:[%s0 + $0xb0] sm:$0xf]
  %v2676 = vld [vmem:[%s0 + $0xb4] sm:$0xf]
  %v2677 = vld [vmem:[%s0 + $0xb8] sm:$0xf]
  %v2678 = vld [vmem:[%s0 + $0xbc] sm:$0xf]
  %v2679 = vld [vmem:[%s0 + $0xc0] sm:$0xf]
  %v2680 = vld [vmem:[%s0 + $0xc4] sm:$0xf]
  %v2681 = vld [vmem:[%s0 + $0xc8] sm:$0xf]
  %v2682 = vld [vmem:[%s0 + $0xcc] sm:$0xf]
  %v2683 = vld [vmem:[%s0 + $0xd0] sm:$0xf]
  %v2684 = vld [vmem:[%s0 + $0xd4] sm:$0xf]
  %v2685 = vld [vmem:[%s0 + $0xd8] sm:$0xf]
  %v2686 = vld [vmem:[%s0 + $0xdc] sm:$0xf]
  %v2687 = vld [vmem:[%s0 + $0xe0] sm:$0xf]
  %v2688 = vld [vmem:[%s0 + $0xe4] sm:$0xf]
  %v2689 = vld [vmem:[%s0 + $0xe8] sm:$0xf]
  %v2690 = vld [vmem:[%s0 + $0xec] sm:$0xf]
  %v2691 = vld [vmem:[%s0 + $0xf0] sm:$0xf]
  %v2692 = vld [vmem:[%s0 + $0xf4] sm:$0xf]
  %v2693 = vld [vmem:[%s0 + $0xf8] sm:$0xf]
  %v2694 = vld [vmem:[%s0 + $0xfc] sm:$0xf]
  %v2759 = vunpack.c.l.b16 %v2631
  %v2760 = vunpack.c.l.b16 %v2632
  %v2761 = vunpack.c.l.b16 %v2633
  %v2762 = vunpack.c.l.b16 %v2634
  %v2763 = vunpack.c.l.b16 %v2635
  %v2764 = vunpack.c.l.b16 %v2636
  %v2765 = vunpack.c.l.b16 %v2637
  %v2766 = vunpack.c.l.b16 %v2638
  %v2767 = vunpack.c.l.b16 %v2639
  %v2768 = vunpack.c.l.b16 %v2640
  %v2769 = vunpack.c.l.b16 %v2641
  %v2770 = vunpack.c.l.b16 %v2642
  %v2771 = vunpack.c.l.b16 %v2643
  %v2772 = vunpack.c.l.b16 %v2644
  %v2773 = vunpack.c.l.b16 %v2645
  %v2774 = vunpack.c.l.b16 %v2646
  %v2775 = vunpack.c.l.b16 %v2647
  %v2776 = vunpack.c.l.b16 %v2648
  %v2777 = vunpack.c.l.b16 %v2649
  %v2778 = vunpack.c.l.b16 %v2650
  %v2779 = vunpack.c.l.b16 %v2651
  %v2780 = vunpack.c.l.b16 %v2652
  %v2781 = vunpack.c.l.b16 %v2653
  %v2782 = vunpack.c.l.b16 %v2654
  %v2783 = vunpack.c.l.b16 %v2655
  %v2784 = vunpack.c.l.b16 %v2656
  %v2785 = vunpack.c.l.b16 %v2657
  %v2786 = vunpack.c.l.b16 %v2658
  %v2787 = vunpack.c.l.b16 %v2659
  %v2788 = vunpack.c.l.b16 %v2660
  %v2789 = vunpack.c.l.b16 %v2661
  %v2790 = vunpack.c.l.b16 %v2662
  %v2791 = vunpack.c.l.b16 %v2663
  %v2792 = vunpack.c.l.b16 %v2664
  %v2793 = vunpack.c.l.b16 %v2665
  %v2794 = vunpack.c.l.b16 %v2666
  %v2795 = vunpack.c.l.b16 %v2667
  %v2796 = vunpack.c.l.b16 %v2668
  %v2797 = vunpack.c.l.b16 %v2669
  %v2798 = vunpack.c.l.b16 %v2670
  %v2799 = vunpack.c.l.b16 %v2671
  %v2800 = vunpack.c.l.b16 %v2672
  %v2801 = vunpack.c.l.b16 %v2673
  %v2802 = vunpack.c.l.b16 %v2674
  %v2803 = vunpack.c.l.b16 %v2675
  %v2804 = vunpack.c.l.b16 %v2676
  %v2805 = vunpack.c.l.b16 %v2677
  %v2806 = vunpack.c.l.b16 %v2678
  %v2807 = vunpack.c.l.b16 %v2679
  %v2808 = vunpack.c.l.b16 %v2680
  %v2809 = vunpack.c.l.b16 %v2681
  %v2810 = vunpack.c.l.b16 %v2682
  %v2811 = vunpack.c.l.b16 %v2683
  %v2812 = vunpack.c.l.b16 %v2684
  %v2813 = vunpack.c.l.b16 %v2685
  %v2814 = vunpack.c.l.b16 %v2686
  %v2815 = vunpack.c.l.b16 %v2687
  %v2816 = vunpack.c.l.b16 %v2688
  %v2817 = vunpack.c.l.b16 %v2689
  %v2818 = vunpack.c.l.b16 %v2690
  %v2819 = vunpack.c.l.b16 %v2691
  %v2820 = vunpack.c.l.b16 %v2692
  %v2821 = vunpack.c.l.b16 %v2693
  %v2822 = vunpack.c.l.b16 %v2694
  %v2823 = vpack.c.b16 %v2760, %v2759
  %v2824 = vpack.c.b16 %v2762, %v2761
  %v2825 = vpack.c.b16 %v2764, %v2763
  %v2826 = vpack.c.b16 %v2766, %v2765
  %v2827 = vpack.c.b16 %v2768, %v2767
  %v2828 = vpack.c.b16 %v2770, %v2769
  %v2829 = vpack.c.b16 %v2772, %v2771
  %v2830 = vpack.c.b16 %v2774, %v2773
  %v2831 = vpack.c.b16 %v2776, %v2775
  %v2832 = vpack.c.b16 %v2778, %v2777
  %v2833 = vpack.c.b16 %v2780, %v2779
  %v2834 = vpack.c.b16 %v2782, %v2781
  %v2835 = vpack.c.b16 %v2784, %v2783
  %v2836 = vpack.c.b16 %v2786, %v2785
  %v2837 = vpack.c.b16 %v2788, %v2787
  %v2838 = vpack.c.b16 %v2790, %v2789
  %v2839 = vpack.c.b16 %v2792, %v2791
  %v2840 = vpack.c.b16 %v2794, %v2793
  %v2841 = vpack.c.b16 %v2796, %v2795
  %v2842 = vpack.c.b16 %v2798, %v2797
  %v2843 = vpack.c.b16 %v2800, %v2799
  %v2844 = vpack.c.b16 %v2802, %v2801
  %v2845 = vpack.c.b16 %v2804, %v2803
  %v2846 = vpack.c.b16 %v2806, %v2805
  %v2847 = vpack.c.b16 %v2808, %v2807
  %v2848 = vpack.c.b16 %v2810, %v2809
  %v2849 = vpack.c.b16 %v2812, %v2811
  %v2850 = vpack.c.b16 %v2814, %v2813
  %v2851 = vpack.c.b16 %v2816, %v2815
  %v2852 = vpack.c.b16 %v2818, %v2817
  %v2853 = vpack.c.b16 %v2820, %v2819
  %v2854 = vpack.c.b16 %v2822, %v2821
  %v2856 = vshrl.u32 %v2823, 16
  %v2858 = vshll.u32 %v2823, 16
  %v2860 = vrot.slane %v2858, 1
  %v2861 = vor.u32 %v2856, %v2860
  %v2863 = vshrl.u32 %v2824, 16
  %v2865 = vshll.u32 %v2824, 16
  %v2867 = vrot.slane %v2865, 1
  %v2868 = vor.u32 %v2863, %v2867
  %v2870 = vshrl.u32 %v2825, 16
  %v2872 = vshll.u32 %v2825, 16
  %v2874 = vrot.slane %v2872, 1
  %v2875 = vor.u32 %v2870, %v2874
  %v2877 = vshrl.u32 %v2826, 16
  %v2879 = vshll.u32 %v2826, 16
  %v2881 = vrot.slane %v2879, 1
  %v2882 = vor.u32 %v2877, %v2881
  %v2884 = vshrl.u32 %v2827, 16
  %v2886 = vshll.u32 %v2827, 16
  %v2888 = vrot.slane %v2886, 1
  %v2889 = vor.u32 %v2884, %v2888
  %v2891 = vshrl.u32 %v2828, 16
  %v2893 = vshll.u32 %v2828, 16
  %v2895 = vrot.slane %v2893, 1
  %v2896 = vor.u32 %v2891, %v2895
  %v2898 = vshrl.u32 %v2829, 16
  %v2900 = vshll.u32 %v2829, 16
  %v2902 = vrot.slane %v2900, 1
  %v2903 = vor.u32 %v2898, %v2902
  %v2905 = vshrl.u32 %v2830, 16
  %v2907 = vshll.u32 %v2830, 16
  %v2909 = vrot.slane %v2907, 1
  %v2910 = vor.u32 %v2905, %v2909
  %v2912 = vshrl.u32 %v2831, 16
  %v2914 = vshll.u32 %v2831, 16
  %v2916 = vrot.slane %v2914, 1
  %v2917 = vor.u32 %v2912, %v2916
  %v2919 = vshrl.u32 %v2832, 16
  %v2921 = vshll.u32 %v2832, 16
  %v2923 = vrot.slane %v2921, 1
  %v2924 = vor.u32 %v2919, %v2923
  %v2926 = vshrl.u32 %v2833, 16
  %v2928 = vshll.u32 %v2833, 16
  %v2930 = vrot.slane %v2928, 1
  %v2931 = vor.u32 %v2926, %v2930
  %v2933 = vshrl.u32 %v2834, 16
  %v2935 = vshll.u32 %v2834, 16
  %v2937 = vrot.slane %v2935, 1
  %v2938 = vor.u32 %v2933, %v2937
  %v2940 = vshrl.u32 %v2835, 16
  %v2942 = vshll.u32 %v2835, 16
  %v2944 = vrot.slane %v2942, 1
  %v2945 = vor.u32 %v2940, %v2944
  %v2947 = vshrl.u32 %v2836, 16
  %v2949 = vshll.u32 %v2836, 16
  %v2951 = vrot.slane %v2949, 1
  %v2952 = vor.u32 %v2947, %v2951
  %v2954 = vshrl.u32 %v2837, 16
  %v2956 = vshll.u32 %v2837, 16
  %v2958 = vrot.slane %v2956, 1
  %v2959 = vor.u32 %v2954, %v2958
  %v2961 = vshrl.u32 %v2838, 16
  %v2963 = vshll.u32 %v2838, 16
  %v2965 = vrot.slane %v2963, 1
  %v2966 = vor.u32 %v2961, %v2965
  %v2968 = vshrl.u32 %v2839, 16
  %v2970 = vshll.u32 %v2839, 16
  %v2972 = vrot.slane %v2970, 1
  %v2973 = vor.u32 %v2968, %v2972
  %v2975 = vshrl.u32 %v2840, 16
  %v2977 = vshll.u32 %v2840, 16
  %v2979 = vrot.slane %v2977, 1
  %v2980 = vor.u32 %v2975, %v2979
  %v2982 = vshrl.u32 %v2841, 16
  %v2984 = vshll.u32 %v2841, 16
  %v2986 = vrot.slane %v2984, 1
  %v2987 = vor.u32 %v2982, %v2986
  %v2989 = vshrl.u32 %v2842, 16
  %v2991 = vshll.u32 %v2842, 16
  %v2993 = vrot.slane %v2991, 1
  %v2994 = vor.u32 %v2989, %v2993
  %v2996 = vshrl.u32 %v2843, 16
  %v2998 = vshll.u32 %v2843, 16
  %v3000 = vrot.slane %v2998, 1
  %v3001 = vor.u32 %v2996, %v3000
  %v3003 = vshrl.u32 %v2844, 16
  %v3005 = vshll.u32 %v2844, 16
  %v3007 = vrot.slane %v3005, 1
  %v3008 = vor.u32 %v3003, %v3007
  %v3010 = vshrl.u32 %v2845, 16
  %v3012 = vshll.u32 %v2845, 16
  %v3014 = vrot.slane %v3012, 1
  %v3015 = vor.u32 %v3010, %v3014
  %v3017 = vshrl.u32 %v2846, 16
  %v3019 = vshll.u32 %v2846, 16
  %v3021 = vrot.slane %v3019, 1
  %v3022 = vor.u32 %v3017, %v3021
  %v3024 = vshrl.u32 %v2847, 16
  %v3026 = vshll.u32 %v2847, 16
  %v3028 = vrot.slane %v3026, 1
  %v3029 = vor.u32 %v3024, %v3028
  %v3031 = vshrl.u32 %v2848, 16
  %v3033 = vshll.u32 %v2848, 16
  %v3035 = vrot.slane %v3033, 1
  %v3036 = vor.u32 %v3031, %v3035
  %v3038 = vshrl.u32 %v2849, 16
  %v3040 = vshll.u32 %v2849, 16
  %v3042 = vrot.slane %v3040, 1
  %v3043 = vor.u32 %v3038, %v3042
  %v3045 = vshrl.u32 %v2850, 16
  %v3047 = vshll.u32 %v2850, 16
  %v3049 = vrot.slane %v3047, 1
  %v3050 = vor.u32 %v3045, %v3049
  %v3052 = vshrl.u32 %v2851, 16
  %v3054 = vshll.u32 %v2851, 16
  %v3056 = vrot.slane %v3054, 1
  %v3057 = vor.u32 %v3052, %v3056
  %v3059 = vshrl.u32 %v2852, 16
  %v3061 = vshll.u32 %v2852, 16
  %v3063 = vrot.slane %v3061, 1
  %v3064 = vor.u32 %v3059, %v3063
  %v3066 = vshrl.u32 %v2853, 16
  %v3068 = vshll.u32 %v2853, 16
  %v3070 = vrot.slane %v3068, 1
  %v3071 = vor.u32 %v3066, %v3070
  %v3073 = vshrl.u32 %v2854, 16
  %v3075 = vshll.u32 %v2854, 16
  %v3077 = vrot.slane %v3075, 1
  %v3078 = vor.u32 %v3073, %v3077
  %3079 = vrot.lane.b32.xlu0 %v2861, 20
  %v3080 = vpop.permute.xlu0 %3079
  %3081 = vrot.lane.b32.xlu0 %v2868, 20
  %v3082 = vpop.permute.xlu0 %3081
  %3083 = vrot.lane.b32.xlu0 %v2875, 20
  %v3084 = vpop.permute.xlu0 %3083
  %3085 = vrot.lane.b32.xlu0 %v2882, 20
  %v3086 = vpop.permute.xlu0 %3085
  %3087 = vrot.lane.b32.xlu0 %v2889, 20
  %v3088 = vpop.permute.xlu0 %3087
  %3089 = vrot.lane.b32.xlu0 %v2896, 20
  %v3090 = vpop.permute.xlu0 %3089
  %3091 = vrot.lane.b32.xlu0 %v2903, 20
  %v3092 = vpop.permute.xlu0 %3091
  %3093 = vrot.lane.b32.xlu0 %v2910, 20
  %v3094 = vpop.permute.xlu0 %3093
  %3095 = vrot.lane.b32.xlu0 %v2917, 20
  %v3096 = vpop.permute.xlu0 %3095
  %3097 = vrot.lane.b32.xlu0 %v2924, 20
  %v3098 = vpop.permute.xlu0 %3097
  %3099 = vrot.lane.b32.xlu0 %v2931, 20
  %v3100 = vpop.permute.xlu0 %3099
  %3101 = vrot.lane.b32.xlu0 %v2938, 20
  %v3102 = vpop.permute.xlu0 %3101
  %3103 = vrot.lane.b32.xlu0 %v2945, 20
  %v3104 = vpop.permute.xlu0 %3103
  %3105 = vrot.lane.b32.xlu0 %v2952, 20
  %v3106 = vpop.permute.xlu0 %3105
  %3107 = vrot.lane.b32.xlu0 %v2959, 20
  %v3108 = vpop.permute.xlu0 %3107
  %3109 = vrot.lane.b32.xlu0 %v2966, 20
  %v3110 = vpop.permute.xlu0 %3109
  %3111 = vrot.lane.b32.xlu0 %v2973, 20
  %v3112 = vpop.permute.xlu0 %3111
  %3113 = vrot.lane.b32.xlu0 %v2980, 20
  %v3114 = vpop.permute.xlu0 %3113
  %3115 = vrot.lane.b32.xlu0 %v2987, 20
  %v3116 = vpop.permute.xlu0 %3115
  %3117 = vrot.lane.b32.xlu0 %v2994, 20
  %v3118 = vpop.permute.xlu0 %3117
  %3119 = vrot.lane.b32.xlu0 %v3001, 20
  %v3120 = vpop.permute.xlu0 %3119
  %3121 = vrot.lane.b32.xlu0 %v3008, 20
  %v3122 = vpop.permute.xlu0 %3121
  %3123 = vrot.lane.b32.xlu0 %v3015, 20
  %v3124 = vpop.permute.xlu0 %3123
  %3125 = vrot.lane.b32.xlu0 %v3022, 20
  %v3126 = vpop.permute.xlu0 %3125
  %3127 = vrot.lane.b32.xlu0 %v3029, 20
  %v3128 = vpop.permute.xlu0 %3127
  %3129 = vrot.lane.b32.xlu0 %v3036, 20
  %v3130 = vpop.permute.xlu0 %3129
  %3131 = vrot.lane.b32.xlu0 %v3043, 20
  %v3132 = vpop.permute.xlu0 %3131
  %3133 = vrot.lane.b32.xlu0 %v3050, 20
  %v3134 = vpop.permute.xlu0 %3133
  %3135 = vrot.lane.b32.xlu0 %v3057, 20
  %v3136 = vpop.permute.xlu0 %3135
  %3137 = vrot.lane.b32.xlu0 %v3064, 20
  %v3138 = vpop.permute.xlu0 %3137
  %3139 = vrot.lane.b32.xlu0 %v3071, 20
  %v3140 = vpop.permute.xlu0 %3139
  %3141 = vrot.lane.b32.xlu0 %v3078, 20
  %v3142 = vpop.permute.xlu0 %3141
  %vm3175 = vcmask 195744
  %vm3176 = vmand %vm3175, %vm1544
  %v3177 = vld [vmem:[#allocation2] sm:$0xff]
  %v3178 = vsel %vm3176, %v3080, %v3177
  %3179 = vst [vmem:[#allocation2] sm:$0xff] %v3178
  %v3180 = vld [vmem:[#allocation2 + $0x8] sm:$0xff]
  %v3181 = vsel %vm3176, %v3082, %v3180
  %3182 = vst [vmem:[#allocation2 + $0x8] sm:$0xff] %v3181
  %v3183 = vld [vmem:[#allocation2 + $0x10] sm:$0xff]
  %v3184 = vsel %vm3176, %v3084, %v3183
  %3185 = vst [vmem:[#allocation2 + $0x10] sm:$0xff] %v3184
  %v3186 = vld [vmem:[#allocation2 + $0x18] sm:$0xff]
  %v3187 = vsel %vm3176, %v3086, %v3186
  %3188 = vst [vmem:[#allocation2 + $0x18] sm:$0xff] %v3187
  %v3189 = vld [vmem:[#allocation2 + $0x20] sm:$0xff]
  %v3190 = vsel %vm3176, %v3088, %v3189
  %3191 = vst [vmem:[#allocation2 + $0x20] sm:$0xff] %v3190
  %v3192 = vld [vmem:[#allocation2 + $0x28] sm:$0xff]
  %v3193 = vsel %vm3176, %v3090, %v3192
  %3194 = vst [vmem:[#allocation2 + $0x28] sm:$0xff] %v3193
  %v3195 = vld [vmem:[#allocation2 + $0x30] sm:$0xff]
  %v3196 = vsel %vm3176, %v3092, %v3195
  %3197 = vst [vmem:[#allocation2 + $0x30] sm:$0xff] %v3196
  %v3198 = vld [vmem:[#allocation2 + $0x38] sm:$0xff]
  %v3199 = vsel %vm3176, %v3094, %v3198
  %3200 = vst [vmem:[#allocation2 + $0x38] sm:$0xff] %v3199
  %v3201 = vld [vmem:[#allocation2 + $0x40] sm:$0xff]
  %v3202 = vsel %vm3176, %v3096, %v3201
  %3203 = vst [vmem:[#allocation2 + $0x40] sm:$0xff] %v3202
  %v3204 = vld [vmem:[#allocation2 + $0x48] sm:$0xff]
  %v3205 = vsel %vm3176, %v3098, %v3204
  %3206 = vst [vmem:[#allocation2 + $0x48] sm:$0xff] %v3205
  %v3207 = vld [vmem:[#allocation2 + $0x50] sm:$0xff]
  %v3208 = vsel %vm3176, %v3100, %v3207
  %3209 = vst [vmem:[#allocation2 + $0x50] sm:$0xff] %v3208
  %v3210 = vld [vmem:[#allocation2 + $0x58] sm:$0xff]
  %v3211 = vsel %vm3176, %v3102, %v3210
  %3212 = vst [vmem:[#allocation2 + $0x58] sm:$0xff] %v3211
  %v3213 = vld [vmem:[#allocation2 + $0x60] sm:$0xff]
  %v3214 = vsel %vm3176, %v3104, %v3213
  %3215 = vst [vmem:[#allocation2 + $0x60] sm:$0xff] %v3214
  %v3216 = vld [vmem:[#allocation2 + $0x68] sm:$0xff]
  %v3217 = vsel %vm3176, %v3106, %v3216
  %3218 = vst [vmem:[#allocation2 + $0x68] sm:$0xff] %v3217
  %v3219 = vld [vmem:[#allocation2 + $0x70] sm:$0xff]
  %v3220 = vsel %vm3176, %v3108, %v3219
  %3221 = vst [vmem:[#allocation2 + $0x70] sm:$0xff] %v3220
  %v3222 = vld [vmem:[#allocation2 + $0x78] sm:$0xff]
  %v3223 = vsel %vm3176, %v3110, %v3222
  %3224 = vst [vmem:[#allocation2 + $0x78] sm:$0xff] %v3223
  %v3225 = vld [vmem:[#allocation2 + $0x80] sm:$0xff]
  %v3226 = vsel %vm3176, %v3112, %v3225
  %3227 = vst [vmem:[#allocation2 + $0x80] sm:$0xff] %v3226
  %v3228 = vld [vmem:[#allocation2 + $0x88] sm:$0xff]
  %v3229 = vsel %vm3176, %v3114, %v3228
  %3230 = vst [vmem:[#allocation2 + $0x88] sm:$0xff] %v3229
  %v3231 = vld [vmem:[#allocation2 + $0x90] sm:$0xff]
  %v3232 = vsel %vm3176, %v3116, %v3231
  %3233 = vst [vmem:[#allocation2 + $0x90] sm:$0xff] %v3232
  %v3234 = vld [vmem:[#allocation2 + $0x98] sm:$0xff]
  %v3235 = vsel %vm3176, %v3118, %v3234
  %3236 = vst [vmem:[#allocation2 + $0x98] sm:$0xff] %v3235
  %v3237 = vld [vmem:[#allocation2 + $0xa0] sm:$0xff]
  %v3238 = vsel %vm3176, %v3120, %v3237
  %3239 = vst [vmem:[#allocation2 + $0xa0] sm:$0xff] %v3238
  %v3240 = vld [vmem:[#allocation2 + $0xa8] sm:$0xff]
  %v3241 = vsel %vm3176, %v3122, %v3240
  %3242 = vst [vmem:[#allocation2 + $0xa8] sm:$0xff] %v3241
  %v3243 = vld [vmem:[#allocation2 + $0xb0] sm:$0xff]
  %v3244 = vsel %vm3176, %v3124, %v3243
  %3245 = vst [vmem:[#allocation2 + $0xb0] sm:$0xff] %v3244
  %v3246 = vld [vmem:[#allocation2 + $0xb8] sm:$0xff]
  %v3247 = vsel %vm3176, %v3126, %v3246
  %3248 = vst [vmem:[#allocation2 + $0xb8] sm:$0xff] %v3247
  %v3249 = vld [vmem:[#allocation2 + $0xc0] sm:$0xff]
  %v3250 = vsel %vm3176, %v3128, %v3249
  %3251 = vst [vmem:[#allocation2 + $0xc0] sm:$0xff] %v3250
  %v3252 = vld [vmem:[#allocation2 + $0xc8] sm:$0xff]
  %v3253 = vsel %vm3176, %v3130, %v3252
  %3254 = vst [vmem:[#allocation2 + $0xc8] sm:$0xff] %v3253
  %v3255 = vld [vmem:[#allocation2 + $0xd0] sm:$0xff]
  %v3256 = vsel %vm3176, %v3132, %v3255
  %3257 = vst [vmem:[#allocation2 + $0xd0] sm:$0xff] %v3256
  %v3258 = vld [vmem:[#allocation2 + $0xd8] sm:$0xff]
  %v3259 = vsel %vm3176, %v3134, %v3258
  %3260 = vst [vmem:[#allocation2 + $0xd8] sm:$0xff] %v3259
  %v3261 = vld [vmem:[#allocation2 + $0xe0] sm:$0xff]
  %v3262 = vsel %vm3176, %v3136, %v3261
  %3263 = vst [vmem:[#allocation2 + $0xe0] sm:$0xff] %v3262
  %v3264 = vld [vmem:[#allocation2 + $0xe8] sm:$0xff]
  %v3265 = vsel %vm3176, %v3138, %v3264
  %3266 = vst [vmem:[#allocation2 + $0xe8] sm:$0xff] %v3265
  %v3267 = vld [vmem:[#allocation2 + $0xf0] sm:$0xff]
  %v3268 = vsel %vm3176, %v3140, %v3267
  %3269 = vst [vmem:[#allocation2 + $0xf0] sm:$0xff] %v3268
  %v3270 = vld [vmem:[#allocation2 + $0xf8] sm:$0xff]
  %v3271 = vsel %vm3176, %v3142, %v3270
  %3272 = vst [vmem:[#allocation2 + $0xf8] sm:$0xff] %v3271
  %s3273 = scalar_lea.vmem %s0, 8
  %v3274 = vld [vmem:[%s3273] sm:$0xf]
  %v3275 = vld [vmem:[%s3273 + $0x4] sm:$0xf]
  %v3276 = vld [vmem:[%s3273 + $0x8] sm:$0xf]
  %v3277 = vld [vmem:[%s3273 + $0xc] sm:$0xf]
  %v3278 = vld [vmem:[%s3273 + $0x10] sm:$0xf]
  %v3279 = vld [vmem:[%s3273 + $0x14] sm:$0xf]
  %v3280 = vld [vmem:[%s3273 + $0x18] sm:$0xf]
  %v3281 = vld [vmem:[%s3273 + $0x1c] sm:$0xf]
  %v3282 = vld [vmem:[%s3273 + $0x20] sm:$0xf]
  %v3283 = vld [vmem:[%s3273 + $0x24] sm:$0xf]
  %v3284 = vld [vmem:[%s3273 + $0x28] sm:$0xf]
  %v3285 = vld [vmem:[%s3273 + $0x2c] sm:$0xf]
  %v3286 = vld [vmem:[%s3273 + $0x30] sm:$0xf]
  %v3287 = vld [vmem:[%s3273 + $0x34] sm:$0xf]
  %v3288 = vld [vmem:[%s3273 + $0x38] sm:$0xf]
  %v3289 = vld [vmem:[%s3273 + $0x3c] sm:$0xf]
  %v3290 = vld [vmem:[%s3273 + $0x40] sm:$0xf]
  %v3291 = vld [vmem:[%s3273 + $0x44] sm:$0xf]
  %v3292 = vld [vmem:[%s3273 + $0x48] sm:$0xf]
  %v3293 = vld [vmem:[%s3273 + $0x4c] sm:$0xf]
  %v3294 = vld [vmem:[%s3273 + $0x50] sm:$0xf]
  %v3295 = vld [vmem:[%s3273 + $0x54] sm:$0xf]
  %v3296 = vld [vmem:[%s3273 + $0x58] sm:$0xf]
  %v3297 = vld [vmem:[%s3273 + $0x5c] sm:$0xf]
  %v3298 = vld [vmem:[%s3273 + $0x60] sm:$0xf]
  %v3299 = vld [vmem:[%s3273 + $0x64] sm:$0xf]
  %v3300 = vld [vmem:[%s3273 + $0x68] sm:$0xf]
  %v3301 = vld [vmem:[%s3273 + $0x6c] sm:$0xf]
  %v3302 = vld [vmem:[%s3273 + $0x70] sm:$0xf]
  %v3303 = vld [vmem:[%s3273 + $0x74] sm:$0xf]
  %v3304 = vld [vmem:[%s3273 + $0x80] sm:$0xf]
  %v3305 = vld [vmem:[%s3273 + $0x84] sm:$0xf]
  %v3306 = vld [vmem:[%s3273 + $0x88] sm:$0xf]
  %v3307 = vld [vmem:[%s3273 + $0x8c] sm:$0xf]
  %v3308 = vld [vmem:[%s3273 + $0x90] sm:$0xf]
  %v3309 = vld [vmem:[%s3273 + $0x94] sm:$0xf]
  %v3310 = vld [vmem:[%s3273 + $0x98] sm:$0xf]
  %v3311 = vld [vmem:[%s3273 + $0x9c] sm:$0xf]
  %v3312 = vld [vmem:[%s3273 + $0xa0] sm:$0xf]
  %v3313 = vld [vmem:[%s3273 + $0xa4] sm:$0xf]
  %v3314 = vld [vmem:[%s3273 + $0xa8] sm:$0xf]
  %v3315 = vld [vmem:[%s3273 + $0xac] sm:$0xf]
  %v3316 = vld [vmem:[%s3273 + $0xb0] sm:$0xf]
  %v3317 = vld [vmem:[%s3273 + $0xb4] sm:$0xf]
  %v3318 = vld [vmem:[%s3273 + $0xb8] sm:$0xf]
  %v3319 = vld [vmem:[%s3273 + $0xbc] sm:$0xf]
  %v3320 = vld [vmem:[%s3273 + $0xc0] sm:$0xf]
  %v3321 = vld [vmem:[%s3273 + $0xc4] sm:$0xf]
  %v3322 = vld [vmem:[%s3273 + $0xc8] sm:$0xf]
  %v3323 = vld [vmem:[%s3273 + $0xcc] sm:$0xf]
  %v3324 = vld [vmem:[%s3273 + $0xd0] sm:$0xf]
  %v3325 = vld [vmem:[%s3273 + $0xd4] sm:$0xf]
  %v3326 = vld [vmem:[%s3273 + $0xd8] sm:$0xf]
  %v3327 = vld [vmem:[%s3273 + $0xdc] sm:$0xf]
  %v3328 = vld [vmem:[%s3273 + $0xe0] sm:$0xf]
  %v3329 = vld [vmem:[%s3273 + $0xe4] sm:$0xf]
  %v3330 = vld [vmem:[%s3273 + $0xe8] sm:$0xf]
  %v3331 = vld [vmem:[%s3273 + $0xec] sm:$0xf]
  %v3332 = vld [vmem:[%s3273 + $0xf0] sm:$0xf]
  %v3333 = vld [vmem:[%s3273 + $0xf4] sm:$0xf]
  %v3394 = vunpack.c.l.b16 %v3274
  %v3395 = vunpack.c.l.b16 %v3275
  %v3396 = vunpack.c.l.b16 %v3276
  %v3397 = vunpack.c.l.b16 %v3277
  %v3398 = vunpack.c.l.b16 %v3278
  %v3399 = vunpack.c.l.b16 %v3279
  %v3400 = vunpack.c.l.b16 %v3280
  %v3401 = vunpack.c.l.b16 %v3281
  %v3402 = vunpack.c.l.b16 %v3282
  %v3403 = vunpack.c.l.b16 %v3283
  %v3404 = vunpack.c.l.b16 %v3284
  %v3405 = vunpack.c.l.b16 %v3285
  %v3406 = vunpack.c.l.b16 %v3286
  %v3407 = vunpack.c.l.b16 %v3287
  %v3408 = vunpack.c.l.b16 %v3288
  %v3409 = vunpack.c.l.b16 %v3289
  %v3410 = vunpack.c.l.b16 %v3290
  %v3411 = vunpack.c.l.b16 %v3291
  %v3412 = vunpack.c.l.b16 %v3292
  %v3413 = vunpack.c.l.b16 %v3293
  %v3414 = vunpack.c.l.b16 %v3294
  %v3415 = vunpack.c.l.b16 %v3295
  %v3416 = vunpack.c.l.b16 %v3296
  %v3417 = vunpack.c.l.b16 %v3297
  %v3418 = vunpack.c.l.b16 %v3298
  %v3419 = vunpack.c.l.b16 %v3299
  %v3420 = vunpack.c.l.b16 %v3300
  %v3421 = vunpack.c.l.b16 %v3301
  %v3422 = vunpack.c.l.b16 %v3302
  %v3423 = vunpack.c.l.b16 %v3303
  %v3424 = vunpack.c.l.b16 %v3304
  %v3425 = vunpack.c.l.b16 %v3305
  %v3426 = vunpack.c.l.b16 %v3306
  %v3427 = vunpack.c.l.b16 %v3307
  %v3428 = vunpack.c.l.b16 %v3308
  %v3429 = vunpack.c.l.b16 %v3309
  %v3430 = vunpack.c.l.b16 %v3310
  %v3431 = vunpack.c.l.b16 %v3311
  %v3432 = vunpack.c.l.b16 %v3312
  %v3433 = vunpack.c.l.b16 %v3313
  %v3434 = vunpack.c.l.b16 %v3314
  %v3435 = vunpack.c.l.b16 %v3315
  %v3436 = vunpack.c.l.b16 %v3316
  %v3437 = vunpack.c.l.b16 %v3317
  %v3438 = vunpack.c.l.b16 %v3318
  %v3439 = vunpack.c.l.b16 %v3319
  %v3440 = vunpack.c.l.b16 %v3320
  %v3441 = vunpack.c.l.b16 %v3321
  %v3442 = vunpack.c.l.b16 %v3322
  %v3443 = vunpack.c.l.b16 %v3323
  %v3444 = vunpack.c.l.b16 %v3324
  %v3445 = vunpack.c.l.b16 %v3325
  %v3446 = vunpack.c.l.b16 %v3326
  %v3447 = vunpack.c.l.b16 %v3327
  %v3448 = vunpack.c.l.b16 %v3328
  %v3449 = vunpack.c.l.b16 %v3329
  %v3450 = vunpack.c.l.b16 %v3330
  %v3451 = vunpack.c.l.b16 %v3331
  %v3452 = vunpack.c.l.b16 %v3332
  %v3453 = vunpack.c.l.b16 %v3333
  %v3454 = vpack.c.b16 %v3395, %v3394
  %v3455 = vpack.c.b16 %v3397, %v3396
  %v3456 = vpack.c.b16 %v3399, %v3398
  %v3457 = vpack.c.b16 %v3401, %v3400
  %v3458 = vpack.c.b16 %v3403, %v3402
  %v3459 = vpack.c.b16 %v3405, %v3404
  %v3460 = vpack.c.b16 %v3407, %v3406
  %v3461 = vpack.c.b16 %v3409, %v3408
  %v3462 = vpack.c.b16 %v3411, %v3410
  %v3463 = vpack.c.b16 %v3413, %v3412
  %v3464 = vpack.c.b16 %v3415, %v3414
  %v3465 = vpack.c.b16 %v3417, %v3416
  %v3466 = vpack.c.b16 %v3419, %v3418
  %v3467 = vpack.c.b16 %v3421, %v3420
  %v3468 = vpack.c.b16 %v3423, %v3422
  %v3469 = vpack.c.b16 %v3425, %v3424
  %v3470 = vpack.c.b16 %v3427, %v3426
  %v3471 = vpack.c.b16 %v3429, %v3428
  %v3472 = vpack.c.b16 %v3431, %v3430
  %v3473 = vpack.c.b16 %v3433, %v3432
  %v3474 = vpack.c.b16 %v3435, %v3434
  %v3475 = vpack.c.b16 %v3437, %v3436
  %v3476 = vpack.c.b16 %v3439, %v3438
  %v3477 = vpack.c.b16 %v3441, %v3440
  %v3478 = vpack.c.b16 %v3443, %v3442
  %v3479 = vpack.c.b16 %v3445, %v3444
  %v3480 = vpack.c.b16 %v3447, %v3446
  %v3481 = vpack.c.b16 %v3449, %v3448
  %v3482 = vpack.c.b16 %v3451, %v3450
  %v3483 = vpack.c.b16 %v3453, %v3452
  %v3485 = vshrl.u32 %v3454, 16
  %v3487 = vrot.slane %v3485, 7
  %v3488 = vshll.u32 %v3454, 16
  %v3490 = vor.u32 %v3487, %v3488
  %v3492 = vshrl.u32 %v3455, 16
  %v3494 = vrot.slane %v3492, 7
  %v3495 = vshll.u32 %v3455, 16
  %v3497 = vor.u32 %v3494, %v3495
  %v3499 = vshrl.u32 %v3456, 16
  %v3501 = vrot.slane %v3499, 7
  %v3502 = vshll.u32 %v3456, 16
  %v3504 = vor.u32 %v3501, %v3502
  %v3506 = vshrl.u32 %v3457, 16
  %v3508 = vrot.slane %v3506, 7
  %v3509 = vshll.u32 %v3457, 16
  %v3511 = vor.u32 %v3508, %v3509
  %v3513 = vshrl.u32 %v3458, 16
  %v3515 = vrot.slane %v3513, 7
  %v3516 = vshll.u32 %v3458, 16
  %v3518 = vor.u32 %v3515, %v3516
  %v3520 = vshrl.u32 %v3459, 16
  %v3522 = vrot.slane %v3520, 7
  %v3523 = vshll.u32 %v3459, 16
  %v3525 = vor.u32 %v3522, %v3523
  %v3527 = vshrl.u32 %v3460, 16
  %v3529 = vrot.slane %v3527, 7
  %v3530 = vshll.u32 %v3460, 16
  %v3532 = vor.u32 %v3529, %v3530
  %v3534 = vshrl.u32 %v3461, 16
  %v3536 = vrot.slane %v3534, 7
  %v3537 = vshll.u32 %v3461, 16
  %v3539 = vor.u32 %v3536, %v3537
  %v3541 = vshrl.u32 %v3462, 16
  %v3543 = vrot.slane %v3541, 7
  %v3544 = vshll.u32 %v3462, 16
  %v3546 = vor.u32 %v3543, %v3544
  %v3548 = vshrl.u32 %v3463, 16
  %v3550 = vrot.slane %v3548, 7
  %v3551 = vshll.u32 %v3463, 16
  %v3553 = vor.u32 %v3550, %v3551
  %v3555 = vshrl.u32 %v3464, 16
  %v3557 = vrot.slane %v3555, 7
  %v3558 = vshll.u32 %v3464, 16
  %v3560 = vor.u32 %v3557, %v3558
  %v3562 = vshrl.u32 %v3465, 16
  %v3564 = vrot.slane %v3562, 7
  %v3565 = vshll.u32 %v3465, 16
  %v3567 = vor.u32 %v3564, %v3565
  %v3569 = vshrl.u32 %v3466, 16
  %v3571 = vrot.slane %v3569, 7
  %v3572 = vshll.u32 %v3466, 16
  %v3574 = vor.u32 %v3571, %v3572
  %v3576 = vshrl.u32 %v3467, 16
  %v3578 = vrot.slane %v3576, 7
  %v3579 = vshll.u32 %v3467, 16
  %v3581 = vor.u32 %v3578, %v3579
  %v3583 = vshrl.u32 %v3468, 16
  %v3585 = vrot.slane %v3583, 7
  %v3586 = vshll.u32 %v3468, 16
  %v3588 = vor.u32 %v3585, %v3586
  %v3590 = vshrl.u32 %v3469, 16
  %v3592 = vrot.slane %v3590, 7
  %v3593 = vshll.u32 %v3469, 16
  %v3595 = vor.u32 %v3592, %v3593
  %v3597 = vshrl.u32 %v3470, 16
  %v3599 = vrot.slane %v3597, 7
  %v3600 = vshll.u32 %v3470, 16
  %v3602 = vor.u32 %v3599, %v3600
  %v3604 = vshrl.u32 %v3471, 16
  %v3606 = vrot.slane %v3604, 7
  %v3607 = vshll.u32 %v3471, 16
  %v3609 = vor.u32 %v3606, %v3607
  %v3611 = vshrl.u32 %v3472, 16
  %v3613 = vrot.slane %v3611, 7
  %v3614 = vshll.u32 %v3472, 16
  %v3616 = vor.u32 %v3613, %v3614
  %v3618 = vshrl.u32 %v3473, 16
  %v3620 = vrot.slane %v3618, 7
  %v3621 = vshll.u32 %v3473, 16
  %v3623 = vor.u32 %v3620, %v3621
  %v3625 = vshrl.u32 %v3474, 16
  %v3627 = vrot.slane %v3625, 7
  %v3628 = vshll.u32 %v3474, 16
  %v3630 = vor.u32 %v3627, %v3628
  %v3632 = vshrl.u32 %v3475, 16
  %v3634 = vrot.slane %v3632, 7
  %v3635 = vshll.u32 %v3475, 16
  %v3637 = vor.u32 %v3634, %v3635
  %v3639 = vshrl.u32 %v3476, 16
  %v3641 = vrot.slane %v3639, 7
  %v3642 = vshll.u32 %v3476, 16
  %v3644 = vor.u32 %v3641, %v3642
  %v3646 = vshrl.u32 %v3477, 16
  %v3648 = vrot.slane %v3646, 7
  %v3649 = vshll.u32 %v3477, 16
  %v3651 = vor.u32 %v3648, %v3649
  %v3653 = vshrl.u32 %v3478, 16
  %v3655 = vrot.slane %v3653, 7
  %v3656 = vshll.u32 %v3478, 16
  %v3658 = vor.u32 %v3655, %v3656
  %v3660 = vshrl.u32 %v3479, 16
  %v3662 = vrot.slane %v3660, 7
  %v3663 = vshll.u32 %v3479, 16
  %v3665 = vor.u32 %v3662, %v3663
  %v3667 = vshrl.u32 %v3480, 16
  %v3669 = vrot.slane %v3667, 7
  %v3670 = vshll.u32 %v3480, 16
  %v3672 = vor.u32 %v3669, %v3670
  %v3674 = vshrl.u32 %v3481, 16
  %v3676 = vrot.slane %v3674, 7
  %v3677 = vshll.u32 %v3481, 16
  %v3679 = vor.u32 %v3676, %v3677
  %v3681 = vshrl.u32 %v3482, 16
  %v3683 = vrot.slane %v3681, 7
  %v3684 = vshll.u32 %v3482, 16
  %v3686 = vor.u32 %v3683, %v3684
  %v3688 = vshrl.u32 %v3483, 16
  %v3690 = vrot.slane %v3688, 7
  %v3691 = vshll.u32 %v3483, 16
  %v3693 = vor.u32 %v3690, %v3691
  %3694 = vrot.lane.b32.xlu0 %v3490, 24
  %v3695 = vpop.permute.xlu0 %3694
  %3696 = vrot.lane.b32.xlu0 %v3497, 24
  %v3697 = vpop.permute.xlu0 %3696
  %3698 = vrot.lane.b32.xlu0 %v3504, 24
  %v3699 = vpop.permute.xlu0 %3698
  %3700 = vrot.lane.b32.xlu0 %v3511, 24
  %v3701 = vpop.permute.xlu0 %3700
  %3702 = vrot.lane.b32.xlu0 %v3518, 24
  %v3703 = vpop.permute.xlu0 %3702
  %3704 = vrot.lane.b32.xlu0 %v3525, 24
  %v3705 = vpop.permute.xlu0 %3704
  %3706 = vrot.lane.b32.xlu0 %v3532, 24
  %v3707 = vpop.permute.xlu0 %3706
  %3708 = vrot.lane.b32.xlu0 %v3539, 24
  %v3709 = vpop.permute.xlu0 %3708
  %3710 = vrot.lane.b32.xlu0 %v3546, 24
  %v3711 = vpop.permute.xlu0 %3710
  %3712 = vrot.lane.b32.xlu0 %v3553, 24
  %v3713 = vpop.permute.xlu0 %3712
  %3714 = vrot.lane.b32.xlu0 %v3560, 24
  %v3715 = vpop.permute.xlu0 %3714
  %3716 = vrot.lane.b32.xlu0 %v3567, 24
  %v3717 = vpop.permute.xlu0 %3716
  %3718 = vrot.lane.b32.xlu0 %v3574, 24
  %v3719 = vpop.permute.xlu0 %3718
  %3720 = vrot.lane.b32.xlu0 %v3581, 24
  %v3721 = vpop.permute.xlu0 %3720
  %3722 = vrot.lane.b32.xlu0 %v3588, 24
  %v3723 = vpop.permute.xlu0 %3722
  %3724 = vrot.lane.b32.xlu0 %v3595, 24
  %v3725 = vpop.permute.xlu0 %3724
  %3726 = vrot.lane.b32.xlu0 %v3602, 24
  %v3727 = vpop.permute.xlu0 %3726
  %3728 = vrot.lane.b32.xlu0 %v3609, 24
  %v3729 = vpop.permute.xlu0 %3728
  %3730 = vrot.lane.b32.xlu0 %v3616, 24
  %v3731 = vpop.permute.xlu0 %3730
  %3732 = vrot.lane.b32.xlu0 %v3623, 24
  %v3733 = vpop.permute.xlu0 %3732
  %3734 = vrot.lane.b32.xlu0 %v3630, 24
  %v3735 = vpop.permute.xlu0 %3734
  %3736 = vrot.lane.b32.xlu0 %v3637, 24
  %v3737 = vpop.permute.xlu0 %3736
  %3738 = vrot.lane.b32.xlu0 %v3644, 24
  %v3739 = vpop.permute.xlu0 %3738
  %3740 = vrot.lane.b32.xlu0 %v3651, 24
  %v3741 = vpop.permute.xlu0 %3740
  %3742 = vrot.lane.b32.xlu0 %v3658, 24
  %v3743 = vpop.permute.xlu0 %3742
  %3744 = vrot.lane.b32.xlu0 %v3665, 24
  %v3745 = vpop.permute.xlu0 %3744
  %3746 = vrot.lane.b32.xlu0 %v3672, 24
  %v3747 = vpop.permute.xlu0 %3746
  %3748 = vrot.lane.b32.xlu0 %v3679, 24
  %v3749 = vpop.permute.xlu0 %3748
  %3750 = vrot.lane.b32.xlu0 %v3686, 24
  %v3751 = vpop.permute.xlu0 %3750
  %3752 = vrot.lane.b32.xlu0 %v3693, 24
  %v3753 = vpop.permute.xlu0 %3752
  %vm3784 = vcmask 228544
  %vm3785 = vmand %vm3784, %vm610
  %v3786 = vld [vmem:[#allocation2] sm:$0xff]
  %v3787 = vsel %vm3785, %v3695, %v3786
  %3788 = vst [vmem:[#allocation2] sm:$0xff] %v3787
  %v3789 = vld [vmem:[#allocation2 + $0x8] sm:$0xff]
  %v3790 = vsel %vm3785, %v3697, %v3789
  %3791 = vst [vmem:[#allocation2 + $0x8] sm:$0xff] %v3790
  %v3792 = vld [vmem:[#allocation2 + $0x10] sm:$0xff]
  %v3793 = vsel %vm3785, %v3699, %v3792
  %3794 = vst [vmem:[#allocation2 + $0x10] sm:$0xff] %v3793
  %v3795 = vld [vmem:[#allocation2 + $0x18] sm:$0xff]
  %v3796 = vsel %vm3785, %v3701, %v3795
  %3797 = vst [vmem:[#allocation2 + $0x18] sm:$0xff] %v3796
  %v3798 = vld [vmem:[#allocation2 + $0x20] sm:$0xff]
  %v3799 = vsel %vm3785, %v3703, %v3798
  %3800 = vst [vmem:[#allocation2 + $0x20] sm:$0xff] %v3799
  %v3801 = vld [vmem:[#allocation2 + $0x28] sm:$0xff]
  %v3802 = vsel %vm3785, %v3705, %v3801
  %3803 = vst [vmem:[#allocation2 + $0x28] sm:$0xff] %v3802
  %v3804 = vld [vmem:[#allocation2 + $0x30] sm:$0xff]
  %v3805 = vsel %vm3785, %v3707, %v3804
  %3806 = vst [vmem:[#allocation2 + $0x30] sm:$0xff] %v3805
  %v3807 = vld [vmem:[#allocation2 + $0x38] sm:$0xff]
  %v3808 = vsel %vm3785, %v3709, %v3807
  %3809 = vst [vmem:[#allocation2 + $0x38] sm:$0xff] %v3808
  %v3810 = vld [vmem:[#allocation2 + $0x40] sm:$0xff]
  %v3811 = vsel %vm3785, %v3711, %v3810
  %3812 = vst [vmem:[#allocation2 + $0x40] sm:$0xff] %v3811
  %v3813 = vld [vmem:[#allocation2 + $0x48] sm:$0xff]
  %v3814 = vsel %vm3785, %v3713, %v3813
  %3815 = vst [vmem:[#allocation2 + $0x48] sm:$0xff] %v3814
  %v3816 = vld [vmem:[#allocation2 + $0x50] sm:$0xff]
  %v3817 = vsel %vm3785, %v3715, %v3816
  %3818 = vst [vmem:[#allocation2 + $0x50] sm:$0xff] %v3817
  %v3819 = vld [vmem:[#allocation2 + $0x58] sm:$0xff]
  %v3820 = vsel %vm3785, %v3717, %v3819
  %3821 = vst [vmem:[#allocation2 + $0x58] sm:$0xff] %v3820
  %v3822 = vld [vmem:[#allocation2 + $0x60] sm:$0xff]
  %v3823 = vsel %vm3785, %v3719, %v3822
  %3824 = vst [vmem:[#allocation2 + $0x60] sm:$0xff] %v3823
  %v3825 = vld [vmem:[#allocation2 + $0x68] sm:$0xff]
  %v3826 = vsel %vm3785, %v3721, %v3825
  %3827 = vst [vmem:[#allocation2 + $0x68] sm:$0xff] %v3826
  %v3828 = vld [vmem:[#allocation2 + $0x70] sm:$0xff]
  %v3829 = vsel %vm3785, %v3723, %v3828
  %3830 = vst [vmem:[#allocation2 + $0x70] sm:$0xff] %v3829
  %v3831 = vld [vmem:[#allocation2 + $0x80] sm:$0xff]
  %v3832 = vsel %vm3785, %v3725, %v3831
  %3833 = vst [vmem:[#allocation2 + $0x80] sm:$0xff] %v3832
  %v3834 = vld [vmem:[#allocation2 + $0x88] sm:$0xff]
  %v3835 = vsel %vm3785, %v3727, %v3834
  %3836 = vst [vmem:[#allocation2 + $0x88] sm:$0xff] %v3835
  %v3837 = vld [vmem:[#allocation2 + $0x90] sm:$0xff]
  %v3838 = vsel %vm3785, %v3729, %v3837
  %3839 = vst [vmem:[#allocation2 + $0x90] sm:$0xff] %v3838
  %v3840 = vld [vmem:[#allocation2 + $0x98] sm:$0xff]
  %v3841 = vsel %vm3785, %v3731, %v3840
  %3842 = vst [vmem:[#allocation2 + $0x98] sm:$0xff] %v3841
  %v3843 = vld [vmem:[#allocation2 + $0xa0] sm:$0xff]
  %v3844 = vsel %vm3785, %v3733, %v3843
  %3845 = vst [vmem:[#allocation2 + $0xa0] sm:$0xff] %v3844
  %v3846 = vld [vmem:[#allocation2 + $0xa8] sm:$0xff]
  %v3847 = vsel %vm3785, %v3735, %v3846
  %3848 = vst [vmem:[#allocation2 + $0xa8] sm:$0xff] %v3847
  %v3849 = vld [vmem:[#allocation2 + $0xb0] sm:$0xff]
  %v3850 = vsel %vm3785, %v3737, %v3849
  %3851 = vst [vmem:[#allocation2 + $0xb0] sm:$0xff] %v3850
  %v3852 = vld [vmem:[#allocation2 + $0xb8] sm:$0xff]
  %v3853 = vsel %vm3785, %v3739, %v3852
  %3854 = vst [vmem:[#allocation2 + $0xb8] sm:$0xff] %v3853
  %v3855 = vld [vmem:[#allocation2 + $0xc0] sm:$0xff]
  %v3856 = vsel %vm3785, %v3741, %v3855
  %3857 = vst [vmem:[#allocation2 + $0xc0] sm:$0xff] %v3856
  %v3858 = vld [vmem:[#allocation2 + $0xc8] sm:$0xff]
  %v3859 = vsel %vm3785, %v3743, %v3858
  %3860 = vst [vmem:[#allocation2 + $0xc8] sm:$0xff] %v3859
  %v3861 = vld [vmem:[#allocation2 + $0xd0] sm:$0xff]
  %v3862 = vsel %vm3785, %v3745, %v3861
  %3863 = vst [vmem:[#allocation2 + $0xd0] sm:$0xff] %v3862
  %v3864 = vld [vmem:[#allocation2 + $0xd8] sm:$0xff]
  %v3865 = vsel %vm3785, %v3747, %v3864
  %3866 = vst [vmem:[#allocation2 + $0xd8] sm:$0xff] %v3865
  %v3867 = vld [vmem:[#allocation2 + $0xe0] sm:$0xff]
  %v3868 = vsel %vm3785, %v3749, %v3867
  %3869 = vst [vmem:[#allocation2 + $0xe0] sm:$0xff] %v3868
  %v3870 = vld [vmem:[#allocation2 + $0xe8] sm:$0xff]
  %v3871 = vsel %vm3785, %v3751, %v3870
  %3872 = vst [vmem:[#allocation2 + $0xe8] sm:$0xff] %v3871
  %v3873 = vld [vmem:[#allocation2 + $0xf0] sm:$0xff]
  %v3874 = vsel %vm3785, %v3753, %v3873
  %3875 = vst [vmem:[#allocation2 + $0xf0] sm:$0xff] %v3874
  %v3876 = vld [vmem:[%s3273] sm:$0xf]
  %v3877 = vld [vmem:[%s3273 + $0x4] sm:$0xf]
  %v3878 = vld [vmem:[%s3273 + $0x8] sm:$0xf]
  %v3879 = vld [vmem:[%s3273 + $0xc] sm:$0xf]
  %v3880 = vld [vmem:[%s3273 + $0x10] sm:$0xf]
  %v3881 = vld [vmem:[%s3273 + $0x14] sm:$0xf]
  %v3882 = vld [vmem:[%s3273 + $0x18] sm:$0xf]
  %v3883 = vld [vmem:[%s3273 + $0x1c] sm:$0xf]
  %v3884 = vld [vmem:[%s3273 + $0x20] sm:$0xf]
  %v3885 = vld [vmem:[%s3273 + $0x24] sm:$0xf]
  %v3886 = vld [vmem:[%s3273 + $0x28] sm:$0xf]
  %v3887 = vld [vmem:[%s3273 + $0x2c] sm:$0xf]
  %v3888 = vld [vmem:[%s3273 + $0x30] sm:$0xf]
  %v3889 = vld [vmem:[%s3273 + $0x34] sm:$0xf]
  %v3890 = vld [vmem:[%s3273 + $0x38] sm:$0xf]
  %v3891 = vld [vmem:[%s3273 + $0x3c] sm:$0xf]
  %v3892 = vld [vmem:[%s3273 + $0x40] sm:$0xf]
  %v3893 = vld [vmem:[%s3273 + $0x44] sm:$0xf]
  %v3894 = vld [vmem:[%s3273 + $0x48] sm:$0xf]
  %v3895 = vld [vmem:[%s3273 + $0x4c] sm:$0xf]
  %v3896 = vld [vmem:[%s3273 + $0x50] sm:$0xf]
  %v3897 = vld [vmem:[%s3273 + $0x54] sm:$0xf]
  %v3898 = vld [vmem:[%s3273 + $0x58] sm:$0xf]
  %v3899 = vld [vmem:[%s3273 + $0x5c] sm:$0xf]
  %v3900 = vld [vmem:[%s3273 + $0x60] sm:$0xf]
  %v3901 = vld [vmem:[%s3273 + $0x64] sm:$0xf]
  %v3902 = vld [vmem:[%s3273 + $0x68] sm:$0xf]
  %v3903 = vld [vmem:[%s3273 + $0x6c] sm:$0xf]
  %v3904 = vld [vmem:[%s3273 + $0x70] sm:$0xf]
  %v3905 = vld [vmem:[%s3273 + $0x74] sm:$0xf]
  %v3906 = vld [vmem:[%s3273 + $0x80] sm:$0xf]
  %v3907 = vld [vmem:[%s3273 + $0x84] sm:$0xf]
  %v3908 = vld [vmem:[%s3273 + $0x88] sm:$0xf]
  %v3909 = vld [vmem:[%s3273 + $0x8c] sm:$0xf]
  %v3910 = vld [vmem:[%s3273 + $0x90] sm:$0xf]
  %v3911 = vld [vmem:[%s3273 + $0x94] sm:$0xf]
  %v3912 = vld [vmem:[%s3273 + $0x98] sm:$0xf]
  %v3913 = vld [vmem:[%s3273 + $0x9c] sm:$0xf]
  %v3914 = vld [vmem:[%s3273 + $0xa0] sm:$0xf]
  %v3915 = vld [vmem:[%s3273 + $0xa4] sm:$0xf]
  %v3916 = vld [vmem:[%s3273 + $0xa8] sm:$0xf]
  %v3917 = vld [vmem:[%s3273 + $0xac] sm:$0xf]
  %v3918 = vld [vmem:[%s3273 + $0xb0] sm:$0xf]
  %v3919 = vld [vmem:[%s3273 + $0xb4] sm:$0xf]
  %v3920 = vld [vmem:[%s3273 + $0xb8] sm:$0xf]
  %v3921 = vld [vmem:[%s3273 + $0xbc] sm:$0xf]
  %v3922 = vld [vmem:[%s3273 + $0xc0] sm:$0xf]
  %v3923 = vld [vmem:[%s3273 + $0xc4] sm:$0xf]
  %v3924 = vld [vmem:[%s3273 + $0xc8] sm:$0xf]
  %v3925 = vld [vmem:[%s3273 + $0xcc] sm:$0xf]
  %v3926 = vld [vmem:[%s3273 + $0xd0] sm:$0xf]
  %v3927 = vld [vmem:[%s3273 + $0xd4] sm:$0xf]
  %v3928 = vld [vmem:[%s3273 + $0xd8] sm:$0xf]
  %v3929 = vld [vmem:[%s3273 + $0xdc] sm:$0xf]
  %v3930 = vld [vmem:[%s3273 + $0xe0] sm:$0xf]
  %v3931 = vld [vmem:[%s3273 + $0xe4] sm:$0xf]
  %v3932 = vld [vmem:[%s3273 + $0xe8] sm:$0xf]
  %v3933 = vld [vmem:[%s3273 + $0xec] sm:$0xf]
  %v3934 = vld [vmem:[%s3273 + $0xf0] sm:$0xf]
  %v3935 = vld [vmem:[%s3273 + $0xf4] sm:$0xf]
  %v3996 = vunpack.c.l.b16 %v3876
  %v3997 = vunpack.c.l.b16 %v3877
  %v3998 = vunpack.c.l.b16 %v3878
  %v3999 = vunpack.c.l.b16 %v3879
  %v4000 = vunpack.c.l.b16 %v3880
  %v4001 = vunpack.c.l.b16 %v3881
  %v4002 = vunpack.c.l.b16 %v3882
  %v4003 = vunpack.c.l.b16 %v3883
  %v4004 = vunpack.c.l.b16 %v3884
  %v4005 = vunpack.c.l.b16 %v3885
  %v4006 = vunpack.c.l.b16 %v3886
  %v4007 = vunpack.c.l.b16 %v3887
  %v4008 = vunpack.c.l.b16 %v3888
  %v4009 = vunpack.c.l.b16 %v3889
  %v4010 = vunpack.c.l.b16 %v3890
  %v4011 = vunpack.c.l.b16 %v3891
  %v4012 = vunpack.c.l.b16 %v3892
  %v4013 = vunpack.c.l.b16 %v3893
  %v4014 = vunpack.c.l.b16 %v3894
  %v4015 = vunpack.c.l.b16 %v3895
  %v4016 = vunpack.c.l.b16 %v3896
  %v4017 = vunpack.c.l.b16 %v3897
  %v4018 = vunpack.c.l.b16 %v3898
  %v4019 = vunpack.c.l.b16 %v3899
  %v4020 = vunpack.c.l.b16 %v3900
  %v4021 = vunpack.c.l.b16 %v3901
  %v4022 = vunpack.c.l.b16 %v3902
  %v4023 = vunpack.c.l.b16 %v3903
  %v4024 = vunpack.c.l.b16 %v3904
  %v4025 = vunpack.c.l.b16 %v3905
  %v4026 = vunpack.c.l.b16 %v3906
  %v4027 = vunpack.c.l.b16 %v3907
  %v4028 = vunpack.c.l.b16 %v3908
  %v4029 = vunpack.c.l.b16 %v3909
  %v4030 = vunpack.c.l.b16 %v3910
  %v4031 = vunpack.c.l.b16 %v3911
  %v4032 = vunpack.c.l.b16 %v3912
  %v4033 = vunpack.c.l.b16 %v3913
  %v4034 = vunpack.c.l.b16 %v3914
  %v4035 = vunpack.c.l.b16 %v3915
  %v4036 = vunpack.c.l.b16 %v3916
  %v4037 = vunpack.c.l.b16 %v3917
  %v4038 = vunpack.c.l.b16 %v3918
  %v4039 = vunpack.c.l.b16 %v3919
  %v4040 = vunpack.c.l.b16 %v3920
  %v4041 = vunpack.c.l.b16 %v3921
  %v4042 = vunpack.c.l.b16 %v3922
  %v4043 = vunpack.c.l.b16 %v3923
  %v4044 = vunpack.c.l.b16 %v3924
  %v4045 = vunpack.c.l.b16 %v3925
  %v4046 = vunpack.c.l.b16 %v3926
  %v4047 = vunpack.c.l.b16 %v3927
  %v4048 = vunpack.c.l.b16 %v3928
  %v4049 = vunpack.c.l.b16 %v3929
  %v4050 = vunpack.c.l.b16 %v3930
  %v4051 = vunpack.c.l.b16 %v3931
  %v4052 = vunpack.c.l.b16 %v3932
  %v4053 = vunpack.c.l.b16 %v3933
  %v4054 = vunpack.c.l.b16 %v3934
  %v4055 = vunpack.c.l.b16 %v3935
  %v4056 = vpack.c.b16 %v3997, %v3996
  %v4057 = vpack.c.b16 %v3999, %v3998
  %v4058 = vpack.c.b16 %v4001, %v4000
  %v4059 = vpack.c.b16 %v4003, %v4002
  %v4060 = vpack.c.b16 %v4005, %v4004
  %v4061 = vpack.c.b16 %v4007, %v4006
  %v4062 = vpack.c.b16 %v4009, %v4008
  %v4063 = vpack.c.b16 %v4011, %v4010
  %v4064 = vpack.c.b16 %v4013, %v4012
  %v4065 = vpack.c.b16 %v4015, %v4014
  %v4066 = vpack.c.b16 %v4017, %v4016
  %v4067 = vpack.c.b16 %v4019, %v4018
  %v4068 = vpack.c.b16 %v4021, %v4020
  %v4069 = vpack.c.b16 %v4023, %v4022
  %v4070 = vpack.c.b16 %v4025, %v4024
  %v4071 = vpack.c.b16 %v4027, %v4026
  %v4072 = vpack.c.b16 %v4029, %v4028
  %v4073 = vpack.c.b16 %v4031, %v4030
  %v4074 = vpack.c.b16 %v4033, %v4032
  %v4075 = vpack.c.b16 %v4035, %v4034
  %v4076 = vpack.c.b16 %v4037, %v4036
  %v4077 = vpack.c.b16 %v4039, %v4038
  %v4078 = vpack.c.b16 %v4041, %v4040
  %v4079 = vpack.c.b16 %v4043, %v4042
  %v4080 = vpack.c.b16 %v4045, %v4044
  %v4081 = vpack.c.b16 %v4047, %v4046
  %v4082 = vpack.c.b16 %v4049, %v4048
  %v4083 = vpack.c.b16 %v4051, %v4050
  %v4084 = vpack.c.b16 %v4053, %v4052
  %v4085 = vpack.c.b16 %v4055, %v4054
  %4086 = vrot.lane.b32.xlu0 %v4056, 28
  %v4087 = vpop.permute.xlu0 %4086
  %4088 = vrot.lane.b32.xlu0 %v4057, 28
  %v4089 = vpop.permute.xlu0 %4088
  %4090 = vrot.lane.b32.xlu0 %v4058, 28
  %v4091 = vpop.permute.xlu0 %4090
  %4092 = vrot.lane.b32.xlu0 %v4059, 28
  %v4093 = vpop.permute.xlu0 %4092
  %4094 = vrot.lane.b32.xlu0 %v4060, 28
  %v4095 = vpop.permute.xlu0 %4094
  %4096 = vrot.lane.b32.xlu0 %v4061, 28
  %v4097 = vpop.permute.xlu0 %4096
  %4098 = vrot.lane.b32.xlu0 %v4062, 28
  %v4099 = vpop.permute.xlu0 %4098
  %4100 = vrot.lane.b32.xlu0 %v4063, 28
  %v4101 = vpop.permute.xlu0 %4100
  %4102 = vrot.lane.b32.xlu0 %v4064, 28
  %v4103 = vpop.permute.xlu0 %4102
  %4104 = vrot.lane.b32.xlu0 %v4065, 28
  %v4105 = vpop.permute.xlu0 %4104
  %4106 = vrot.lane.b32.xlu0 %v4066, 28
  %v4107 = vpop.permute.xlu0 %4106
  %4108 = vrot.lane.b32.xlu0 %v4067, 28
  %v4109 = vpop.permute.xlu0 %4108
  %4110 = vrot.lane.b32.xlu0 %v4068, 28
  %v4111 = vpop.permute.xlu0 %4110
  %4112 = vrot.lane.b32.xlu0 %v4069, 28
  %v4113 = vpop.permute.xlu0 %4112
  %4114 = vrot.lane.b32.xlu0 %v4070, 28
  %v4115 = vpop.permute.xlu0 %4114
  %4116 = vrot.lane.b32.xlu0 %v4071, 28
  %v4117 = vpop.permute.xlu0 %4116
  %4118 = vrot.lane.b32.xlu0 %v4072, 28
  %v4119 = vpop.permute.xlu0 %4118
  %4120 = vrot.lane.b32.xlu0 %v4073, 28
  %v4121 = vpop.permute.xlu0 %4120
  %4122 = vrot.lane.b32.xlu0 %v4074, 28
  %v4123 = vpop.permute.xlu0 %4122
  %4124 = vrot.lane.b32.xlu0 %v4075, 28
  %v4125 = vpop.permute.xlu0 %4124
  %4126 = vrot.lane.b32.xlu0 %v4076, 28
  %v4127 = vpop.permute.xlu0 %4126
  %4128 = vrot.lane.b32.xlu0 %v4077, 28
  %v4129 = vpop.permute.xlu0 %4128
  %4130 = vrot.lane.b32.xlu0 %v4078, 28
  %v4131 = vpop.permute.xlu0 %4130
  %4132 = vrot.lane.b32.xlu0 %v4079, 28
  %v4133 = vpop.permute.xlu0 %4132
  %4134 = vrot.lane.b32.xlu0 %v4080, 28
  %v4135 = vpop.permute.xlu0 %4134
  %4136 = vrot.lane.b32.xlu0 %v4081, 28
  %v4137 = vpop.permute.xlu0 %4136
  %4138 = vrot.lane.b32.xlu0 %v4082, 28
  %v4139 = vpop.permute.xlu0 %4138
  %4140 = vrot.lane.b32.xlu0 %v4083, 28
  %v4141 = vpop.permute.xlu0 %4140
  %4142 = vrot.lane.b32.xlu0 %v4084, 28
  %v4143 = vpop.permute.xlu0 %4142
  %4144 = vrot.lane.b32.xlu0 %v4085, 28
  %v4145 = vpop.permute.xlu0 %4144
  %vm4176 = vcmask 261344
  %4177 = vst.msk [vmem:[#allocation2] sm:$0xff] %vm4176, %v4087
  %4178 = vst.msk [vmem:[#allocation2 + $0x8] sm:$0xff] %vm4176, %v4089
  %4179 = vst.msk [vmem:[#allocation2 + $0x10] sm:$0xff] %vm4176, %v4091
  %4180 = vst.msk [vmem:[#allocation2 + $0x18] sm:$0xff] %vm4176, %v4093
  %4181 = vst.msk [vmem:[#allocation2 + $0x20] sm:$0xff] %vm4176, %v4095
  %4182 = vst.msk [vmem:[#allocation2 + $0x28] sm:$0xff] %vm4176, %v4097
  %4183 = vst.msk [vmem:[#allocation2 + $0x30] sm:$0xff] %vm4176, %v4099
  %4184 = vst.msk [vmem:[#allocation2 + $0x38] sm:$0xff] %vm4176, %v4101
  %4185 = vst.msk [vmem:[#allocation2 + $0x40] sm:$0xff] %vm4176, %v4103
  %4186 = vst.msk [vmem:[#allocation2 + $0x48] sm:$0xff] %vm4176, %v4105
  %4187 = vst.msk [vmem:[#allocation2 + $0x50] sm:$0xff] %vm4176, %v4107
  %4188 = vst.msk [vmem:[#allocation2 + $0x58] sm:$0xff] %vm4176, %v4109
  %4189 = vst.msk [vmem:[#allocation2 + $0x60] sm:$0xff] %vm4176, %v4111
  %4190 = vst.msk [vmem:[#allocation2 + $0x68] sm:$0xff] %vm4176, %v4113
  %4191 = vst.msk [vmem:[#allocation2 + $0x70] sm:$0xff] %vm4176, %v4115
  %4192 = vst.msk [vmem:[#allocation2 + $0x80] sm:$0xff] %vm4176, %v4117
  %4193 = vst.msk [vmem:[#allocation2 + $0x88] sm:$0xff] %vm4176, %v4119
  %4194 = vst.msk [vmem:[#allocation2 + $0x90] sm:$0xff] %vm4176, %v4121
  %4195 = vst.msk [vmem:[#allocation2 + $0x98] sm:$0xff] %vm4176, %v4123
  %4196 = vst.msk [vmem:[#allocation2 + $0xa0] sm:$0xff] %vm4176, %v4125
  %4197 = vst.msk [vmem:[#allocation2 + $0xa8] sm:$0xff] %vm4176, %v4127
  %4198 = vst.msk [vmem:[#allocation2 + $0xb0] sm:$0xff] %vm4176, %v4129
  %4199 = vst.msk [vmem:[#allocation2 + $0xb8] sm:$0xff] %vm4176, %v4131
  %4200 = vst.msk [vmem:[#allocation2 + $0xc0] sm:$0xff] %vm4176, %v4133
  %4201 = vst.msk [vmem:[#allocation2 + $0xc8] sm:$0xff] %vm4176, %v4135
  %4202 = vst.msk [vmem:[#allocation2 + $0xd0] sm:$0xff] %vm4176, %v4137
  %4203 = vst.msk [vmem:[#allocation2 + $0xd8] sm:$0xff] %vm4176, %v4139
  %4204 = vst.msk [vmem:[#allocation2 + $0xe0] sm:$0xff] %vm4176, %v4141
  %4205 = vst.msk [vmem:[#allocation2 + $0xe8] sm:$0xff] %vm4176, %v4143
  %4206 = vst.msk [vmem:[#allocation2 + $0xf0] sm:$0xff] %vm4176, %v4145
  %v4207 = vld [vmem:[%s3273] sm:$0xf]
  %v4208 = vld [vmem:[%s3273 + $0x4] sm:$0xf]
  %v4209 = vld [vmem:[%s3273 + $0x8] sm:$0xf]
  %v4210 = vld [vmem:[%s3273 + $0xc] sm:$0xf]
  %v4211 = vld [vmem:[%s3273 + $0x10] sm:$0xf]
  %v4212 = vld [vmem:[%s3273 + $0x14] sm:$0xf]
  %v4213 = vld [vmem:[%s3273 + $0x18] sm:$0xf]
  %v4214 = vld [vmem:[%s3273 + $0x1c] sm:$0xf]
  %v4215 = vld [vmem:[%s3273 + $0x20] sm:$0xf]
  %v4216 = vld [vmem:[%s3273 + $0x24] sm:$0xf]
  %v4217 = vld [vmem:[%s3273 + $0x28] sm:$0xf]
  %v4218 = vld [vmem:[%s3273 + $0x2c] sm:$0xf]
  %v4219 = vld [vmem:[%s3273 + $0x30] sm:$0xf]
  %v4220 = vld [vmem:[%s3273 + $0x34] sm:$0xf]
  %v4221 = vld [vmem:[%s3273 + $0x38] sm:$0xf]
  %v4222 = vld [vmem:[%s3273 + $0x3c] sm:$0xf]
  %v4223 = vld [vmem:[%s3273 + $0x40] sm:$0xf]
  %v4224 = vld [vmem:[%s3273 + $0x44] sm:$0xf]
  %v4225 = vld [vmem:[%s3273 + $0x48] sm:$0xf]
  %v4226 = vld [vmem:[%s3273 + $0x4c] sm:$0xf]
  %v4227 = vld [vmem:[%s3273 + $0x50] sm:$0xf]
  %v4228 = vld [vmem:[%s3273 + $0x54] sm:$0xf]
  %v4229 = vld [vmem:[%s3273 + $0x58] sm:$0xf]
  %v4230 = vld [vmem:[%s3273 + $0x5c] sm:$0xf]
  %v4231 = vld [vmem:[%s3273 + $0x60] sm:$0xf]
  %v4232 = vld [vmem:[%s3273 + $0x64] sm:$0xf]
  %v4233 = vld [vmem:[%s3273 + $0x68] sm:$0xf]
  %v4234 = vld [vmem:[%s3273 + $0x6c] sm:$0xf]
  %v4235 = vld [vmem:[%s3273 + $0x70] sm:$0xf]
  %v4236 = vld [vmem:[%s3273 + $0x74] sm:$0xf]
  %v4237 = vld [vmem:[%s3273 + $0x80] sm:$0xf]
  %v4238 = vld [vmem:[%s3273 + $0x84] sm:$0xf]
  %v4239 = vld [vmem:[%s3273 + $0x88] sm:$0xf]
  %v4240 = vld [vmem:[%s3273 + $0x8c] sm:$0xf]
  %v4241 = vld [vmem:[%s3273 + $0x90] sm:$0xf]
  %v4242 = vld [vmem:[%s3273 + $0x94] sm:$0xf]
  %v4243 = vld [vmem:[%s3273 + $0x98] sm:$0xf]
  %v4244 = vld [vmem:[%s3273 + $0x9c] sm:$0xf]
  %v4245 = vld [vmem:[%s3273 + $0xa0] sm:$0xf]
  %v4246 = vld [vmem:[%s3273 + $0xa4] sm:$0xf]
  %v4247 = vld [vmem:[%s3273 + $0xa8] sm:$0xf]
  %v4248 = vld [vmem:[%s3273 + $0xac] sm:$0xf]
  %v4249 = vld [vmem:[%s3273 + $0xb0] sm:$0xf]
  %v4250 = vld [vmem:[%s3273 + $0xb4] sm:$0xf]
  %v4251 = vld [vmem:[%s3273 + $0xb8] sm:$0xf]
  %v4252 = vld [vmem:[%s3273 + $0xbc] sm:$0xf]
  %v4253 = vld [vmem:[%s3273 + $0xc0] sm:$0xf]
  %v4254 = vld [vmem:[%s3273 + $0xc4] sm:$0xf]
  %v4255 = vld [vmem:[%s3273 + $0xc8] sm:$0xf]
  %v4256 = vld [vmem:[%s3273 + $0xcc] sm:$0xf]
  %v4257 = vld [vmem:[%s3273 + $0xd0] sm:$0xf]
  %v4258 = vld [vmem:[%s3273 + $0xd4] sm:$0xf]
  %v4259 = vld [vmem:[%s3273 + $0xd8] sm:$0xf]
  %v4260 = vld [vmem:[%s3273 + $0xdc] sm:$0xf]
  %v4261 = vld [vmem:[%s3273 + $0xe0] sm:$0xf]
  %v4262 = vld [vmem:[%s3273 + $0xe4] sm:$0xf]
  %v4263 = vld [vmem:[%s3273 + $0xe8] sm:$0xf]
  %v4264 = vld [vmem:[%s3273 + $0xec] sm:$0xf]
  %v4265 = vld [vmem:[%s3273 + $0xf0] sm:$0xf]
  %v4266 = vld [vmem:[%s3273 + $0xf4] sm:$0xf]
  %v4327 = vunpack.c.l.b16 %v4207
  %v4328 = vunpack.c.l.b16 %v4208
  %v4329 = vunpack.c.l.b16 %v4209
  %v4330 = vunpack.c.l.b16 %v4210
  %v4331 = vunpack.c.l.b16 %v4211
  %v4332 = vunpack.c.l.b16 %v4212
  %v4333 = vunpack.c.l.b16 %v4213
  %v4334 = vunpack.c.l.b16 %v4214
  %v4335 = vunpack.c.l.b16 %v4215
  %v4336 = vunpack.c.l.b16 %v4216
  %v4337 = vunpack.c.l.b16 %v4217
  %v4338 = vunpack.c.l.b16 %v4218
  %v4339 = vunpack.c.l.b16 %v4219
  %v4340 = vunpack.c.l.b16 %v4220
  %v4341 = vunpack.c.l.b16 %v4221
  %v4342 = vunpack.c.l.b16 %v4222
  %v4343 = vunpack.c.l.b16 %v4223
  %v4344 = vunpack.c.l.b16 %v4224
  %v4345 = vunpack.c.l.b16 %v4225
  %v4346 = vunpack.c.l.b16 %v4226
  %v4347 = vunpack.c.l.b16 %v4227
  %v4348 = vunpack.c.l.b16 %v4228
  %v4349 = vunpack.c.l.b16 %v4229
  %v4350 = vunpack.c.l.b16 %v4230
  %v4351 = vunpack.c.l.b16 %v4231
  %v4352 = vunpack.c.l.b16 %v4232
  %v4353 = vunpack.c.l.b16 %v4233
  %v4354 = vunpack.c.l.b16 %v4234
  %v4355 = vunpack.c.l.b16 %v4235
  %v4356 = vunpack.c.l.b16 %v4236
  %v4357 = vunpack.c.l.b16 %v4237
  %v4358 = vunpack.c.l.b16 %v4238
  %v4359 = vunpack.c.l.b16 %v4239
  %v4360 = vunpack.c.l.b16 %v4240
  %v4361 = vunpack.c.l.b16 %v4241
  %v4362 = vunpack.c.l.b16 %v4242
  %v4363 = vunpack.c.l.b16 %v4243
  %v4364 = vunpack.c.l.b16 %v4244
  %v4365 = vunpack.c.l.b16 %v4245
  %v4366 = vunpack.c.l.b16 %v4246
  %v4367 = vunpack.c.l.b16 %v4247
  %v4368 = vunpack.c.l.b16 %v4248
  %v4369 = vunpack.c.l.b16 %v4249
  %v4370 = vunpack.c.l.b16 %v4250
  %v4371 = vunpack.c.l.b16 %v4251
  %v4372 = vunpack.c.l.b16 %v4252
  %v4373 = vunpack.c.l.b16 %v4253
  %v4374 = vunpack.c.l.b16 %v4254
  %v4375 = vunpack.c.l.b16 %v4255
  %v4376 = vunpack.c.l.b16 %v4256
  %v4377 = vunpack.c.l.b16 %v4257
  %v4378 = vunpack.c.l.b16 %v4258
  %v4379 = vunpack.c.l.b16 %v4259
  %v4380 = vunpack.c.l.b16 %v4260
  %v4381 = vunpack.c.l.b16 %v4261
  %v4382 = vunpack.c.l.b16 %v4262
  %v4383 = vunpack.c.l.b16 %v4263
  %v4384 = vunpack.c.l.b16 %v4264
  %v4385 = vunpack.c.l.b16 %v4265
  %v4386 = vunpack.c.l.b16 %v4266
  %v4387 = vpack.c.b16 %v4328, %v4327
  %v4388 = vpack.c.b16 %v4330, %v4329
  %v4389 = vpack.c.b16 %v4332, %v4331
  %v4390 = vpack.c.b16 %v4334, %v4333
  %v4391 = vpack.c.b16 %v4336, %v4335
  %v4392 = vpack.c.b16 %v4338, %v4337
  %v4393 = vpack.c.b16 %v4340, %v4339
  %v4394 = vpack.c.b16 %v4342, %v4341
  %v4395 = vpack.c.b16 %v4344, %v4343
  %v4396 = vpack.c.b16 %v4346, %v4345
  %v4397 = vpack.c.b16 %v4348, %v4347
  %v4398 = vpack.c.b16 %v4350, %v4349
  %v4399 = vpack.c.b16 %v4352, %v4351
  %v4400 = vpack.c.b16 %v4354, %v4353
  %v4401 = vpack.c.b16 %v4356, %v4355
  %v4402 = vpack.c.b16 %v4358, %v4357
  %v4403 = vpack.c.b16 %v4360, %v4359
  %v4404 = vpack.c.b16 %v4362, %v4361
  %v4405 = vpack.c.b16 %v4364, %v4363
  %v4406 = vpack.c.b16 %v4366, %v4365
  %v4407 = vpack.c.b16 %v4368, %v4367
  %v4408 = vpack.c.b16 %v4370, %v4369
  %v4409 = vpack.c.b16 %v4372, %v4371
  %v4410 = vpack.c.b16 %v4374, %v4373
  %v4411 = vpack.c.b16 %v4376, %v4375
  %v4412 = vpack.c.b16 %v4378, %v4377
  %v4413 = vpack.c.b16 %v4380, %v4379
  %v4414 = vpack.c.b16 %v4382, %v4381
  %v4415 = vpack.c.b16 %v4384, %v4383
  %v4416 = vpack.c.b16 %v4386, %v4385
  %v4418 = vshrl.u32 %v4387, 16
  %v4420 = vshll.u32 %v4387, 16
  %v4422 = vrot.slane %v4420, 1
  %v4423 = vor.u32 %v4418, %v4422
  %v4425 = vshrl.u32 %v4388, 16
  %v4427 = vshll.u32 %v4388, 16
  %v4429 = vrot.slane %v4427, 1
  %v4430 = vor.u32 %v4425, %v4429
  %v4432 = vshrl.u32 %v4389, 16
  %v4434 = vshll.u32 %v4389, 16
  %v4436 = vrot.slane %v4434, 1
  %v4437 = vor.u32 %v4432, %v4436
  %v4439 = vshrl.u32 %v4390, 16
  %v4441 = vshll.u32 %v4390, 16
  %v4443 = vrot.slane %v4441, 1
  %v4444 = vor.u32 %v4439, %v4443
  %v4446 = vshrl.u32 %v4391, 16
  %v4448 = vshll.u32 %v4391, 16
  %v4450 = vrot.slane %v4448, 1
  %v4451 = vor.u32 %v4446, %v4450
  %v4453 = vshrl.u32 %v4392, 16
  %v4455 = vshll.u32 %v4392, 16
  %v4457 = vrot.slane %v4455, 1
  %v4458 = vor.u32 %v4453, %v4457
  %v4460 = vshrl.u32 %v4393, 16
  %v4462 = vshll.u32 %v4393, 16
  %v4464 = vrot.slane %v4462, 1
  %v4465 = vor.u32 %v4460, %v4464
  %v4467 = vshrl.u32 %v4394, 16
  %v4469 = vshll.u32 %v4394, 16
  %v4471 = vrot.slane %v4469, 1
  %v4472 = vor.u32 %v4467, %v4471
  %v4474 = vshrl.u32 %v4395, 16
  %v4476 = vshll.u32 %v4395, 16
  %v4478 = vrot.slane %v4476, 1
  %v4479 = vor.u32 %v4474, %v4478
  %v4481 = vshrl.u32 %v4396, 16
  %v4483 = vshll.u32 %v4396, 16
  %v4485 = vrot.slane %v4483, 1
  %v4486 = vor.u32 %v4481, %v4485
  %v4488 = vshrl.u32 %v4397, 16
  %v4490 = vshll.u32 %v4397, 16
  %v4492 = vrot.slane %v4490, 1
  %v4493 = vor.u32 %v4488, %v4492
  %v4495 = vshrl.u32 %v4398, 16
  %v4497 = vshll.u32 %v4398, 16
  %v4499 = vrot.slane %v4497, 1
  %v4500 = vor.u32 %v4495, %v4499
  %v4502 = vshrl.u32 %v4399, 16
  %v4504 = vshll.u32 %v4399, 16
  %v4506 = vrot.slane %v4504, 1
  %v4507 = vor.u32 %v4502, %v4506
  %v4509 = vshrl.u32 %v4400, 16
  %v4511 = vshll.u32 %v4400, 16
  %v4513 = vrot.slane %v4511, 1
  %v4514 = vor.u32 %v4509, %v4513
  %v4516 = vshrl.u32 %v4401, 16
  %v4518 = vshll.u32 %v4401, 16
  %v4520 = vrot.slane %v4518, 1
  %v4521 = vor.u32 %v4516, %v4520
  %v4523 = vshrl.u32 %v4402, 16
  %v4525 = vshll.u32 %v4402, 16
  %v4527 = vrot.slane %v4525, 1
  %v4528 = vor.u32 %v4523, %v4527
  %v4530 = vshrl.u32 %v4403, 16
  %v4532 = vshll.u32 %v4403, 16
  %v4534 = vrot.slane %v4532, 1
  %v4535 = vor.u32 %v4530, %v4534
  %v4537 = vshrl.u32 %v4404, 16
  %v4539 = vshll.u32 %v4404, 16
  %v4541 = vrot.slane %v4539, 1
  %v4542 = vor.u32 %v4537, %v4541
  %v4544 = vshrl.u32 %v4405, 16
  %v4546 = vshll.u32 %v4405, 16
  %v4548 = vrot.slane %v4546, 1
  %v4549 = vor.u32 %v4544, %v4548
  %v4551 = vshrl.u32 %v4406, 16
  %v4553 = vshll.u32 %v4406, 16
  %v4555 = vrot.slane %v4553, 1
  %v4556 = vor.u32 %v4551, %v4555
  %v4558 = vshrl.u32 %v4407, 16
  %v4560 = vshll.u32 %v4407, 16
  %v4562 = vrot.slane %v4560, 1
  %v4563 = vor.u32 %v4558, %v4562
  %v4565 = vshrl.u32 %v4408, 16
  %v4567 = vshll.u32 %v4408, 16
  %v4569 = vrot.slane %v4567, 1
  %v4570 = vor.u32 %v4565, %v4569
  %v4572 = vshrl.u32 %v4409, 16
  %v4574 = vshll.u32 %v4409, 16
  %v4576 = vrot.slane %v4574, 1
  %v4577 = vor.u32 %v4572, %v4576
  %v4579 = vshrl.u32 %v4410, 16
  %v4581 = vshll.u32 %v4410, 16
  %v4583 = vrot.slane %v4581, 1
  %v4584 = vor.u32 %v4579, %v4583
  %v4586 = vshrl.u32 %v4411, 16
  %v4588 = vshll.u32 %v4411, 16
  %v4590 = vrot.slane %v4588, 1
  %v4591 = vor.u32 %v4586, %v4590
  %v4593 = vshrl.u32 %v4412, 16
  %v4595 = vshll.u32 %v4412, 16
  %v4597 = vrot.slane %v4595, 1
  %v4598 = vor.u32 %v4593, %v4597
  %v4600 = vshrl.u32 %v4413, 16
  %v4602 = vshll.u32 %v4413, 16
  %v4604 = vrot.slane %v4602, 1
  %v4605 = vor.u32 %v4600, %v4604
  %v4607 = vshrl.u32 %v4414, 16
  %v4609 = vshll.u32 %v4414, 16
  %v4611 = vrot.slane %v4609, 1
  %v4612 = vor.u32 %v4607, %v4611
  %v4614 = vshrl.u32 %v4415, 16
  %v4616 = vshll.u32 %v4415, 16
  %v4618 = vrot.slane %v4616, 1
  %v4619 = vor.u32 %v4614, %v4618
  %v4621 = vshrl.u32 %v4416, 16
  %v4623 = vshll.u32 %v4416, 16
  %v4625 = vrot.slane %v4623, 1
  %v4626 = vor.u32 %v4621, %v4625
  %4627 = vrot.lane.b32.xlu0 %v4423, 32
  %v4628 = vpop.permute.xlu0 %4627
  %4629 = vrot.lane.b32.xlu0 %v4430, 32
  %v4630 = vpop.permute.xlu0 %4629
  %4631 = vrot.lane.b32.xlu0 %v4437, 32
  %v4632 = vpop.permute.xlu0 %4631
  %4633 = vrot.lane.b32.xlu0 %v4444, 32
  %v4634 = vpop.permute.xlu0 %4633
  %4635 = vrot.lane.b32.xlu0 %v4451, 32
  %v4636 = vpop.permute.xlu0 %4635
  %4637 = vrot.lane.b32.xlu0 %v4458, 32
  %v4638 = vpop.permute.xlu0 %4637
  %4639 = vrot.lane.b32.xlu0 %v4465, 32
  %v4640 = vpop.permute.xlu0 %4639
  %4641 = vrot.lane.b32.xlu0 %v4472, 32
  %v4642 = vpop.permute.xlu0 %4641
  %4643 = vrot.lane.b32.xlu0 %v4479, 32
  %v4644 = vpop.permute.xlu0 %4643
  %4645 = vrot.lane.b32.xlu0 %v4486, 32
  %v4646 = vpop.permute.xlu0 %4645
  %4647 = vrot.lane.b32.xlu0 %v4493, 32
  %v4648 = vpop.permute.xlu0 %4647
  %4649 = vrot.lane.b32.xlu0 %v4500, 32
  %v4650 = vpop.permute.xlu0 %4649
  %4651 = vrot.lane.b32.xlu0 %v4507, 32
  %v4652 = vpop.permute.xlu0 %4651
  %4653 = vrot.lane.b32.xlu0 %v4514, 32
  %v4654 = vpop.permute.xlu0 %4653
  %4655 = vrot.lane.b32.xlu0 %v4521, 32
  %v4656 = vpop.permute.xlu0 %4655
  %4657 = vrot.lane.b32.xlu0 %v4528, 32
  %v4658 = vpop.permute.xlu0 %4657
  %4659 = vrot.lane.b32.xlu0 %v4535, 32
  %v4660 = vpop.permute.xlu0 %4659
  %4661 = vrot.lane.b32.xlu0 %v4542, 32
  %v4662 = vpop.permute.xlu0 %4661
  %4663 = vrot.lane.b32.xlu0 %v4549, 32
  %v4664 = vpop.permute.xlu0 %4663
  %4665 = vrot.lane.b32.xlu0 %v4556, 32
  %v4666 = vpop.permute.xlu0 %4665
  %4667 = vrot.lane.b32.xlu0 %v4563, 32
  %v4668 = vpop.permute.xlu0 %4667
  %4669 = vrot.lane.b32.xlu0 %v4570, 32
  %v4670 = vpop.permute.xlu0 %4669
  %4671 = vrot.lane.b32.xlu0 %v4577, 32
  %v4672 = vpop.permute.xlu0 %4671
  %4673 = vrot.lane.b32.xlu0 %v4584, 32
  %v4674 = vpop.permute.xlu0 %4673
  %4675 = vrot.lane.b32.xlu0 %v4591, 32
  %v4676 = vpop.permute.xlu0 %4675
  %4677 = vrot.lane.b32.xlu0 %v4598, 32
  %v4678 = vpop.permute.xlu0 %4677
  %4679 = vrot.lane.b32.xlu0 %v4605, 32
  %v4680 = vpop.permute.xlu0 %4679
  %4681 = vrot.lane.b32.xlu0 %v4612, 32
  %v4682 = vpop.permute.xlu0 %4681
  %4683 = vrot.lane.b32.xlu0 %v4619, 32
  %v4684 = vpop.permute.xlu0 %4683
  %4685 = vrot.lane.b32.xlu0 %v4626, 32
  %v4686 = vpop.permute.xlu0 %4685
  %vm4717 = vcmask 294144
  %vm4718 = vmand %vm4717, %vm1544
  %v4719 = vld [vmem:[#allocation2] sm:$0xff]
  %v4720 = vsel %vm4718, %v4628, %v4719
  %4721 = vst [vmem:[#allocation2] sm:$0xff] %v4720
  %v4722 = vld [vmem:[#allocation2 + $0x8] sm:$0xff]
  %v4723 = vsel %vm4718, %v4630, %v4722
  %4724 = vst [vmem:[#allocation2 + $0x8] sm:$0xff] %v4723
  %v4725 = vld [vmem:[#allocation2 + $0x10] sm:$0xff]
  %v4726 = vsel %vm4718, %v4632, %v4725
  %4727 = vst [vmem:[#allocation2 + $0x10] sm:$0xff] %v4726
  %v4728 = vld [vmem:[#allocation2 + $0x18] sm:$0xff]
  %v4729 = vsel %vm4718, %v4634, %v4728
  %4730 = vst [vmem:[#allocation2 + $0x18] sm:$0xff] %v4729
  %v4731 = vld [vmem:[#allocation2 + $0x20] sm:$0xff]
  %v4732 = vsel %vm4718, %v4636, %v4731
  %4733 = vst [vmem:[#allocation2 + $0x20] sm:$0xff] %v4732
  %v4734 = vld [vmem:[#allocation2 + $0x28] sm:$0xff]
  %v4735 = vsel %vm4718, %v4638, %v4734
  %4736 = vst [vmem:[#allocation2 + $0x28] sm:$0xff] %v4735
  %v4737 = vld [vmem:[#allocation2 + $0x30] sm:$0xff]
  %v4738 = vsel %vm4718, %v4640, %v4737
  %4739 = vst [vmem:[#allocation2 + $0x30] sm:$0xff] %v4738
  %v4740 = vld [vmem:[#allocation2 + $0x38] sm:$0xff]
  %v4741 = vsel %vm4718, %v4642, %v4740
  %4742 = vst [vmem:[#allocation2 + $0x38] sm:$0xff] %v4741
  %v4743 = vld [vmem:[#allocation2 + $0x40] sm:$0xff]
  %v4744 = vsel %vm4718, %v4644, %v4743
  %4745 = vst [vmem:[#allocation2 + $0x40] sm:$0xff] %v4744
  %v4746 = vld [vmem:[#allocation2 + $0x48] sm:$0xff]
  %v4747 = vsel %vm4718, %v4646, %v4746
  %4748 = vst [vmem:[#allocation2 + $0x48] sm:$0xff] %v4747
  %v4749 = vld [vmem:[#allocation2 + $0x50] sm:$0xff]
  %v4750 = vsel %vm4718, %v4648, %v4749
  %4751 = vst [vmem:[#allocation2 + $0x50] sm:$0xff] %v4750
  %v4752 = vld [vmem:[#allocation2 + $0x58] sm:$0xff]
  %v4753 = vsel %vm4718, %v4650, %v4752
  %4754 = vst [vmem:[#allocation2 + $0x58] sm:$0xff] %v4753
  %v4755 = vld [vmem:[#allocation2 + $0x60] sm:$0xff]
  %v4756 = vsel %vm4718, %v4652, %v4755
  %4757 = vst [vmem:[#allocation2 + $0x60] sm:$0xff] %v4756
  %v4758 = vld [vmem:[#allocation2 + $0x68] sm:$0xff]
  %v4759 = vsel %vm4718, %v4654, %v4758
  %4760 = vst [vmem:[#allocation2 + $0x68] sm:$0xff] %v4759
  %v4761 = vld [vmem:[#allocation2 + $0x70] sm:$0xff]
  %v4762 = vsel %vm4718, %v4656, %v4761
  %4763 = vst [vmem:[#allocation2 + $0x70] sm:$0xff] %v4762
  %v4764 = vld [vmem:[#allocation2 + $0x80] sm:$0xff]
  %v4765 = vsel %vm4718, %v4658, %v4764
  %4766 = vst [vmem:[#allocation2 + $0x80] sm:$0xff] %v4765
  %v4767 = vld [vmem:[#allocation2 + $0x88] sm:$0xff]
  %v4768 = vsel %vm4718, %v4660, %v4767
  %4769 = vst [vmem:[#allocation2 + $0x88] sm:$0xff] %v4768
  %v4770 = vld [vmem:[#allocation2 + $0x90] sm:$0xff]
  %v4771 = vsel %vm4718, %v4662, %v4770
  %4772 = vst [vmem:[#allocation2 + $0x90] sm:$0xff] %v4771
  %v4773 = vld [vmem:[#allocation2 + $0x98] sm:$0xff]
  %v4774 = vsel %vm4718, %v4664, %v4773
  %4775 = vst [vmem:[#allocation2 + $0x98] sm:$0xff] %v4774
  %v4776 = vld [vmem:[#allocation2 + $0xa0] sm:$0xff]
  %v4777 = vsel %vm4718, %v4666, %v4776
  %4778 = vst [vmem:[#allocation2 + $0xa0] sm:$0xff] %v4777
  %v4779 = vld [vmem:[#allocation2 + $0xa8] sm:$0xff]
  %v4780 = vsel %vm4718, %v4668, %v4779
  %4781 = vst [vmem:[#allocation2 + $0xa8] sm:$0xff] %v4780
  %v4782 = vld [vmem:[#allocation2 + $0xb0] sm:$0xff]
  %v4783 = vsel %vm4718, %v4670, %v4782
  %4784 = vst [vmem:[#allocation2 + $0xb0] sm:$0xff] %v4783
  %v4785 = vld [vmem:[#allocation2 + $0xb8] sm:$0xff]
  %v4786 = vsel %vm4718, %v4672, %v4785
  %4787 = vst [vmem:[#allocation2 + $0xb8] sm:$0xff] %v4786
  %v4788 = vld [vmem:[#allocation2 + $0xc0] sm:$0xff]
  %v4789 = vsel %vm4718, %v4674, %v4788
  %4790 = vst [vmem:[#allocation2 + $0xc0] sm:$0xff] %v4789
  %v4791 = vld [vmem:[#allocation2 + $0xc8] sm:$0xff]
  %v4792 = vsel %vm4718, %v4676, %v4791
  %4793 = vst [vmem:[#allocation2 + $0xc8] sm:$0xff] %v4792
  %v4794 = vld [vmem:[#allocation2 + $0xd0] sm:$0xff]
  %v4795 = vsel %vm4718, %v4678, %v4794
  %4796 = vst [vmem:[#allocation2 + $0xd0] sm:$0xff] %v4795
  %v4797 = vld [vmem:[#allocation2 + $0xd8] sm:$0xff]
  %v4798 = vsel %vm4718, %v4680, %v4797
  %4799 = vst [vmem:[#allocation2 + $0xd8] sm:$0xff] %v4798
  %v4800 = vld [vmem:[#allocation2 + $0xe0] sm:$0xff]
  %v4801 = vsel %vm4718, %v4682, %v4800
  %4802 = vst [vmem:[#allocation2 + $0xe0] sm:$0xff] %v4801
  %v4803 = vld [vmem:[#allocation2 + $0xe8] sm:$0xff]
  %v4804 = vsel %vm4718, %v4684, %v4803
  %4805 = vst [vmem:[#allocation2 + $0xe8] sm:$0xff] %v4804
  %v4806 = vld [vmem:[#allocation2 + $0xf0] sm:$0xff]
  %v4807 = vsel %vm4718, %v4686, %v4806
  %4808 = vst [vmem:[#allocation2 + $0xf0] sm:$0xff] %v4807
  %v4809 = vld [vmem:[#allocation2] sm:$0xff]
  %v4810 = vld [vmem:[#allocation2 + $0x8] sm:$0xff]
  %v4811 = vld [vmem:[#allocation2 + $0x10] sm:$0xff]
  %v4812 = vld [vmem:[#allocation2 + $0x18] sm:$0xff]
  %v4813 = vld [vmem:[#allocation2 + $0x20] sm:$0xff]
  %v4814 = vld [vmem:[#allocation2 + $0x28] sm:$0xff]
  %v4815 = vld [vmem:[#allocation2 + $0x30] sm:$0xff]
  %v4816 = vld [vmem:[#allocation2 + $0x38] sm:$0xff]
  %v4817 = vld [vmem:[#allocation2 + $0x40] sm:$0xff]
  %v4818 = vld [vmem:[#allocation2 + $0x48] sm:$0xff]
  %v4819 = vld [vmem:[#allocation2 + $0x50] sm:$0xff]
  %v4820 = vld [vmem:[#allocation2 + $0x58] sm:$0xff]
  %v4821 = vld [vmem:[#allocation2 + $0x60] sm:$0xff]
  %v4822 = vld [vmem:[#allocation2 + $0x68] sm:$0xff]
  %v4823 = vld [vmem:[#allocation2 + $0x70] sm:$0xff]
  %v4824 = vld [vmem:[#allocation2 + $0x78] sm:$0xff]
  %v4825 = vld [vmem:[#allocation2 + $0x80] sm:$0xff]
  %v4826 = vld [vmem:[#allocation2 + $0x88] sm:$0xff]
  %v4827 = vld [vmem:[#allocation2 + $0x90] sm:$0xff]
  %v4828 = vld [vmem:[#allocation2 + $0x98] sm:$0xff]
  %v4829 = vld [vmem:[#allocation2 + $0xa0] sm:$0xff]
  %v4830 = vld [vmem:[#allocation2 + $0xa8] sm:$0xff]
  %v4831 = vld [vmem:[#allocation2 + $0xb0] sm:$0xff]
  %v4832 = vld [vmem:[#allocation2 + $0xb8] sm:$0xff]
  %v4833 = vld [vmem:[#allocation2 + $0xc0] sm:$0xff]
  %v4834 = vld [vmem:[#allocation2 + $0xc8] sm:$0xff]
  %v4835 = vld [vmem:[#allocation2 + $0xd0] sm:$0xff]
  %v4836 = vld [vmem:[#allocation2 + $0xd8] sm:$0xff]
  %v4837 = vld [vmem:[#allocation2 + $0xe0] sm:$0xff]
  %v4838 = vld [vmem:[#allocation2 + $0xe8] sm:$0xff]
  %v4839 = vld [vmem:[#allocation2 + $0xf0] sm:$0xff]
  %v4840 = vld [vmem:[#allocation2 + $0xf8] sm:$0xff]
  %v4841 = vld [vmem:[%s1] sm:$0xf]
  %v4842 = vld [vmem:[%s1 + $0x4] sm:$0xf]
  %v4843 = vld [vmem:[%s1 + $0x8] sm:$0xf]
  %v4844 = vld [vmem:[%s1 + $0xc] sm:$0xf]
  %v4845 = vld [vmem:[%s1 + $0x10] sm:$0x3]
  %v4846 = vld [vmem:[%s2] sm:$0x1]
  %v4848 = vlaneseq
  %v4849 = vshrl.u32 %v4848, 7
  %v4850 = vsub.s32 0, %v4849
  %v4851 = vrot.slane %v4846, %v4850
  %v4858 = vunpack.c.l.b16 %v4841
  %v4859 = vunpack.c.l.b16 %v4842
  %v4860 = vunpack.c.l.b16 %v4843
  %v4861 = vunpack.c.l.b16 %v4844
  %v4862 = vunpack.c.l.b16 %v4845
  %v4863 = vpack.c.b16 %v4859, %v4858
  %v4864 = vpack.c.b16 %v4861, %v4860
  %v4865 = vpack.c.b16 %v4862, %v4862
  %v4869 = vsel %vm15, %v4809, 0
  %v4872 = vsel %vm15, %v4810, 0
  %v4875 = vsel %vm15, %v4811, 0
  %v4878 = vsel %vm15, %v4812, 0
  %v4881 = vsel %vm15, %v4813, 0
  %v4884 = vsel %vm15, %v4814, 0
  %v4887 = vsel %vm15, %v4815, 0
  %v4890 = vsel %vm15, %v4816, 0
  %v4893 = vsel %vm15, %v4817, 0
  %v4896 = vsel %vm15, %v4818, 0
  %v4899 = vsel %vm15, %v4819, 0
  %v4902 = vsel %vm15, %v4820, 0
  %v4905 = vsel %vm15, %v4821, 0
  %v4908 = vsel %vm15, %v4822, 0
  %v4911 = vsel %vm15, %v4823, 0
  %v4914 = vsel %vm15, %v4824, 0
  %v4917 = vsel %vm15, %v4825, 0
  %v4920 = vsel %vm15, %v4826, 0
  %v4923 = vsel %vm15, %v4827, 0
  %v4926 = vsel %vm15, %v4828, 0
  %v4929 = vsel %vm15, %v4829, 0
  %v4932 = vsel %vm15, %v4830, 0
  %v4935 = vsel %vm15, %v4831, 0
  %v4938 = vsel %vm15, %v4832, 0
  %v4941 = vsel %vm15, %v4833, 0
  %v4944 = vsel %vm15, %v4834, 0
  %v4947 = vsel %vm15, %v4835, 0
  %v4950 = vsel %vm15, %v4836, 0
  %v4953 = vsel %vm15, %v4837, 0
  %v4956 = vsel %vm15, %v4838, 0
  %v4959 = vsel %vm15, %v4839, 0
  %v4962 = vsel %vm15, %v4840, 0
  %vm4964 = vcmask 1041408
  %v4966 = vsel %vm4964, %v4865, 0
  %4968 = vmatprep.subr.bf16.mxu0 0
  %4969 = vmatpush1.bf16.msra.mxu0 %v4863
  %4970 = vmatprep.subr.bf16.mxu0 0
  %4971 = vmatpush1.bf16.msra.mxu0 %v4864
  %4972 = vmatprep.subr.bf16.mxu0 0
  %4973 = vmatpush1.bf16.msra.mxu0 %v4966
  %4974 = vmatprep.subr.bf16.mxu0 0
  %4975 = vmatpush1.bf16.msra.mxu0 0
  %4976 = vmatprep.subr.bf16.mxu0 0
  %4977 = vmatpush1.bf16.msra.mxu0 0
  %4978 = vmatprep.subr.bf16.mxu0 0
  %4979 = vmatpush1.bf16.msra.mxu0 0
  %4980 = vmatprep.subr.bf16.mxu0 0
  %4981 = vmatpush1.bf16.msra.mxu0 0
  %4982 = vmatprep.subr.bf16.mxu0 0
  %4983 = vmatpush1.bf16.msra.mxu0 0
  %4984 = vmatprep.subr.bf16.mxu0 0
  %4985 = vmatpush1.bf16.msra.mxu0 0
  %4986 = vmatprep.subr.bf16.mxu0 0
  %4987 = vmatpush1.bf16.msra.mxu0 0
  %4988 = vmatprep.subr.bf16.mxu0 0
  %4989 = vmatpush1.bf16.msra.mxu0 0
  %4990 = vmatprep.subr.bf16.mxu0 0
  %4991 = vmatpush1.bf16.msra.mxu0 0
  %4992 = vmatprep.subr.bf16.mxu0 0
  %4993 = vmatpush1.bf16.msra.mxu0 0
  %4994 = vmatprep.subr.bf16.mxu0 0
  %4995 = vmatpush1.bf16.msra.mxu0 0
  %4996 = vmatprep.subr.bf16.mxu0 0
  %4997 = vmatpush1.bf16.msra.mxu0 0
  %4998 = vmatprep.subr.bf16.mxu0 0
  %4999 = vmatpush1.bf16.msra.mxu0 0
  %5000 = vmatprep.mubr.bf16.mxu0 0
  %5001 = vmatmul.mubr.bf16.gmra.mrb[0].mxu0 %v4869
  %v5002 = vpop.f32.mrb[0].mxu0
  %v5003 = vadd.f32 %v4851, %v5002
  %v5004 = vpop.f32.mrb[0].mxu0
  %v5005 = vpop.f32.mrb[0].mxu0
  %v5006 = vadd.f32 %v4851, %v5005
  %v5007 = vpop.f32.mrb[0].mxu0
  %5008 = vmatprep.mubr.bf16.mxu0 0
  %5009 = vmatmul.mubr.bf16.gmra.mrb[0].mxu0 %v4872
  %v5010 = vpop.f32.mrb[0].mxu0
  %v5011 = vadd.f32 %v4851, %v5010
  %v5012 = vpop.f32.mrb[0].mxu0
  %v5013 = vpop.f32.mrb[0].mxu0
  %v5014 = vadd.f32 %v4851, %v5013
  %v5015 = vpop.f32.mrb[0].mxu0
  %5016 = vmatprep.mubr.bf16.mxu0 0
  %5017 = vmatmul.mubr.bf16.gmra.mrb[0].mxu0 %v4875
  %v5018 = vpop.f32.mrb[0].mxu0
  %v5019 = vadd.f32 %v4851, %v5018
  %v5020 = vpop.f32.mrb[0].mxu0
  %v5021 = vpop.f32.mrb[0].mxu0
  %v5022 = vadd.f32 %v4851, %v5021
  %v5023 = vpop.f32.mrb[0].mxu0
  %5024 = vmatprep.mubr.bf16.mxu0 0
  %5025 = vmatmul.mubr.bf16.gmra.mrb[0].mxu0 %v4878
  %v5026 = vpop.f32.mrb[0].mxu0
  %v5027 = vadd.f32 %v4851, %v5026
  %v5028 = vpop.f32.mrb[0].mxu0
  %v5029 = vpop.f32.mrb[0].mxu0
  %v5030 = vadd.f32 %v4851, %v5029
  %v5031 = vpop.f32.mrb[0].mxu0
  %5032 = vmatprep.mubr.bf16.mxu0 0
  %5033 = vmatmul.mubr.bf16.gmra.mrb[0].mxu0 %v4881
  %v5034 = vpop.f32.mrb[0].mxu0
  %v5035 = vadd.f32 %v4851, %v5034
  %v5036 = vpop.f32.mrb[0].mxu0
  %v5037 = vpop.f32.mrb[0].mxu0
  %v5038 = vadd.f32 %v4851, %v5037
  %v5039 = vpop.f32.mrb[0].mxu0
  %5040 = vmatprep.mubr.bf16.mxu0 0
  %5041 = vmatmul.mubr.bf16.gmra.mrb[0].mxu0 %v4884
  %v5042 = vpop.f32.mrb[0].mxu0
  %v5043 = vadd.f32 %v4851, %v5042
  %v5044 = vpop.f32.mrb[0].mxu0
  %v5045 = vpop.f32.mrb[0].mxu0
  %v5046 = vadd.f32 %v4851, %v5045
  %v5047 = vpop.f32.mrb[0].mxu0
  %5048 = vmatprep.mubr.bf16.mxu0 0
  %5049 = vmatmul.mubr.bf16.gmra.mrb[0].mxu0 %v4887
  %v5050 = vpop.f32.mrb[0].mxu0
  %v5051 = vadd.f32 %v4851, %v5050
  %v5052 = vpop.f32.mrb[0].mxu0
  %v5053 = vpop.f32.mrb[0].mxu0
  %v5054 = vadd.f32 %v4851, %v5053
  %v5055 = vpop.f32.mrb[0].mxu0
  %5056 = vmatprep.mubr.bf16.mxu0 0
  %5057 = vmatmul.mubr.bf16.gmra.mrb[0].mxu0 %v4890
  %v5058 = vpop.f32.mrb[0].mxu0
  %v5059 = vadd.f32 %v4851, %v5058
  %v5060 = vpop.f32.mrb[0].mxu0
  %v5061 = vpop.f32.mrb[0].mxu0
  %v5062 = vadd.f32 %v4851, %v5061
  %v5063 = vpop.f32.mrb[0].mxu0
  %5064 = vmatprep.mubr.bf16.mxu0 0
  %5065 = vmatmul.mubr.bf16.gmra.mrb[0].mxu0 %v4893
  %v5066 = vpop.f32.mrb[0].mxu0
  %v5067 = vadd.f32 %v4851, %v5066
  %v5068 = vpop.f32.mrb[0].mxu0
  %v5069 = vpop.f32.mrb[0].mxu0
  %v5070 = vadd.f32 %v4851, %v5069
  %v5071 = vpop.f32.mrb[0].mxu0
  %5072 = vmatprep.mubr.bf16.mxu0 0
  %5073 = vmatmul.mubr.bf16.gmra.mrb[0].mxu0 %v4896
  %v5074 = vpop.f32.mrb[0].mxu0
  %v5075 = vadd.f32 %v4851, %v5074
  %v5076 = vpop.f32.mrb[0].mxu0
  %v5077 = vpop.f32.mrb[0].mxu0
  %v5078 = vadd.f32 %v4851, %v5077
  %v5079 = vpop.f32.mrb[0].mxu0
  %5080 = vmatprep.mubr.bf16.mxu0 0
  %5081 = vmatmul.mubr.bf16.gmra.mrb[0].mxu0 %v4899
  %v5082 = vpop.f32.mrb[0].mxu0
  %v5083 = vadd.f32 %v4851, %v5082
  %v5084 = vpop.f32.mrb[0].mxu0
  %v5085 = vpop.f32.mrb[0].mxu0
  %v5086 = vadd.f32 %v4851, %v5085
  %v5087 = vpop.f32.mrb[0].mxu0
  %5088 = vmatprep.mubr.bf16.mxu0 0
  %5089 = vmatmul.mubr.bf16.gmra.mrb[0].mxu0 %v4902
  %v5090 = vpop.f32.mrb[0].mxu0
  %v5091 = vadd.f32 %v4851, %v5090
  %v5092 = vpop.f32.mrb[0].mxu0
  %v5093 = vpop.f32.mrb[0].mxu0
  %v5094 = vadd.f32 %v4851, %v5093
  %v5095 = vpop.f32.mrb[0].mxu0
  %5096 = vmatprep.mubr.bf16.mxu0 0
  %5097 = vmatmul.mubr.bf16.gmra.mrb[0].mxu0 %v4905
  %v5098 = vpop.f32.mrb[0].mxu0
  %v5099 = vadd.f32 %v4851, %v5098
  %v5100 = vpop.f32.mrb[0].mxu0
  %v5101 = vpop.f32.mrb[0].mxu0
  %v5102 = vadd.f32 %v4851, %v5101
  %v5103 = vpop.f32.mrb[0].mxu0
  %5104 = vmatprep.mubr.bf16.mxu0 0
  %5105 = vmatmul.mubr.bf16.gmra.mrb[0].mxu0 %v4908
  %v5106 = vpop.f32.mrb[0].mxu0
  %v5107 = vadd.f32 %v4851, %v5106
  %v5108 = vpop.f32.mrb[0].mxu0
  %v5109 = vpop.f32.mrb[0].mxu0
  %v5110 = vadd.f32 %v4851, %v5109
  %v5111 = vpop.f32.mrb[0].mxu0
  %5112 = vmatprep.mubr.bf16.mxu0 0
  %5113 = vmatmul.mubr.bf16.gmra.mrb[0].mxu0 %v4911
  %v5114 = vpop.f32.mrb[0].mxu0
  %v5115 = vadd.f32 %v4851, %v5114
  %v5116 = vpop.f32.mrb[0].mxu0
  %v5117 = vpop.f32.mrb[0].mxu0
  %v5118 = vadd.f32 %v4851, %v5117
  %v5119 = vpop.f32.mrb[0].mxu0
  %5120 = vmatprep.mubr.bf16.mxu0 0
  %5121 = vmatmul.mubr.bf16.gmra.mrb[0].mxu0 %v4914
  %v5122 = vpop.f32.mrb[0].mxu0
  %v5123 = vadd.f32 %v4851, %v5122
  %v5124 = vpop.f32.mrb[0].mxu0
  %v5125 = vpop.f32.mrb[0].mxu0
  %v5126 = vadd.f32 %v4851, %v5125
  %v5127 = vpop.f32.mrb[0].mxu0
  %5128 = vmatprep.mubr.bf16.mxu0 0
  %5129 = vmatmul.mubr.bf16.gmra.mrb[0].mxu0 %v4917
  %v5130 = vpop.f32.mrb[0].mxu0
  %v5131 = vadd.f32 %v4851, %v5130
  %v5132 = vpop.f32.mrb[0].mxu0
  %v5133 = vpop.f32.mrb[0].mxu0
  %v5134 = vadd.f32 %v4851, %v5133
  %v5135 = vpop.f32.mrb[0].mxu0
  %5136 = vmatprep.mubr.bf16.mxu0 0
  %5137 = vmatmul.mubr.bf16.gmra.mrb[0].mxu0 %v4920
  %v5138 = vpop.f32.mrb[0].mxu0
  %v5139 = vadd.f32 %v4851, %v5138
  %v5140 = vpop.f32.mrb[0].mxu0
  %v5141 = vpop.f32.mrb[0].mxu0
  %v5142 = vadd.f32 %v4851, %v5141
  %v5143 = vpop.f32.mrb[0].mxu0
  %5144 = vmatprep.mubr.bf16.mxu0 0
  %5145 = vmatmul.mubr.bf16.gmra.mrb[0].mxu0 %v4923
  %v5146 = vpop.f32.mrb[0].mxu0
  %v5147 = vadd.f32 %v4851, %v5146
  %v5148 = vpop.f32.mrb[0].mxu0
  %v5149 = vpop.f32.mrb[0].mxu0
  %v5150 = vadd.f32 %v4851, %v5149
  %v5151 = vpop.f32.mrb[0].mxu0
  %5152 = vmatprep.mubr.bf16.mxu0 0
  %5153 = vmatmul.mubr.bf16.gmra.mrb[0].mxu0 %v4926
  %v5154 = vpop.f32.mrb[0].mxu0
  %v5155 = vadd.f32 %v4851, %v5154
  %v5156 = vpop.f32.mrb[0].mxu0
  %v5157 = vpop.f32.mrb[0].mxu0
  %v5158 = vadd.f32 %v4851, %v5157
  %v5159 = vpop.f32.mrb[0].mxu0
  %5160 = vmatprep.mubr.bf16.mxu0 0
  %5161 = vmatmul.mubr.bf16.gmra.mrb[0].mxu0 %v4929
  %v5162 = vpop.f32.mrb[0].mxu0
  %v5163 = vadd.f32 %v4851, %v5162
  %v5164 = vpop.f32.mrb[0].mxu0
  %v5165 = vpop.f32.mrb[0].mxu0
  %v5166 = vadd.f32 %v4851, %v5165
  %v5167 = vpop.f32.mrb[0].mxu0
  %5168 = vmatprep.mubr.bf16.mxu0 0
  %5169 = vmatmul.mubr.bf16.gmra.mrb[0].mxu0 %v4932
  %v5170 = vpop.f32.mrb[0].mxu0
  %v5171 = vadd.f32 %v4851, %v5170
  %v5172 = vpop.f32.mrb[0].mxu0
  %v5173 = vpop.f32.mrb[0].mxu0
  %v5174 = vadd.f32 %v4851, %v5173
  %v5175 = vpop.f32.mrb[0].mxu0
  %5176 = vmatprep.mubr.bf16.mxu0 0
  %5177 = vmatmul.mubr.bf16.gmra.mrb[0].mxu0 %v4935
  %v5178 = vpop.f32.mrb[0].mxu0
  %v5179 = vadd.f32 %v4851, %v5178
  %v5180 = vpop.f32.mrb[0].mxu0
  %v5181 = vpop.f32.mrb[0].mxu0
  %v5182 = vadd.f32 %v4851, %v5181
  %v5183 = vpop.f32.mrb[0].mxu0
  %5184 = vmatprep.mubr.bf16.mxu0 0
  %5185 = vmatmul.mubr.bf16.gmra.mrb[0].mxu0 %v4938
  %v5186 = vpop.f32.mrb[0].mxu0
  %v5187 = vadd.f32 %v4851, %v5186
  %v5188 = vpop.f32.mrb[0].mxu0
  %v5189 = vpop.f32.mrb[0].mxu0
  %v5190 = vadd.f32 %v4851, %v5189
  %v5191 = vpop.f32.mrb[0].mxu0
  %5192 = vmatprep.mubr.bf16.mxu0 0
  %5193 = vmatmul.mubr.bf16.gmra.mrb[0].mxu0 %v4941
  %v5194 = vpop.f32.mrb[0].mxu0
  %v5195 = vadd.f32 %v4851, %v5194
  %v5196 = vpop.f32.mrb[0].mxu0
  %v5197 = vpop.f32.mrb[0].mxu0
  %v5198 = vadd.f32 %v4851, %v5197
  %v5199 = vpop.f32.mrb[0].mxu0
  %5200 = vmatprep.mubr.bf16.mxu0 0
  %5201 = vmatmul.mubr.bf16.gmra.mrb[0].mxu0 %v4944
  %v5202 = vpop.f32.mrb[0].mxu0
  %v5203 = vadd.f32 %v4851, %v5202
  %v5204 = vpop.f32.mrb[0].mxu0
  %v5205 = vpop.f32.mrb[0].mxu0
  %v5206 = vadd.f32 %v4851, %v5205
  %v5207 = vpop.f32.mrb[0].mxu0
  %5208 = vmatprep.mubr.bf16.mxu0 0
  %5209 = vmatmul.mubr.bf16.gmra.mrb[0].mxu0 %v4947
  %v5210 = vpop.f32.mrb[0].mxu0
  %v5211 = vadd.f32 %v4851, %v5210
  %v5212 = vpop.f32.mrb[0].mxu0
  %v5213 = vpop.f32.mrb[0].mxu0
  %v5214 = vadd.f32 %v4851, %v5213
  %v5215 = vpop.f32.mrb[0].mxu0
  %5216 = vmatprep.mubr.bf16.mxu0 0
  %5217 = vmatmul.mubr.bf16.gmra.mrb[0].mxu0 %v4950
  %v5218 = vpop.f32.mrb[0].mxu0
  %v5219 = vadd.f32 %v4851, %v5218
  %v5220 = vpop.f32.mrb[0].mxu0
  %v5221 = vpop.f32.mrb[0].mxu0
  %v5222 = vadd.f32 %v4851, %v5221
  %v5223 = vpop.f32.mrb[0].mxu0
  %5224 = vmatprep.mubr.bf16.mxu0 0
  %5225 = vmatmul.mubr.bf16.gmra.mrb[0].mxu0 %v4953
  %v5226 = vpop.f32.mrb[0].mxu0
  %v5227 = vadd.f32 %v4851, %v5226
  %v5228 = vpop.f32.mrb[0].mxu0
  %v5229 = vpop.f32.mrb[0].mxu0
  %v5230 = vadd.f32 %v4851, %v5229
  %v5231 = vpop.f32.mrb[0].mxu0
  %5232 = vmatprep.mubr.bf16.mxu0 0
  %5233 = vmatmul.mubr.bf16.gmra.mrb[0].mxu0 %v4956
  %v5234 = vpop.f32.mrb[0].mxu0
  %v5235 = vadd.f32 %v4851, %v5234
  %v5236 = vpop.f32.mrb[0].mxu0
  %v5237 = vpop.f32.mrb[0].mxu0
  %v5238 = vadd.f32 %v4851, %v5237
  %v5239 = vpop.f32.mrb[0].mxu0
  %5240 = vmatprep.mubr.bf16.mxu0 0
  %5241 = vmatmul.mubr.bf16.gmra.mrb[0].mxu0 %v4959
  %v5242 = vpop.f32.mrb[0].mxu0
  %v5243 = vadd.f32 %v4851, %v5242
  %v5244 = vpop.f32.mrb[0].mxu0
  %v5245 = vpop.f32.mrb[0].mxu0
  %v5246 = vadd.f32 %v4851, %v5245
  %v5247 = vpop.f32.mrb[0].mxu0
  %5248 = vmatprep.mubr.bf16.mxu0 0
  %5249 = vmatmul.mubr.bf16.gmra.mrb[0].mxu0 %v4962
  %v5250 = vpop.f32.mrb[0].mxu0
  %v5251 = vadd.f32 %v4851, %v5250
  %v5252 = vpop.f32.mrb[0].mxu0
  %v5253 = vpop.f32.mrb[0].mxu0
  %v5254 = vadd.f32 %v4851, %v5253
  %v5255 = vpop.f32.mrb[0].mxu0
  %5256 = vdwg.mxu0
  %vm5257 = vcmp.ge.f32.partialorder %v5003, 0.0
  %vm5258 = vcmp.ge.f32.partialorder %v5006, 0.0
  %vm5259 = vcmp.ge.f32.partialorder %v5011, 0.0
  %vm5260 = vcmp.ge.f32.partialorder %v5014, 0.0
  %vm5261 = vcmp.ge.f32.partialorder %v5019, 0.0
  %vm5262 = vcmp.ge.f32.partialorder %v5022, 0.0
  %vm5263 = vcmp.ge.f32.partialorder %v5027, 0.0
  %vm5264 = vcmp.ge.f32.partialorder %v5030, 0.0
  %vm5265 = vcmp.ge.f32.partialorder %v5035, 0.0
  %vm5266 = vcmp.ge.f32.partialorder %v5038, 0.0
  %vm5267 = vcmp.ge.f32.partialorder %v5043, 0.0
  %vm5268 = vcmp.ge.f32.partialorder %v5046, 0.0
  %vm5269 = vcmp.ge.f32.partialorder %v5051, 0.0
  %vm5270 = vcmp.ge.f32.partialorder %v5054, 0.0
  %vm5271 = vcmp.ge.f32.partialorder %v5059, 0.0
  %vm5272 = vcmp.ge.f32.partialorder %v5062, 0.0
  %vm5273 = vcmp.ge.f32.partialorder %v5067, 0.0
  %vm5274 = vcmp.ge.f32.partialorder %v5070, 0.0
  %vm5275 = vcmp.ge.f32.partialorder %v5075, 0.0
  %vm5276 = vcmp.ge.f32.partialorder %v5078, 0.0
  %vm5277 = vcmp.ge.f32.partialorder %v5083, 0.0
  %vm5278 = vcmp.ge.f32.partialorder %v5086, 0.0
  %vm5279 = vcmp.ge.f32.partialorder %v5091, 0.0
  %vm5280 = vcmp.ge.f32.partialorder %v5094, 0.0
  %vm5281 = vcmp.ge.f32.partialorder %v5099, 0.0
  %vm5282 = vcmp.ge.f32.partialorder %v5102, 0.0
  %vm5283 = vcmp.ge.f32.partialorder %v5107, 0.0
  %vm5284 = vcmp.ge.f32.partialorder %v5110, 0.0
  %vm5285 = vcmp.ge.f32.partialorder %v5115, 0.0
  %vm5286 = vcmp.ge.f32.partialorder %v5118, 0.0
  %vm5287 = vcmp.ge.f32.partialorder %v5123, 0.0
  %vm5288 = vcmp.ge.f32.partialorder %v5126, 0.0
  %vm5289 = vcmp.ge.f32.partialorder %v5131, 0.0
  %vm5290 = vcmp.ge.f32.partialorder %v5134, 0.0
  %vm5291 = vcmp.ge.f32.partialorder %v5139, 0.0
  %vm5292 = vcmp.ge.f32.partialorder %v5142, 0.0
  %vm5293 = vcmp.ge.f32.partialorder %v5147, 0.0
  %vm5294 = vcmp.ge.f32.partialorder %v5150, 0.0
  %vm5295 = vcmp.ge.f32.partialorder %v5155, 0.0
  %vm5296 = vcmp.ge.f32.partialorder %v5158, 0.0
  %vm5297 = vcmp.ge.f32.partialorder %v5163, 0.0
  %vm5298 = vcmp.ge.f32.partialorder %v5166, 0.0
  %vm5299 = vcmp.ge.f32.partialorder %v5171, 0.0
  %vm5300 = vcmp.ge.f32.partialorder %v5174, 0.0
  %vm5301 = vcmp.ge.f32.partialorder %v5179, 0.0
  %vm5302 = vcmp.ge.f32.partialorder %v5182, 0.0
  %vm5303 = vcmp.ge.f32.partialorder %v5187, 0.0
  %vm5304 = vcmp.ge.f32.partialorder %v5190, 0.0
  %vm5305 = vcmp.ge.f32.partialorder %v5195, 0.0
  %vm5306 = vcmp.ge.f32.partialorder %v5198, 0.0
  %vm5307 = vcmp.ge.f32.partialorder %v5203, 0.0
  %vm5308 = vcmp.ge.f32.partialorder %v5206, 0.0
  %vm5309 = vcmp.ge.f32.partialorder %v5211, 0.0
  %vm5310 = vcmp.ge.f32.partialorder %v5214, 0.0
  %vm5311 = vcmp.ge.f32.partialorder %v5219, 0.0
  %vm5312 = vcmp.ge.f32.partialorder %v5222, 0.0
  %vm5313 = vcmp.ge.f32.partialorder %v5227, 0.0
  %vm5314 = vcmp.ge.f32.partialorder %v5230, 0.0
  %vm5315 = vcmp.ge.f32.partialorder %v5235, 0.0
  %vm5316 = vcmp.ge.f32.partialorder %v5238, 0.0
  %vm5317 = vcmp.ge.f32.partialorder %v5243, 0.0
  %vm5318 = vcmp.ge.f32.partialorder %v5246, 0.0
  %vm5319 = vcmp.ge.f32.partialorder %v5251, 0.0
  %vm5320 = vcmp.ge.f32.partialorder %v5254, 0.0
  %v5321 = vmul.f32 %v5003, 0.2
  %v5322 = vmul.f32 %v5006, 0.2
  %v5323 = vmul.f32 %v5011, 0.2
  %v5324 = vmul.f32 %v5014, 0.2
  %v5325 = vmul.f32 %v5019, 0.2
  %v5326 = vmul.f32 %v5022, 0.2
  %v5327 = vmul.f32 %v5027, 0.2
  %v5328 = vmul.f32 %v5030, 0.2
  %v5329 = vmul.f32 %v5035, 0.2
  %v5330 = vmul.f32 %v5038, 0.2
  %v5331 = vmul.f32 %v5043, 0.2
  %v5332 = vmul.f32 %v5046, 0.2
  %v5333 = vmul.f32 %v5051, 0.2
  %v5334 = vmul.f32 %v5054, 0.2
  %v5335 = vmul.f32 %v5059, 0.2
  %v5336 = vmul.f32 %v5062, 0.2
  %v5337 = vmul.f32 %v5067, 0.2
  %v5338 = vmul.f32 %v5070, 0.2
  %v5339 = vmul.f32 %v5075, 0.2
  %v5340 = vmul.f32 %v5078, 0.2
  %v5341 = vmul.f32 %v5083, 0.2
  %v5342 = vmul.f32 %v5086, 0.2
  %v5343 = vmul.f32 %v5091, 0.2
  %v5344 = vmul.f32 %v5094, 0.2
  %v5345 = vmul.f32 %v5099, 0.2
  %v5346 = vmul.f32 %v5102, 0.2
  %v5347 = vmul.f32 %v5107, 0.2
  %v5348 = vmul.f32 %v5110, 0.2
  %v5349 = vmul.f32 %v5115, 0.2
  %v5350 = vmul.f32 %v5118, 0.2
  %v5351 = vmul.f32 %v5123, 0.2
  %v5352 = vmul.f32 %v5126, 0.2
  %v5353 = vmul.f32 %v5131, 0.2
  %v5354 = vmul.f32 %v5134, 0.2
  %v5355 = vmul.f32 %v5139, 0.2
  %v5356 = vmul.f32 %v5142, 0.2
  %v5357 = vmul.f32 %v5147, 0.2
  %v5358 = vmul.f32 %v5150, 0.2
  %v5359 = vmul.f32 %v5155, 0.2
  %v5360 = vmul.f32 %v5158, 0.2
  %v5361 = vmul.f32 %v5163, 0.2
  %v5362 = vmul.f32 %v5166, 0.2
  %v5363 = vmul.f32 %v5171, 0.2
  %v5364 = vmul.f32 %v5174, 0.2
  %v5365 = vmul.f32 %v5179, 0.2
  %v5366 = vmul.f32 %v5182, 0.2
  %v5367 = vmul.f32 %v5187, 0.2
  %v5368 = vmul.f32 %v5190, 0.2
  %v5369 = vmul.f32 %v5195, 0.2
  %v5370 = vmul.f32 %v5198, 0.2
  %v5371 = vmul.f32 %v5203, 0.2
  %v5372 = vmul.f32 %v5206, 0.2
  %v5373 = vmul.f32 %v5211, 0.2
  %v5374 = vmul.f32 %v5214, 0.2
  %v5375 = vmul.f32 %v5219, 0.2
  %v5376 = vmul.f32 %v5222, 0.2
  %v5377 = vmul.f32 %v5227, 0.2
  %v5378 = vmul.f32 %v5230, 0.2
  %v5379 = vmul.f32 %v5235, 0.2
  %v5380 = vmul.f32 %v5238, 0.2
  %v5381 = vmul.f32 %v5243, 0.2
  %v5382 = vmul.f32 %v5246, 0.2
  %v5383 = vmul.f32 %v5251, 0.2
  %v5384 = vmul.f32 %v5254, 0.2
  %v5385 = vsel %vm5257, %v5003, %v5321
  %v5386 = vsel %vm5258, %v5006, %v5322
  %v5387 = vsel %vm5259, %v5011, %v5323
  %v5388 = vsel %vm5260, %v5014, %v5324
  %v5389 = vsel %vm5261, %v5019, %v5325
  %v5390 = vsel %vm5262, %v5022, %v5326
  %v5391 = vsel %vm5263, %v5027, %v5327
  %v5392 = vsel %vm5264, %v5030, %v5328
  %v5393 = vsel %vm5265, %v5035, %v5329
  %v5394 = vsel %vm5266, %v5038, %v5330
  %v5395 = vsel %vm5267, %v5043, %v5331
  %v5396 = vsel %vm5268, %v5046, %v5332
  %v5397 = vsel %vm5269, %v5051, %v5333
  %v5398 = vsel %vm5270, %v5054, %v5334
  %v5399 = vsel %vm5271, %v5059, %v5335
  %v5400 = vsel %vm5272, %v5062, %v5336
  %v5401 = vsel %vm5273, %v5067, %v5337
  %v5402 = vsel %vm5274, %v5070, %v5338
  %v5403 = vsel %vm5275, %v5075, %v5339
  %v5404 = vsel %vm5276, %v5078, %v5340
  %v5405 = vsel %vm5277, %v5083, %v5341
  %v5406 = vsel %vm5278, %v5086, %v5342
  %v5407 = vsel %vm5279, %v5091, %v5343
  %v5408 = vsel %vm5280, %v5094, %v5344
  %v5409 = vsel %vm5281, %v5099, %v5345
  %v5410 = vsel %vm5282, %v5102, %v5346
  %v5411 = vsel %vm5283, %v5107, %v5347
  %v5412 = vsel %vm5284, %v5110, %v5348
  %v5413 = vsel %vm5285, %v5115, %v5349
  %v5414 = vsel %vm5286, %v5118, %v5350
  %v5415 = vsel %vm5287, %v5123, %v5351
  %v5416 = vsel %vm5288, %v5126, %v5352
  %v5417 = vsel %vm5289, %v5131, %v5353
  %v5418 = vsel %vm5290, %v5134, %v5354
  %v5419 = vsel %vm5291, %v5139, %v5355
  %v5420 = vsel %vm5292, %v5142, %v5356
  %v5421 = vsel %vm5293, %v5147, %v5357
  %v5422 = vsel %vm5294, %v5150, %v5358
  %v5423 = vsel %vm5295, %v5155, %v5359
  %v5424 = vsel %vm5296, %v5158, %v5360
  %v5425 = vsel %vm5297, %v5163, %v5361
  %v5426 = vsel %vm5298, %v5166, %v5362
  %v5427 = vsel %vm5299, %v5171, %v5363
  %v5428 = vsel %vm5300, %v5174, %v5364
  %v5429 = vsel %vm5301, %v5179, %v5365
  %v5430 = vsel %vm5302, %v5182, %v5366
  %v5431 = vsel %vm5303, %v5187, %v5367
  %v5432 = vsel %vm5304, %v5190, %v5368
  %v5433 = vsel %vm5305, %v5195, %v5369
  %v5434 = vsel %vm5306, %v5198, %v5370
  %v5435 = vsel %vm5307, %v5203, %v5371
  %v5436 = vsel %vm5308, %v5206, %v5372
  %v5437 = vsel %vm5309, %v5211, %v5373
  %v5438 = vsel %vm5310, %v5214, %v5374
  %v5439 = vsel %vm5311, %v5219, %v5375
  %v5440 = vsel %vm5312, %v5222, %v5376
  %v5441 = vsel %vm5313, %v5227, %v5377
  %v5442 = vsel %vm5314, %v5230, %v5378
  %v5443 = vsel %vm5315, %v5235, %v5379
  %v5444 = vsel %vm5316, %v5238, %v5380
  %v5445 = vsel %vm5317, %v5243, %v5381
  %v5446 = vsel %vm5318, %v5246, %v5382
  %v5447 = vsel %vm5319, %v5251, %v5383
  %v5448 = vsel %vm5320, %v5254, %v5384
  %s5449 = scalar_lea.vmem [#allocation3], 24
  %5450 = vst.msk [vmem:[%s5449 + $0x1] sm:$0xff] %vm48, %v5385
  %5451 = vst.msk [vmem:[%s5449 + $0x9] sm:$0xff] %vm48, %v5386
  %5452 = vst.msk [vmem:[%s5449 + $0x19] sm:$0xff] %vm48, %v5387
  %5453 = vst.msk [vmem:[%s5449 + $0x21] sm:$0xff] %vm48, %v5388
  %5454 = vst.msk [vmem:[%s5449 + $0x31] sm:$0xff] %vm48, %v5389
  %5455 = vst.msk [vmem:[%s5449 + $0x39] sm:$0xff] %vm48, %v5390
  %5456 = vst.msk [vmem:[%s5449 + $0x49] sm:$0xff] %vm48, %v5391
  %5457 = vst.msk [vmem:[%s5449 + $0x51] sm:$0xff] %vm48, %v5392
  %5458 = vst.msk [vmem:[%s5449 + $0x61] sm:$0xff] %vm48, %v5393
  %5459 = vst.msk [vmem:[%s5449 + $0x69] sm:$0xff] %vm48, %v5394
  %5460 = vst.msk [vmem:[%s5449 + $0x79] sm:$0xff] %vm48, %v5395
  %5461 = vst.msk [vmem:[%s5449 + $0x81] sm:$0xff] %vm48, %v5396
  %5462 = vst.msk [vmem:[%s5449 + $0x91] sm:$0xff] %vm48, %v5397
  %5463 = vst.msk [vmem:[%s5449 + $0x99] sm:$0xff] %vm48, %v5398
  %5464 = vst.msk [vmem:[%s5449 + $0xa9] sm:$0xff] %vm48, %v5399
  %5465 = vst.msk [vmem:[%s5449 + $0xb1] sm:$0xff] %vm48, %v5400
  %5466 = vst.msk [vmem:[%s5449 + $0xc1] sm:$0xff] %vm48, %v5401
  %5467 = vst.msk [vmem:[%s5449 + $0xc9] sm:$0xff] %vm48, %v5402
  %5468 = vst.msk [vmem:[%s5449 + $0xd9] sm:$0xff] %vm48, %v5403
  %5469 = vst.msk [vmem:[%s5449 + $0xe1] sm:$0xff] %vm48, %v5404
  %5470 = vst.msk [vmem:[%s5449 + $0xf1] sm:$0xff] %vm48, %v5405
  %5471 = vst.msk [vmem:[%s5449 + $0xf9] sm:$0xff] %vm48, %v5406
  %5472 = vst.msk [vmem:[%s5449 + $0x109] sm:$0xff] %vm48, %v5407
  %5473 = vst.msk [vmem:[%s5449 + $0x111] sm:$0xff] %vm48, %v5408
  %5474 = vst.msk [vmem:[%s5449 + $0x121] sm:$0xff] %vm48, %v5409
  %5475 = vst.msk [vmem:[%s5449 + $0x129] sm:$0xff] %vm48, %v5410
  %5476 = vst.msk [vmem:[%s5449 + $0x139] sm:$0xff] %vm48, %v5411
  %5477 = vst.msk [vmem:[%s5449 + $0x141] sm:$0xff] %vm48, %v5412
  %5478 = vst.msk [vmem:[%s5449 + $0x151] sm:$0xff] %vm48, %v5413
  %5479 = vst.msk [vmem:[%s5449 + $0x159] sm:$0xff] %vm48, %v5414
  %5480 = vst.msk [vmem:[%s5449 + $0x169] sm:$0xff] %vm48, %v5415
  %5481 = vst.msk [vmem:[%s5449 + $0x171] sm:$0xff] %vm48, %v5416
  %5482 = vst.msk [vmem:[%s5449 + $0x1b1] sm:$0xff] %vm48, %v5417
  %5483 = vst.msk [vmem:[%s5449 + $0x1b9] sm:$0xff] %vm48, %v5418
  %5484 = vst.msk [vmem:[%s5449 + $0x1c9] sm:$0xff] %vm48, %v5419
  %5485 = vst.msk [vmem:[%s5449 + $0x1d1] sm:$0xff] %vm48, %v5420
  %5486 = vst.msk [vmem:[%s5449 + $0x1e1] sm:$0xff] %vm48, %v5421
  %5487 = vst.msk [vmem:[%s5449 + $0x1e9] sm:$0xff] %vm48, %v5422
  %5488 = vst.msk [vmem:[%s5449 + $0x1f9] sm:$0xff] %vm48, %v5423
  %5489 = vst.msk [vmem:[%s5449 + $0x201] sm:$0xff] %vm48, %v5424
  %5490 = vst.msk [vmem:[%s5449 + $0x211] sm:$0xff] %vm48, %v5425
  %5491 = vst.msk [vmem:[%s5449 + $0x219] sm:$0xff] %vm48, %v5426
  %5492 = vst.msk [vmem:[%s5449 + $0x229] sm:$0xff] %vm48, %v5427
  %5493 = vst.msk [vmem:[%s5449 + $0x231] sm:$0xff] %vm48, %v5428
  %5494 = vst.msk [vmem:[%s5449 + $0x241] sm:$0xff] %vm48, %v5429
  %5495 = vst.msk [vmem:[%s5449 + $0x249] sm:$0xff] %vm48, %v5430
  %5496 = vst.msk [vmem:[%s5449 + $0x259] sm:$0xff] %vm48, %v5431
  %5497 = vst.msk [vmem:[%s5449 + $0x261] sm:$0xff] %vm48, %v5432
  %5498 = vst.msk [vmem:[%s5449 + $0x271] sm:$0xff] %vm48, %v5433
  %5499 = vst.msk [vmem:[%s5449 + $0x279] sm:$0xff] %vm48, %v5434
  %5500 = vst.msk [vmem:[%s5449 + $0x289] sm:$0xff] %vm48, %v5435
  %5501 = vst.msk [vmem:[%s5449 + $0x291] sm:$0xff] %vm48, %v5436
  %5502 = vst.msk [vmem:[%s5449 + $0x2a1] sm:$0xff] %vm48, %v5437
  %5503 = vst.msk [vmem:[%s5449 + $0x2a9] sm:$0xff] %vm48, %v5438
  %5504 = vst.msk [vmem:[%s5449 + $0x2b9] sm:$0xff] %vm48, %v5439
  %5505 = vst.msk [vmem:[%s5449 + $0x2c1] sm:$0xff] %vm48, %v5440
  %5506 = vst.msk [vmem:[%s5449 + $0x2d1] sm:$0xff] %vm48, %v5441
  %5507 = vst.msk [vmem:[%s5449 + $0x2d9] sm:$0xff] %vm48, %v5442
  %5508 = vst.msk [vmem:[%s5449 + $0x2e9] sm:$0xff] %vm48, %v5443
  %5509 = vst.msk [vmem:[%s5449 + $0x2f1] sm:$0xff] %vm48, %v5444
  %5510 = vst.msk [vmem:[%s5449 + $0x301] sm:$0xff] %vm48, %v5445
  %5511 = vst.msk [vmem:[%s5449 + $0x309] sm:$0xff] %vm48, %v5446
  %5512 = vst.msk [vmem:[%s5449 + $0x319] sm:$0xff] %vm48, %v5447
  %5513 = vst.msk [vmem:[%s5449 + $0x321] sm:$0xff] %vm48, %v5448
  %v5514 = vld [vmem:[#allocation3] ss:$2 sm:$0xff]
  %s5515 = scalar_lea.vmem [#allocation3], 24
  %v5516 = vld [vmem:[%s5515] ss:$2 sm:$0xff]
  %s5517 = scalar_lea.vmem [#allocation3], 48
  %v5518 = vld [vmem:[%s5517] ss:$2 sm:$0xff]
  %s5519 = scalar_lea.vmem [#allocation3], 72
  %v5520 = vld [vmem:[%s5519] ss:$2 sm:$0xff]
  %s5521 = scalar_lea.vmem [#allocation3], 96
  %v5522 = vld [vmem:[%s5521] ss:$2 sm:$0xff]
  %s5523 = scalar_lea.vmem [#allocation3], 120
  %v5524 = vld [vmem:[%s5523] ss:$2 sm:$0xff]
  %s5525 = scalar_lea.vmem [#allocation3], 144
  %v5526 = vld [vmem:[%s5525] ss:$2 sm:$0xff]
  %s5527 = scalar_lea.vmem [#allocation3], 168
  %v5528 = vld [vmem:[%s5527] ss:$2 sm:$0xff]
  %s5529 = scalar_lea.vmem [#allocation3], 192
  %v5530 = vld [vmem:[%s5529] ss:$2 sm:$0xff]
  %s5531 = scalar_lea.vmem [#allocation3], 216
  %v5532 = vld [vmem:[%s5531] ss:$2 sm:$0xff]
  %s5533 = scalar_lea.vmem [#allocation3], 240
  %v5534 = vld [vmem:[%s5533] ss:$2 sm:$0xff]
  %s5535 = scalar_lea.vmem [#allocation3], 264
  %v5536 = vld [vmem:[%s5535] ss:$2 sm:$0xff]
  %s5537 = scalar_lea.vmem [#allocation3], 288
  %v5538 = vld [vmem:[%s5537] ss:$2 sm:$0xff]
  %s5539 = scalar_lea.vmem [#allocation3], 312
  %v5540 = vld [vmem:[%s5539] ss:$2 sm:$0xff]
  %s5541 = scalar_lea.vmem [#allocation3], 336
  %v5542 = vld [vmem:[%s5541] ss:$2 sm:$0xff]
  %s5543 = scalar_lea.vmem [#allocation3], 360
  %v5544 = vld [vmem:[%s5543] ss:$2 sm:$0xff]
  %s5545 = scalar_lea.vmem [#allocation3], 384
  %v5546 = vld [vmem:[%s5545] ss:$2 sm:$0xff]
  %s5547 = scalar_lea.vmem [#allocation3], 408
  %v5548 = vld [vmem:[%s5547] ss:$2 sm:$0xff]
  %s5549 = scalar_lea.vmem [#allocation3], 432
  %v5550 = vld [vmem:[%s5549] ss:$2 sm:$0xff]
  %s5551 = scalar_lea.vmem [#allocation3], 456
  %v5552 = vld [vmem:[%s5551] ss:$2 sm:$0xff]
  %s5553 = scalar_lea.vmem [#allocation3], 480
  %v5554 = vld [vmem:[%s5553] ss:$2 sm:$0xff]
  %s5555 = scalar_lea.vmem [#allocation3], 504
  %v5556 = vld [vmem:[%s5555] ss:$2 sm:$0xff]
  %s5557 = scalar_lea.vmem [#allocation3], 528
  %v5558 = vld [vmem:[%s5557] ss:$2 sm:$0xff]
  %s5559 = scalar_lea.vmem [#allocation3], 552
  %v5560 = vld [vmem:[%s5559] ss:$2 sm:$0xff]
  %s5561 = scalar_lea.vmem [#allocation3], 576
  %v5562 = vld [vmem:[%s5561] ss:$2 sm:$0xff]
  %s5563 = scalar_lea.vmem [#allocation3], 600
  %v5564 = vld [vmem:[%s5563] ss:$2 sm:$0xff]
  %s5565 = scalar_lea.vmem [#allocation3], 624
  %v5566 = vld [vmem:[%s5565] ss:$2 sm:$0xff]
  %s5567 = scalar_lea.vmem [#allocation3], 648
  %v5568 = vld [vmem:[%s5567] ss:$2 sm:$0xff]
  %s5569 = scalar_lea.vmem [#allocation3], 672
  %v5570 = vld [vmem:[%s5569] ss:$2 sm:$0xff]
  %s5571 = scalar_lea.vmem [#allocation3], 696
  %v5572 = vld [vmem:[%s5571] ss:$2 sm:$0xff]
  %s5573 = scalar_lea.vmem [#allocation3], 720
  %v5574 = vld [vmem:[%s5573] ss:$2 sm:$0xff]
  %s5575 = scalar_lea.vmem [#allocation3], 744
  %v5576 = vld [vmem:[%s5575] ss:$2 sm:$0xff]
  %s5577 = scalar_lea.vmem [#allocation3], 768
  %v5578 = vld [vmem:[%s5577] ss:$2 sm:$0xff]
  %s5579 = scalar_lea.vmem [#allocation3], 792
  %v5580 = vld [vmem:[%s5579] ss:$2 sm:$0xff]
  %s5581 = scalar_lea.vmem [#allocation3], 816
  %v5582 = vld [vmem:[%s5581] ss:$2 sm:$0xff]
  %s5583 = scalar_lea.vmem [#allocation3], 840
  %v5584 = vld [vmem:[%s5583] ss:$2 sm:$0xff]
  %s5585 = scalar_lea.vmem [#allocation3], 1
  %v5586 = vld [vmem:[%s5585] ss:$2 sm:$0xff]
  %s5587 = scalar_lea.vmem [#allocation3], 25
  %v5588 = vld [vmem:[%s5587] ss:$2 sm:$0xff]
  %s5589 = scalar_lea.vmem [#allocation3], 49
  %v5590 = vld [vmem:[%s5589] ss:$2 sm:$0xff]
  %s5591 = scalar_lea.vmem [#allocation3], 73
  %v5592 = vld [vmem:[%s5591] ss:$2 sm:$0xff]
  %s5593 = scalar_lea.vmem [#allocation3], 97
  %v5594 = vld [vmem:[%s5593] ss:$2 sm:$0xff]
  %s5595 = scalar_lea.vmem [#allocation3], 121
  %v5596 = vld [vmem:[%s5595] ss:$2 sm:$0xff]
  %s5597 = scalar_lea.vmem [#allocation3], 145
  %v5598 = vld [vmem:[%s5597] ss:$2 sm:$0xff]
  %s5599 = scalar_lea.vmem [#allocation3], 169
  %v5600 = vld [vmem:[%s5599] ss:$2 sm:$0xff]
  %s5601 = scalar_lea.vmem [#allocation3], 193
  %v5602 = vld [vmem:[%s5601] ss:$2 sm:$0xff]
  %s5603 = scalar_lea.vmem [#allocation3], 217
  %v5604 = vld [vmem:[%s5603] ss:$2 sm:$0xff]
  %s5605 = scalar_lea.vmem [#allocation3], 241
  %v5606 = vld [vmem:[%s5605] ss:$2 sm:$0xff]
  %s5607 = scalar_lea.vmem [#allocation3], 265
  %v5608 = vld [vmem:[%s5607] ss:$2 sm:$0xff]
  %s5609 = scalar_lea.vmem [#allocation3], 289
  %v5610 = vld [vmem:[%s5609] ss:$2 sm:$0xff]
  %s5611 = scalar_lea.vmem [#allocation3], 313
  %v5612 = vld [vmem:[%s5611] ss:$2 sm:$0xff]
  %s5613 = scalar_lea.vmem [#allocation3], 337
  %v5614 = vld [vmem:[%s5613] ss:$2 sm:$0xff]
  %s5615 = scalar_lea.vmem [#allocation3], 361
  %v5616 = vld [vmem:[%s5615] ss:$2 sm:$0xff]
  %s5617 = scalar_lea.vmem [#allocation3], 385
  %v5618 = vld [vmem:[%s5617] ss:$2 sm:$0xff]
  %s5619 = scalar_lea.vmem [#allocation3], 409
  %v5620 = vld [vmem:[%s5619] ss:$2 sm:$0xff]
  %s5621 = scalar_lea.vmem [#allocation3], 433
  %v5622 = vld [vmem:[%s5621] ss:$2 sm:$0xff]
  %s5623 = scalar_lea.vmem [#allocation3], 457
  %v5624 = vld [vmem:[%s5623] ss:$2 sm:$0xff]
  %s5625 = scalar_lea.vmem [#allocation3], 481
  %v5626 = vld [vmem:[%s5625] ss:$2 sm:$0xff]
  %s5627 = scalar_lea.vmem [#allocation3], 505
  %v5628 = vld [vmem:[%s5627] ss:$2 sm:$0xff]
  %s5629 = scalar_lea.vmem [#allocation3], 529
  %v5630 = vld [vmem:[%s5629] ss:$2 sm:$0xff]
  %s5631 = scalar_lea.vmem [#allocation3], 553
  %v5632 = vld [vmem:[%s5631] ss:$2 sm:$0xff]
  %s5633 = scalar_lea.vmem [#allocation3], 577
  %v5634 = vld [vmem:[%s5633] ss:$2 sm:$0xff]
  %s5635 = scalar_lea.vmem [#allocation3], 601
  %v5636 = vld [vmem:[%s5635] ss:$2 sm:$0xff]
  %s5637 = scalar_lea.vmem [#allocation3], 625
  %v5638 = vld [vmem:[%s5637] ss:$2 sm:$0xff]
  %s5639 = scalar_lea.vmem [#allocation3], 649
  %v5640 = vld [vmem:[%s5639] ss:$2 sm:$0xff]
  %s5641 = scalar_lea.vmem [#allocation3], 673
  %v5642 = vld [vmem:[%s5641] ss:$2 sm:$0xff]
  %s5643 = scalar_lea.vmem [#allocation3], 697
  %v5644 = vld [vmem:[%s5643] ss:$2 sm:$0xff]
  %s5645 = scalar_lea.vmem [#allocation3], 721
  %v5646 = vld [vmem:[%s5645] ss:$2 sm:$0xff]
  %s5647 = scalar_lea.vmem [#allocation3], 745
  %v5648 = vld [vmem:[%s5647] ss:$2 sm:$0xff]
  %s5649 = scalar_lea.vmem [#allocation3], 769
  %v5650 = vld [vmem:[%s5649] ss:$2 sm:$0xff]
  %s5651 = scalar_lea.vmem [#allocation3], 793
  %v5652 = vld [vmem:[%s5651] ss:$2 sm:$0xff]
  %s5653 = scalar_lea.vmem [#allocation3], 817
  %v5654 = vld [vmem:[%s5653] ss:$2 sm:$0xff]
  %s5655 = scalar_lea.vmem [#allocation3], 841
  %v5656 = vld [vmem:[%s5655] ss:$2 sm:$0xff]
  %v5657 = vmul.f32 %v5586, 3.0
  %v5658 = vmul.f32 %v5588, 3.0
  %v5659 = vmul.f32 %v5590, 3.0
  %v5660 = vmul.f32 %v5592, 3.0
  %v5661 = vmul.f32 %v5594, 3.0
  %v5662 = vmul.f32 %v5596, 3.0
  %v5663 = vmul.f32 %v5598, 3.0
  %v5664 = vmul.f32 %v5600, 3.0
  %v5665 = vmul.f32 %v5602, 3.0
  %v5666 = vmul.f32 %v5604, 3.0
  %v5667 = vmul.f32 %v5606, 3.0
  %v5668 = vmul.f32 %v5608, 3.0
  %v5669 = vmul.f32 %v5610, 3.0
  %v5670 = vmul.f32 %v5612, 3.0
  %v5671 = vmul.f32 %v5614, 3.0
  %v5672 = vmul.f32 %v5616, 3.0
  %v5673 = vmul.f32 %v5618, 3.0
  %v5674 = vmul.f32 %v5620, 3.0
  %v5675 = vmul.f32 %v5622, 3.0
  %v5676 = vmul.f32 %v5624, 3.0
  %v5677 = vmul.f32 %v5626, 3.0
  %v5678 = vmul.f32 %v5628, 3.0
  %v5679 = vmul.f32 %v5630, 3.0
  %v5680 = vmul.f32 %v5632, 3.0
  %v5681 = vmul.f32 %v5634, 3.0
  %v5682 = vmul.f32 %v5636, 3.0
  %v5683 = vmul.f32 %v5638, 3.0
  %v5684 = vmul.f32 %v5640, 3.0
  %v5685 = vmul.f32 %v5642, 3.0
  %v5686 = vmul.f32 %v5644, 3.0
  %v5687 = vmul.f32 %v5646, 3.0
  %v5688 = vmul.f32 %v5648, 3.0
  %v5689 = vmul.f32 %v5650, 3.0
  %v5690 = vmul.f32 %v5652, 3.0
  %v5691 = vmul.f32 %v5654, 3.0
  %v5692 = vmul.f32 %v5656, 3.0
  %v5693 = vadd.f32 %v5514, %v5657
  %v5694 = vadd.f32 %v5516, %v5658
  %v5695 = vadd.f32 %v5518, %v5659
  %v5696 = vadd.f32 %v5520, %v5660
  %v5697 = vadd.f32 %v5522, %v5661
  %v5698 = vadd.f32 %v5524, %v5662
  %v5699 = vadd.f32 %v5526, %v5663
  %v5700 = vadd.f32 %v5528, %v5664
  %v5701 = vadd.f32 %v5530, %v5665
  %v5702 = vadd.f32 %v5532, %v5666
  %v5703 = vadd.f32 %v5534, %v5667
  %v5704 = vadd.f32 %v5536, %v5668
  %v5705 = vadd.f32 %v5538, %v5669
  %v5706 = vadd.f32 %v5540, %v5670
  %v5707 = vadd.f32 %v5542, %v5671
  %v5708 = vadd.f32 %v5544, %v5672
  %v5709 = vadd.f32 %v5546, %v5673
  %v5710 = vadd.f32 %v5548, %v5674
  %v5711 = vadd.f32 %v5550, %v5675
  %v5712 = vadd.f32 %v5552, %v5676
  %v5713 = vadd.f32 %v5554, %v5677
  %v5714 = vadd.f32 %v5556, %v5678
  %v5715 = vadd.f32 %v5558, %v5679
  %v5716 = vadd.f32 %v5560, %v5680
  %v5717 = vadd.f32 %v5562, %v5681
  %v5718 = vadd.f32 %v5564, %v5682
  %v5719 = vadd.f32 %v5566, %v5683
  %v5720 = vadd.f32 %v5568, %v5684
  %v5721 = vadd.f32 %v5570, %v5685
  %v5722 = vadd.f32 %v5572, %v5686
  %v5723 = vadd.f32 %v5574, %v5687
  %v5724 = vadd.f32 %v5576, %v5688
  %v5725 = vadd.f32 %v5578, %v5689
  %v5726 = vadd.f32 %v5580, %v5690
  %v5727 = vadd.f32 %v5582, %v5691
  %v5728 = vadd.f32 %v5584, %v5692
  %s5729 = scalar_lea.vmem [#allocation3], 2
  %v5730 = vld [vmem:[%s5729] ss:$2 sm:$0xff]
  %s5731 = scalar_lea.vmem [#allocation3], 26
  %v5732 = vld [vmem:[%s5731] ss:$2 sm:$0xff]
  %s5733 = scalar_lea.vmem [#allocation3], 50
  %v5734 = vld [vmem:[%s5733] ss:$2 sm:$0xff]
  %s5735 = scalar_lea.vmem [#allocation3], 74
  %v5736 = vld [vmem:[%s5735] ss:$2 sm:$0xff]
  %s5737 = scalar_lea.vmem [#allocation3], 98
  %v5738 = vld [vmem:[%s5737] ss:$2 sm:$0xff]
  %s5739 = scalar_lea.vmem [#allocation3], 122
  %v5740 = vld [vmem:[%s5739] ss:$2 sm:$0xff]
  %s5741 = scalar_lea.vmem [#allocation3], 146
  %v5742 = vld [vmem:[%s5741] ss:$2 sm:$0xff]
  %s5743 = scalar_lea.vmem [#allocation3], 170
  %v5744 = vld [vmem:[%s5743] ss:$2 sm:$0xff]
  %s5745 = scalar_lea.vmem [#allocation3], 194
  %v5746 = vld [vmem:[%s5745] ss:$2 sm:$0xff]
  %s5747 = scalar_lea.vmem [#allocation3], 218
  %v5748 = vld [vmem:[%s5747] ss:$2 sm:$0xff]
  %s5749 = scalar_lea.vmem [#allocation3], 242
  %v5750 = vld [vmem:[%s5749] ss:$2 sm:$0xff]
  %s5751 = scalar_lea.vmem [#allocation3], 266
  %v5752 = vld [vmem:[%s5751] ss:$2 sm:$0xff]
  %s5753 = scalar_lea.vmem [#allocation3], 290
  %v5754 = vld [vmem:[%s5753] ss:$2 sm:$0xff]
  %s5755 = scalar_lea.vmem [#allocation3], 314
  %v5756 = vld [vmem:[%s5755] ss:$2 sm:$0xff]
  %s5757 = scalar_lea.vmem [#allocation3], 338
  %v5758 = vld [vmem:[%s5757] ss:$2 sm:$0xff]
  %s5759 = scalar_lea.vmem [#allocation3], 362
  %v5760 = vld [vmem:[%s5759] ss:$2 sm:$0xff]
  %s5761 = scalar_lea.vmem [#allocation3], 386
  %v5762 = vld [vmem:[%s5761] ss:$2 sm:$0xff]
  %s5763 = scalar_lea.vmem [#allocation3], 410
  %v5764 = vld [vmem:[%s5763] ss:$2 sm:$0xff]
  %s5765 = scalar_lea.vmem [#allocation3], 434
  %v5766 = vld [vmem:[%s5765] ss:$2 sm:$0xff]
  %s5767 = scalar_lea.vmem [#allocation3], 458
  %v5768 = vld [vmem:[%s5767] ss:$2 sm:$0xff]
  %s5769 = scalar_lea.vmem [#allocation3], 482
  %v5770 = vld [vmem:[%s5769] ss:$2 sm:$0xff]
  %s5771 = scalar_lea.vmem [#allocation3], 506
  %v5772 = vld [vmem:[%s5771] ss:$2 sm:$0xff]
  %s5773 = scalar_lea.vmem [#allocation3], 530
  %v5774 = vld [vmem:[%s5773] ss:$2 sm:$0xff]
  %s5775 = scalar_lea.vmem [#allocation3], 554
  %v5776 = vld [vmem:[%s5775] ss:$2 sm:$0xff]
  %s5777 = scalar_lea.vmem [#allocation3], 578
  %v5778 = vld [vmem:[%s5777] ss:$2 sm:$0xff]
  %s5779 = scalar_lea.vmem [#allocation3], 602
  %v5780 = vld [vmem:[%s5779] ss:$2 sm:$0xff]
  %s5781 = scalar_lea.vmem [#allocation3], 626
  %v5782 = vld [vmem:[%s5781] ss:$2 sm:$0xff]
  %s5783 = scalar_lea.vmem [#allocation3], 650
  %v5784 = vld [vmem:[%s5783] ss:$2 sm:$0xff]
  %s5785 = scalar_lea.vmem [#allocation3], 674
  %v5786 = vld [vmem:[%s5785] ss:$2 sm:$0xff]
  %s5787 = scalar_lea.vmem [#allocation3], 698
  %v5788 = vld [vmem:[%s5787] ss:$2 sm:$0xff]
  %s5789 = scalar_lea.vmem [#allocation3], 722
  %v5790 = vld [vmem:[%s5789] ss:$2 sm:$0xff]
  %s5791 = scalar_lea.vmem [#allocation3], 746
  %v5792 = vld [vmem:[%s5791] ss:$2 sm:$0xff]
  %s5793 = scalar_lea.vmem [#allocation3], 770
  %v5794 = vld [vmem:[%s5793] ss:$2 sm:$0xff]
  %s5795 = scalar_lea.vmem [#allocation3], 794
  %v5796 = vld [vmem:[%s5795] ss:$2 sm:$0xff]
  %s5797 = scalar_lea.vmem [#allocation3], 818
  %v5798 = vld [vmem:[%s5797] ss:$2 sm:$0xff]
  %s5799 = scalar_lea.vmem [#allocation3], 842
  %v5800 = vld [vmem:[%s5799] ss:$2 sm:$0xff]
  %v5801 = vmul.f32 %v5730, 3.0
  %v5802 = vmul.f32 %v5732, 3.0
  %v5803 = vmul.f32 %v5734, 3.0
  %v5804 = vmul.f32 %v5736, 3.0
  %v5805 = vmul.f32 %v5738, 3.0
  %v5806 = vmul.f32 %v5740, 3.0
  %v5807 = vmul.f32 %v5742, 3.0
  %v5808 = vmul.f32 %v5744, 3.0
  %v5809 = vmul.f32 %v5746, 3.0
  %v5810 = vmul.f32 %v5748, 3.0
  %v5811 = vmul.f32 %v5750, 3.0
  %v5812 = vmul.f32 %v5752, 3.0
  %v5813 = vmul.f32 %v5754, 3.0
  %v5814 = vmul.f32 %v5756, 3.0
  %v5815 = vmul.f32 %v5758, 3.0
  %v5816 = vmul.f32 %v5760, 3.0
  %v5817 = vmul.f32 %v5762, 3.0
  %v5818 = vmul.f32 %v5764, 3.0
  %v5819 = vmul.f32 %v5766, 3.0
  %v5820 = vmul.f32 %v5768, 3.0
  %v5821 = vmul.f32 %v5770, 3.0
  %v5822 = vmul.f32 %v5772, 3.0
  %v5823 = vmul.f32 %v5774, 3.0
  %v5824 = vmul.f32 %v5776, 3.0
  %v5825 = vmul.f32 %v5778, 3.0
  %v5826 = vmul.f32 %v5780, 3.0
  %v5827 = vmul.f32 %v5782, 3.0
  %v5828 = vmul.f32 %v5784, 3.0
  %v5829 = vmul.f32 %v5786, 3.0
  %v5830 = vmul.f32 %v5788, 3.0
  %v5831 = vmul.f32 %v5790, 3.0
  %v5832 = vmul.f32 %v5792, 3.0
  %v5833 = vmul.f32 %v5794, 3.0
  %v5834 = vmul.f32 %v5796, 3.0
  %v5835 = vmul.f32 %v5798, 3.0
  %v5836 = vmul.f32 %v5800, 3.0
  %v5837 = vadd.f32 %v5693, %v5801
  %v5838 = vadd.f32 %v5694, %v5802
  %v5839 = vadd.f32 %v5695, %v5803
  %v5840 = vadd.f32 %v5696, %v5804
  %v5841 = vadd.f32 %v5697, %v5805
  %v5842 = vadd.f32 %v5698, %v5806
  %v5843 = vadd.f32 %v5699, %v5807
  %v5844 = vadd.f32 %v5700, %v5808
  %v5845 = vadd.f32 %v5701, %v5809
  %v5846 = vadd.f32 %v5702, %v5810
  %v5847 = vadd.f32 %v5703, %v5811
  %v5848 = vadd.f32 %v5704, %v5812
  %v5849 = vadd.f32 %v5705, %v5813
  %v5850 = vadd.f32 %v5706, %v5814
  %v5851 = vadd.f32 %v5707, %v5815
  %v5852 = vadd.f32 %v5708, %v5816
  %v5853 = vadd.f32 %v5709, %v5817
  %v5854 = vadd.f32 %v5710, %v5818
  %v5855 = vadd.f32 %v5711, %v5819
  %v5856 = vadd.f32 %v5712, %v5820
  %v5857 = vadd.f32 %v5713, %v5821
  %v5858 = vadd.f32 %v5714, %v5822
  %v5859 = vadd.f32 %v5715, %v5823
  %v5860 = vadd.f32 %v5716, %v5824
  %v5861 = vadd.f32 %v5717, %v5825
  %v5862 = vadd.f32 %v5718, %v5826
  %v5863 = vadd.f32 %v5719, %v5827
  %v5864 = vadd.f32 %v5720, %v5828
  %v5865 = vadd.f32 %v5721, %v5829
  %v5866 = vadd.f32 %v5722, %v5830
  %v5867 = vadd.f32 %v5723, %v5831
  %v5868 = vadd.f32 %v5724, %v5832
  %v5869 = vadd.f32 %v5725, %v5833
  %v5870 = vadd.f32 %v5726, %v5834
  %v5871 = vadd.f32 %v5727, %v5835
  %v5872 = vadd.f32 %v5728, %v5836
  %s5873 = scalar_lea.vmem [#allocation3], 3
  %v5874 = vld [vmem:[%s5873] ss:$2 sm:$0xff]
  %s5875 = scalar_lea.vmem [#allocation3], 27
  %v5876 = vld [vmem:[%s5875] ss:$2 sm:$0xff]
  %s5877 = scalar_lea.vmem [#allocation3], 51
  %v5878 = vld [vmem:[%s5877] ss:$2 sm:$0xff]
  %s5879 = scalar_lea.vmem [#allocation3], 75
  %v5880 = vld [vmem:[%s5879] ss:$2 sm:$0xff]
  %s5881 = scalar_lea.vmem [#allocation3], 99
  %v5882 = vld [vmem:[%s5881] ss:$2 sm:$0xff]
  %s5883 = scalar_lea.vmem [#allocation3], 123
  %v5884 = vld [vmem:[%s5883] ss:$2 sm:$0xff]
  %s5885 = scalar_lea.vmem [#allocation3], 147
  %v5886 = vld [vmem:[%s5885] ss:$2 sm:$0xff]
  %s5887 = scalar_lea.vmem [#allocation3], 171
  %v5888 = vld [vmem:[%s5887] ss:$2 sm:$0xff]
  %s5889 = scalar_lea.vmem [#allocation3], 195
  %v5890 = vld [vmem:[%s5889] ss:$2 sm:$0xff]
  %s5891 = scalar_lea.vmem [#allocation3], 219
  %v5892 = vld [vmem:[%s5891] ss:$2 sm:$0xff]
  %s5893 = scalar_lea.vmem [#allocation3], 243
  %v5894 = vld [vmem:[%s5893] ss:$2 sm:$0xff]
  %s5895 = scalar_lea.vmem [#allocation3], 267
  %v5896 = vld [vmem:[%s5895] ss:$2 sm:$0xff]
  %s5897 = scalar_lea.vmem [#allocation3], 291
  %v5898 = vld [vmem:[%s5897] ss:$2 sm:$0xff]
  %s5899 = scalar_lea.vmem [#allocation3], 315
  %v5900 = vld [vmem:[%s5899] ss:$2 sm:$0xff]
  %s5901 = scalar_lea.vmem [#allocation3], 339
  %v5902 = vld [vmem:[%s5901] ss:$2 sm:$0xff]
  %s5903 = scalar_lea.vmem [#allocation3], 363
  %v5904 = vld [vmem:[%s5903] ss:$2 sm:$0xff]
  %s5905 = scalar_lea.vmem [#allocation3], 387
  %v5906 = vld [vmem:[%s5905] ss:$2 sm:$0xff]
  %s5907 = scalar_lea.vmem [#allocation3], 411
  %v5908 = vld [vmem:[%s5907] ss:$2 sm:$0xff]
  %s5909 = scalar_lea.vmem [#allocation3], 435
  %v5910 = vld [vmem:[%s5909] ss:$2 sm:$0xff]
  %s5911 = scalar_lea.vmem [#allocation3], 459
  %v5912 = vld [vmem:[%s5911] ss:$2 sm:$0xff]
  %s5913 = scalar_lea.vmem [#allocation3], 483
  %v5914 = vld [vmem:[%s5913] ss:$2 sm:$0xff]
  %s5915 = scalar_lea.vmem [#allocation3], 507
  %v5916 = vld [vmem:[%s5915] ss:$2 sm:$0xff]
  %s5917 = scalar_lea.vmem [#allocation3], 531
  %v5918 = vld [vmem:[%s5917] ss:$2 sm:$0xff]
  %s5919 = scalar_lea.vmem [#allocation3], 555
  %v5920 = vld [vmem:[%s5919] ss:$2 sm:$0xff]
  %s5921 = scalar_lea.vmem [#allocation3], 579
  %v5922 = vld [vmem:[%s5921] ss:$2 sm:$0xff]
  %s5923 = scalar_lea.vmem [#allocation3], 603
  %v5924 = vld [vmem:[%s5923] ss:$2 sm:$0xff]
  %s5925 = scalar_lea.vmem [#allocation3], 627
  %v5926 = vld [vmem:[%s5925] ss:$2 sm:$0xff]
  %s5927 = scalar_lea.vmem [#allocation3], 651
  %v5928 = vld [vmem:[%s5927] ss:$2 sm:$0xff]
  %s5929 = scalar_lea.vmem [#allocation3], 675
  %v5930 = vld [vmem:[%s5929] ss:$2 sm:$0xff]
  %s5931 = scalar_lea.vmem [#allocation3], 699
  %v5932 = vld [vmem:[%s5931] ss:$2 sm:$0xff]
  %s5933 = scalar_lea.vmem [#allocation3], 723
  %v5934 = vld [vmem:[%s5933] ss:$2 sm:$0xff]
  %s5935 = scalar_lea.vmem [#allocation3], 747
  %v5936 = vld [vmem:[%s5935] ss:$2 sm:$0xff]
  %s5937 = scalar_lea.vmem [#allocation3], 771
  %v5938 = vld [vmem:[%s5937] ss:$2 sm:$0xff]
  %s5939 = scalar_lea.vmem [#allocation3], 795
  %v5940 = vld [vmem:[%s5939] ss:$2 sm:$0xff]
  %s5941 = scalar_lea.vmem [#allocation3], 819
  %v5942 = vld [vmem:[%s5941] ss:$2 sm:$0xff]
  %s5943 = scalar_lea.vmem [#allocation3], 843
  %v5944 = vld [vmem:[%s5943] ss:$2 sm:$0xff]
  %v5945 = vadd.f32 %v5837, %v5874
  %v5946 = vadd.f32 %v5838, %v5876
  %v5947 = vadd.f32 %v5839, %v5878
  %v5948 = vadd.f32 %v5840, %v5880
  %v5949 = vadd.f32 %v5841, %v5882
  %v5950 = vadd.f32 %v5842, %v5884
  %v5951 = vadd.f32 %v5843, %v5886
  %v5952 = vadd.f32 %v5844, %v5888
  %v5953 = vadd.f32 %v5845, %v5890
  %v5954 = vadd.f32 %v5846, %v5892
  %v5955 = vadd.f32 %v5847, %v5894
  %v5956 = vadd.f32 %v5848, %v5896
  %v5957 = vadd.f32 %v5849, %v5898
  %v5958 = vadd.f32 %v5850, %v5900
  %v5959 = vadd.f32 %v5851, %v5902
  %v5960 = vadd.f32 %v5852, %v5904
  %v5961 = vadd.f32 %v5853, %v5906
  %v5962 = vadd.f32 %v5854, %v5908
  %v5963 = vadd.f32 %v5855, %v5910
  %v5964 = vadd.f32 %v5856, %v5912
  %v5965 = vadd.f32 %v5857, %v5914
  %v5966 = vadd.f32 %v5858, %v5916
  %v5967 = vadd.f32 %v5859, %v5918
  %v5968 = vadd.f32 %v5860, %v5920
  %v5969 = vadd.f32 %v5861, %v5922
  %v5970 = vadd.f32 %v5862, %v5924
  %v5971 = vadd.f32 %v5863, %v5926
  %v5972 = vadd.f32 %v5864, %v5928
  %v5973 = vadd.f32 %v5865, %v5930
  %v5974 = vadd.f32 %v5866, %v5932
  %v5975 = vadd.f32 %v5867, %v5934
  %v5976 = vadd.f32 %v5868, %v5936
  %v5977 = vadd.f32 %v5869, %v5938
  %v5978 = vadd.f32 %v5870, %v5940
  %v5979 = vadd.f32 %v5871, %v5942
  %v5980 = vadd.f32 %v5872, %v5944
  %v5981 = vmul.f32 %v5945, 0.125
  %v5982 = vmul.f32 %v5946, 0.125
  %v5983 = vmul.f32 %v5947, 0.125
  %v5984 = vmul.f32 %v5948, 0.125
  %v5985 = vmul.f32 %v5949, 0.125
  %v5986 = vmul.f32 %v5950, 0.125
  %v5987 = vmul.f32 %v5951, 0.125
  %v5988 = vmul.f32 %v5952, 0.125
  %v5989 = vmul.f32 %v5953, 0.125
  %v5990 = vmul.f32 %v5954, 0.125
  %v5991 = vmul.f32 %v5955, 0.125
  %v5992 = vmul.f32 %v5956, 0.125
  %v5993 = vmul.f32 %v5957, 0.125
  %v5994 = vmul.f32 %v5958, 0.125
  %v5995 = vmul.f32 %v5959, 0.125
  %v5996 = vmul.f32 %v5960, 0.125
  %v5997 = vmul.f32 %v5961, 0.125
  %v5998 = vmul.f32 %v5962, 0.125
  %v5999 = vmul.f32 %v5963, 0.125
  %v6000 = vmul.f32 %v5964, 0.125
  %v6001 = vmul.f32 %v5965, 0.125
  %v6002 = vmul.f32 %v5966, 0.125
  %v6003 = vmul.f32 %v5967, 0.125
  %v6004 = vmul.f32 %v5968, 0.125
  %v6005 = vmul.f32 %v5969, 0.125
  %v6006 = vmul.f32 %v5970, 0.125
  %v6007 = vmul.f32 %v5971, 0.125
  %v6008 = vmul.f32 %v5972, 0.125
  %v6009 = vmul.f32 %v5973, 0.125
  %v6010 = vmul.f32 %v5974, 0.125
  %v6011 = vmul.f32 %v5975, 0.125
  %v6012 = vmul.f32 %v5976, 0.125
  %v6013 = vmul.f32 %v5977, 0.125
  %v6014 = vmul.f32 %v5978, 0.125
  %v6015 = vmul.f32 %v5979, 0.125
  %v6016 = vmul.f32 %v5980, 0.125
  %6017 = vst.msk [vmem:[#allocation4] sm:$0xff] %vm48, %v5981
  %6018 = vst.msk [vmem:[#allocation4 + $0x8] sm:$0xff] %vm48, %v5982
  %6019 = vst.msk [vmem:[#allocation4 + $0x10] sm:$0xff] %vm48, %v5983
  %6020 = vst.msk [vmem:[#allocation4 + $0x18] sm:$0xff] %vm48, %v5984
  %6021 = vst.msk [vmem:[#allocation4 + $0x20] sm:$0xff] %vm48, %v5985
  %6022 = vst.msk [vmem:[#allocation4 + $0x28] sm:$0xff] %vm48, %v5986
  %6023 = vst.msk [vmem:[#allocation4 + $0x30] sm:$0xff] %vm48, %v5987
  %6024 = vst.msk [vmem:[#allocation4 + $0x38] sm:$0xff] %vm48, %v5988
  %6025 = vst.msk [vmem:[#allocation4 + $0x40] sm:$0xff] %vm48, %v5989
  %6026 = vst.msk [vmem:[#allocation4 + $0x48] sm:$0xff] %vm48, %v5990
  %6027 = vst.msk [vmem:[#allocation4 + $0x50] sm:$0xff] %vm48, %v5991
  %6028 = vst.msk [vmem:[#allocation4 + $0x58] sm:$0xff] %vm48, %v5992
  %6029 = vst.msk [vmem:[#allocation4 + $0x60] sm:$0xff] %vm48, %v5993
  %6030 = vst.msk [vmem:[#allocation4 + $0x68] sm:$0xff] %vm48, %v5994
  %6031 = vst.msk [vmem:[#allocation4 + $0x70] sm:$0xff] %vm48, %v5995
  %6032 = vst.msk [vmem:[#allocation4 + $0x78] sm:$0xff] %vm48, %v5996
  %6033 = vst.msk [vmem:[#allocation4 + $0x80] sm:$0xff] %vm48, %v5997
  %6034 = vst.msk [vmem:[#allocation4 + $0x88] sm:$0xff] %vm48, %v5998
  %6035 = vst.msk [vmem:[#allocation4 + $0x90] sm:$0xff] %vm48, %v5999
  %6036 = vst.msk [vmem:[#allocation4 + $0x98] sm:$0xff] %vm48, %v6000
  %6037 = vst.msk [vmem:[#allocation4 + $0xa0] sm:$0xff] %vm48, %v6001
  %6038 = vst.msk [vmem:[#allocation4 + $0xa8] sm:$0xff] %vm48, %v6002
  %6039 = vst.msk [vmem:[#allocation4 + $0xb0] sm:$0xff] %vm48, %v6003
  %6040 = vst.msk [vmem:[#allocation4 + $0xb8] sm:$0xff] %vm48, %v6004
  %6041 = vst.msk [vmem:[#allocation4 + $0xc0] sm:$0xff] %vm48, %v6005
  %6042 = vst.msk [vmem:[#allocation4 + $0xc8] sm:$0xff] %vm48, %v6006
  %6043 = vst.msk [vmem:[#allocation4 + $0xd0] sm:$0xff] %vm48, %v6007
  %6044 = vst.msk [vmem:[#allocation4 + $0xd8] sm:$0xff] %vm48, %v6008
  %6045 = vst.msk [vmem:[#allocation4 + $0xe0] sm:$0xff] %vm48, %v6009
  %6046 = vst.msk [vmem:[#allocation4 + $0xe8] sm:$0xff] %vm48, %v6010
  %6047 = vst.msk [vmem:[#allocation4 + $0xf0] sm:$0xff] %vm48, %v6011
  %6048 = vst.msk [vmem:[#allocation4 + $0xf8] sm:$0xff] %vm48, %v6012
  %6049 = vst.msk [vmem:[#allocation4 + $0x100] sm:$0xff] %vm48, %v6013
  %6050 = vst.msk [vmem:[#allocation4 + $0x108] sm:$0xff] %vm48, %v6014
  %6051 = vst.msk [vmem:[#allocation4 + $0x110] sm:$0xff] %vm48, %v6015
  %6052 = vst.msk [vmem:[#allocation4 + $0x118] sm:$0xff] %vm48, %v6016
  %v6053 = vld [vmem:[#allocation4] sm:$0xff]
  %v6054 = vld [vmem:[#allocation4 + $0x10] sm:$0xff]
  %v6055 = vld [vmem:[#allocation4 + $0x20] sm:$0xff]
  %v6056 = vld [vmem:[#allocation4 + $0x30] sm:$0xff]
  %v6057 = vld [vmem:[#allocation4 + $0x40] sm:$0xff]
  %v6058 = vld [vmem:[#allocation4 + $0x50] sm:$0xff]
  %v6059 = vld [vmem:[#allocation4 + $0x60] sm:$0xff]
  %v6060 = vld [vmem:[#allocation4 + $0x70] sm:$0xff]
  %v6061 = vld [vmem:[#allocation4 + $0x90] sm:$0xff]
  %v6062 = vld [vmem:[#allocation4 + $0xa0] sm:$0xff]
  %v6063 = vld [vmem:[#allocation4 + $0xb0] sm:$0xff]
  %v6064 = vld [vmem:[#allocation4 + $0xc0] sm:$0xff]
  %v6065 = vld [vmem:[#allocation4 + $0xd0] sm:$0xff]
  %v6066 = vld [vmem:[#allocation4 + $0xe0] sm:$0xff]
  %v6067 = vld [vmem:[#allocation4 + $0xf0] sm:$0xff]
  %v6068 = vld [vmem:[#allocation4 + $0x100] sm:$0xff]
  %s6069 = scalar_lea.vmem [#allocation4], 8
  %v6070 = vld [vmem:[%s6069] sm:$0xff]
  %v6071 = vld [vmem:[%s6069 + $0x10] sm:$0xff]
  %v6072 = vld [vmem:[%s6069 + $0x20] sm:$0xff]
  %v6073 = vld [vmem:[%s6069 + $0x30] sm:$0xff]
  %v6074 = vld [vmem:[%s6069 + $0x40] sm:$0xff]
  %v6075 = vld [vmem:[%s6069 + $0x50] sm:$0xff]
  %v6076 = vld [vmem:[%s6069 + $0x60] sm:$0xff]
  %v6077 = vld [vmem:[%s6069 + $0x70] sm:$0xff]
  %v6078 = vld [vmem:[%s6069 + $0x90] sm:$0xff]
  %v6079 = vld [vmem:[%s6069 + $0xa0] sm:$0xff]
  %v6080 = vld [vmem:[%s6069 + $0xb0] sm:$0xff]
  %v6081 = vld [vmem:[%s6069 + $0xc0] sm:$0xff]
  %v6082 = vld [vmem:[%s6069 + $0xd0] sm:$0xff]
  %v6083 = vld [vmem:[%s6069 + $0xe0] sm:$0xff]
  %v6084 = vld [vmem:[%s6069 + $0xf0] sm:$0xff]
  %v6085 = vld [vmem:[%s6069 + $0x100] sm:$0xff]
  %v6086 = vmul.f32 %v6070, 3.0
  %v6087 = vmul.f32 %v6071, 3.0
  %v6088 = vmul.f32 %v6072, 3.0
  %v6089 = vmul.f32 %v6073, 3.0
  %v6090 = vmul.f32 %v6074, 3.0
  %v6091 = vmul.f32 %v6075, 3.0
  %v6092 = vmul.f32 %v6076, 3.0
  %v6093 = vmul.f32 %v6077, 3.0
  %v6094 = vmul.f32 %v6078, 3.0
  %v6095 = vmul.f32 %v6079, 3.0
  %v6096 = vmul.f32 %v6080, 3.0
  %v6097 = vmul.f32 %v6081, 3.0
  %v6098 = vmul.f32 %v6082, 3.0
  %v6099 = vmul.f32 %v6083, 3.0
  %v6100 = vmul.f32 %v6084, 3.0
  %v6101 = vmul.f32 %v6085, 3.0
  %v6102 = vadd.f32 %v6053, %v6086
  %v6103 = vadd.f32 %v6054, %v6087
  %v6104 = vadd.f32 %v6055, %v6088
  %v6105 = vadd.f32 %v6056, %v6089
  %v6106 = vadd.f32 %v6057, %v6090
  %v6107 = vadd.f32 %v6058, %v6091
  %v6108 = vadd.f32 %v6059, %v6092
  %v6109 = vadd.f32 %v6060, %v6093
  %v6110 = vadd.f32 %v6061, %v6094
  %v6111 = vadd.f32 %v6062, %v6095
  %v6112 = vadd.f32 %v6063, %v6096
  %v6113 = vadd.f32 %v6064, %v6097
  %v6114 = vadd.f32 %v6065, %v6098
  %v6115 = vadd.f32 %v6066, %v6099
  %v6116 = vadd.f32 %v6067, %v6100
  %v6117 = vadd.f32 %v6068, %v6101
  %s6118 = scalar_lea.vmem [#allocation4], 16
  %v6119 = vld [vmem:[%s6118] sm:$0xff]
  %v6120 = vld [vmem:[%s6118 + $0x10] sm:$0xff]
  %v6121 = vld [vmem:[%s6118 + $0x20] sm:$0xff]
  %v6122 = vld [vmem:[%s6118 + $0x30] sm:$0xff]
  %v6123 = vld [vmem:[%s6118 + $0x40] sm:$0xff]
  %v6124 = vld [vmem:[%s6118 + $0x50] sm:$0xff]
  %v6125 = vld [vmem:[%s6118 + $0x60] sm:$0xff]
  %v6126 = vld [vmem:[%s6118 + $0x70] sm:$0xff]
  %v6127 = vld [vmem:[%s6118 + $0x90] sm:$0xff]
  %v6128 = vld [vmem:[%s6118 + $0xa0] sm:$0xff]
  %v6129 = vld [vmem:[%s6118 + $0xb0] sm:$0xff]
  %v6130 = vld [vmem:[%s6118 + $0xc0] sm:$0xff]
  %v6131 = vld [vmem:[%s6118 + $0xd0] sm:$0xff]
  %v6132 = vld [vmem:[%s6118 + $0xe0] sm:$0xff]
  %v6133 = vld [vmem:[%s6118 + $0xf0] sm:$0xff]
  %v6134 = vld [vmem:[%s6118 + $0x100] sm:$0xff]
  %v6135 = vmul.f32 %v6119, 3.0
  %v6136 = vmul.f32 %v6120, 3.0
  %v6137 = vmul.f32 %v6121, 3.0
  %v6138 = vmul.f32 %v6122, 3.0
  %v6139 = vmul.f32 %v6123, 3.0
  %v6140 = vmul.f32 %v6124, 3.0
  %v6141 = vmul.f32 %v6125, 3.0
  %v6142 = vmul.f32 %v6126, 3.0
  %v6143 = vmul.f32 %v6127, 3.0
  %v6144 = vmul.f32 %v6128, 3.0
  %v6145 = vmul.f32 %v6129, 3.0
  %v6146 = vmul.f32 %v6130, 3.0
  %v6147 = vmul.f32 %v6131, 3.0
  %v6148 = vmul.f32 %v6132, 3.0
  %v6149 = vmul.f32 %v6133, 3.0
  %v6150 = vmul.f32 %v6134, 3.0
  %v6151 = vadd.f32 %v6102, %v6135
  %v6152 = vadd.f32 %v6103, %v6136
  %v6153 = vadd.f32 %v6104, %v6137
  %v6154 = vadd.f32 %v6105, %v6138
  %v6155 = vadd.f32 %v6106, %v6139
  %v6156 = vadd.f32 %v6107, %v6140
  %v6157 = vadd.f32 %v6108, %v6141
  %v6158 = vadd.f32 %v6109, %v6142
  %v6159 = vadd.f32 %v6110, %v6143
  %v6160 = vadd.f32 %v6111, %v6144
  %v6161 = vadd.f32 %v6112, %v6145
  %v6162 = vadd.f32 %v6113, %v6146
  %v6163 = vadd.f32 %v6114, %v6147
  %v6164 = vadd.f32 %v6115, %v6148
  %v6165 = vadd.f32 %v6116, %v6149
  %v6166 = vadd.f32 %v6117, %v6150
  %s6167 = scalar_lea.vmem [#allocation4], 24
  %v6168 = vld [vmem:[%s6167] sm:$0xff]
  %v6169 = vld [vmem:[%s6167 + $0x10] sm:$0xff]
  %v6170 = vld [vmem:[%s6167 + $0x20] sm:$0xff]
  %v6171 = vld [vmem:[%s6167 + $0x30] sm:$0xff]
  %v6172 = vld [vmem:[%s6167 + $0x40] sm:$0xff]
  %v6173 = vld [vmem:[%s6167 + $0x50] sm:$0xff]
  %v6174 = vld [vmem:[%s6167 + $0x60] sm:$0xff]
  %v6175 = vld [vmem:[%s6167 + $0x70] sm:$0xff]
  %v6176 = vld [vmem:[%s6167 + $0x90] sm:$0xff]
  %v6177 = vld [vmem:[%s6167 + $0xa0] sm:$0xff]
  %v6178 = vld [vmem:[%s6167 + $0xb0] sm:$0xff]
  %v6179 = vld [vmem:[%s6167 + $0xc0] sm:$0xff]
  %v6180 = vld [vmem:[%s6167 + $0xd0] sm:$0xff]
  %v6181 = vld [vmem:[%s6167 + $0xe0] sm:$0xff]
  %v6182 = vld [vmem:[%s6167 + $0xf0] sm:$0xff]
  %v6183 = vld [vmem:[%s6167 + $0x100] sm:$0xff]
  %v6184 = vadd.f32 %v6151, %v6168
  %v6185 = vadd.f32 %v6152, %v6169
  %v6186 = vadd.f32 %v6153, %v6170
  %v6187 = vadd.f32 %v6154, %v6171
  %v6188 = vadd.f32 %v6155, %v6172
  %v6189 = vadd.f32 %v6156, %v6173
  %v6190 = vadd.f32 %v6157, %v6174
  %v6191 = vadd.f32 %v6158, %v6175
  %v6192 = vadd.f32 %v6159, %v6176
  %v6193 = vadd.f32 %v6160, %v6177
  %v6194 = vadd.f32 %v6161, %v6178
  %v6195 = vadd.f32 %v6162, %v6179
  %v6196 = vadd.f32 %v6163, %v6180
  %v6197 = vadd.f32 %v6164, %v6181
  %v6198 = vadd.f32 %v6165, %v6182
  %v6199 = vadd.f32 %v6166, %v6183
  %v6200 = vmul.f32 %v6184, 0.125
  %v6201 = vmul.f32 %v6185, 0.125
  %v6202 = vmul.f32 %v6186, 0.125
  %v6203 = vmul.f32 %v6187, 0.125
  %v6204 = vmul.f32 %v6188, 0.125
  %v6205 = vmul.f32 %v6189, 0.125
  %v6206 = vmul.f32 %v6190, 0.125
  %v6207 = vmul.f32 %v6191, 0.125
  %v6208 = vmul.f32 %v6192, 0.125
  %v6209 = vmul.f32 %v6193, 0.125
  %v6210 = vmul.f32 %v6194, 0.125
  %v6211 = vmul.f32 %v6195, 0.125
  %v6212 = vmul.f32 %v6196, 0.125
  %v6213 = vmul.f32 %v6197, 0.125
  %v6214 = vmul.f32 %v6198, 0.125
  %v6215 = vmul.f32 %v6199, 0.125
  %vm6216 = vcmp.ge.f32.partialorder %v6200, 0.0
  %vm6217 = vcmp.ge.f32.partialorder %v6201, 0.0
  %vm6218 = vcmp.ge.f32.partialorder %v6202, 0.0
  %vm6219 = vcmp.ge.f32.partialorder %v6203, 0.0
  %vm6220 = vcmp.ge.f32.partialorder %v6204, 0.0
  %vm6221 = vcmp.ge.f32.partialorder %v6205, 0.0
  %vm6222 = vcmp.ge.f32.partialorder %v6206, 0.0
  %vm6223 = vcmp.ge.f32.partialorder %v6207, 0.0
  %vm6224 = vcmp.ge.f32.partialorder %v6208, 0.0
  %vm6225 = vcmp.ge.f32.partialorder %v6209, 0.0
  %vm6226 = vcmp.ge.f32.partialorder %v6210, 0.0
  %vm6227 = vcmp.ge.f32.partialorder %v6211, 0.0
  %vm6228 = vcmp.ge.f32.partialorder %v6212, 0.0
  %vm6229 = vcmp.ge.f32.partialorder %v6213, 0.0
  %vm6230 = vcmp.ge.f32.partialorder %v6214, 0.0
  %vm6231 = vcmp.ge.f32.partialorder %v6215, 0.0
  %v6232 = vmul.f32 %v6200, 0.2
  %v6233 = vmul.f32 %v6201, 0.2
  %v6234 = vmul.f32 %v6202, 0.2
  %v6235 = vmul.f32 %v6203, 0.2
  %v6236 = vmul.f32 %v6204, 0.2
  %v6237 = vmul.f32 %v6205, 0.2
  %v6238 = vmul.f32 %v6206, 0.2
  %v6239 = vmul.f32 %v6207, 0.2
  %v6240 = vmul.f32 %v6208, 0.2
  %v6241 = vmul.f32 %v6209, 0.2
  %v6242 = vmul.f32 %v6210, 0.2
  %v6243 = vmul.f32 %v6211, 0.2
  %v6244 = vmul.f32 %v6212, 0.2
  %v6245 = vmul.f32 %v6213, 0.2
  %v6246 = vmul.f32 %v6214, 0.2
  %v6247 = vmul.f32 %v6215, 0.2
  %v6248 = vsel %vm6216, %v6200, %v6232
  %v6249 = vsel %vm6217, %v6201, %v6233
  %v6250 = vsel %vm6218, %v6202, %v6234
  %v6251 = vsel %vm6219, %v6203, %v6235
  %v6252 = vsel %vm6220, %v6204, %v6236
  %v6253 = vsel %vm6221, %v6205, %v6237
  %v6254 = vsel %vm6222, %v6206, %v6238
  %v6255 = vsel %vm6223, %v6207, %v6239
  %v6256 = vsel %vm6224, %v6208, %v6240
  %v6257 = vsel %vm6225, %v6209, %v6241
  %v6258 = vsel %vm6226, %v6210, %v6242
  %v6259 = vsel %vm6227, %v6211, %v6243
  %v6260 = vsel %vm6228, %v6212, %v6244
  %v6261 = vsel %vm6229, %v6213, %v6245
  %v6262 = vsel %vm6230, %v6214, %v6246
  %v6263 = vsel %vm6231, %v6215, %v6247
  %6264 = vxpose.xlu0.b32.start [1/16] %v6248, 128
  %6265 = vxpose.xlu0.b32.cont [2/16] %v6249, 128
  %6266 = vxpose.xlu0.b32.cont [3/16] %v6250, 128
  %6267 = vxpose.xlu0.b32.cont [4/16] %v6251, 128
  %6268 = vxpose.xlu0.b32.cont [5/16] %v6252, 128
  %6269 = vxpose.xlu0.b32.cont [6/16] %v6253, 128
  %6270 = vxpose.xlu0.b32.cont [7/16] %v6254, 128
  %6271 = vxpose.xlu0.b32.cont [8/16] %v6255, 128
  %6272 = vxpose.xlu0.b32.cont [9/16] 0.0, 128
  %6273 = vxpose.xlu0.b32.cont [10/16] 0.0, 128
  %6274 = vxpose.xlu0.b32.cont [11/16] 0.0, 128
  %6275 = vxpose.xlu0.b32.cont [12/16] 0.0, 128
  %6276 = vxpose.xlu0.b32.cont [13/16] 0.0, 128
  %6277 = vxpose.xlu0.b32.cont [14/16] 0.0, 128
  %6278 = vxpose.xlu0.b32.cont [15/16] 0.0, 128
  %6279 = vxpose.xlu0.b32.end [16/16] 0.0, 128
  %v6280 = vpop.trf.xlu0
  %v6281 = vpop.trf.xlu0
  %v6282 = vpop.trf.xlu0
  %v6283 = vpop.trf.xlu0
  %v6284 = vpop.trf.xlu0
  %v6285 = vpop.trf.xlu0
  %v6286 = vpop.trf.xlu0
  %v6287 = vpop.trf.xlu0
  %v6288 = vpop.trf.xlu0
  %v6289 = vpop.trf.xlu0
  %v6290 = vpop.trf.xlu0
  %v6291 = vpop.trf.xlu0
  %v6292 = vpop.trf.xlu0
  %v6293 = vpop.trf.xlu0
  %v6294 = vpop.trf.xlu0
  %v6295 = vpop.trf.xlu0
  %vm6296 = vcmask 523264
  %6297 = vst.msk [vmem:[%s3] sm:$0xff] %vm6296, %v6280
  %6298 = vxpose.xlu0.b32.start [1/16] %v6256, 128
  %6299 = vxpose.xlu0.b32.cont [2/16] %v6257, 128
  %6300 = vxpose.xlu0.b32.cont [3/16] %v6258, 128
  %6301 = vxpose.xlu0.b32.cont [4/16] %v6259, 128
  %6302 = vxpose.xlu0.b32.cont [5/16] %v6260, 128
  %6303 = vxpose.xlu0.b32.cont [6/16] %v6261, 128
  %6304 = vxpose.xlu0.b32.cont [7/16] %v6262, 128
  %6305 = vxpose.xlu0.b32.cont [8/16] %v6263, 128
  %6306 = vxpose.xlu0.b32.cont [9/16] 0.0, 128
  %6307 = vxpose.xlu0.b32.cont [10/16] 0.0, 128
  %6308 = vxpose.xlu0.b32.cont [11/16] 0.0, 128
  %6309 = vxpose.xlu0.b32.cont [12/16] 0.0, 128
  %6310 = vxpose.xlu0.b32.cont [13/16] 0.0, 128
  %6311 = vxpose.xlu0.b32.cont [14/16] 0.0, 128
  %6312 = vxpose.xlu0.b32.cont [15/16] 0.0, 128
  %6313 = vxpose.xlu0.b32.end [16/16] 0.0, 128
  %v6314 = vpop.trf.xlu0
  %v6315 = vpop.trf.xlu0
  %v6316 = vpop.trf.xlu0
  %v6317 = vpop.trf.xlu0
  %v6318 = vpop.trf.xlu0
  %v6319 = vpop.trf.xlu0
  %v6320 = vpop.trf.xlu0
  %v6321 = vpop.trf.xlu0
  %v6322 = vpop.trf.xlu0
  %v6323 = vpop.trf.xlu0
  %v6324 = vpop.trf.xlu0
  %v6325 = vpop.trf.xlu0
  %v6326 = vpop.trf.xlu0
  %v6327 = vpop.trf.xlu0
  %v6328 = vpop.trf.xlu0
  %v6329 = vpop.trf.xlu0
  %s6330 = scalar_lea.vmem %s3, 8
  %6331 = vst.msk [vmem:[%s6330] sm:$0xff] %vm6296, %v6314
  // Predicated region
  $region14: #{downblock_pallas.1} parent=0 // pred_check
    _
  $region15: #{downblock_pallas.1} parent=0 // pred_check_branch
    %6333 = sbr.rel (0) target = $region17
  $region16: #{downblock_pallas.1} parent=0 // pred_region
    _
  $region17: #{downblock_pallas.1} parent=0 // pred_fallthru
    _
  // Predicated region
  $region18: #{downblock_pallas.1} parent=0 // pred_check
    _
  $region19: #{downblock_pallas.1} parent=0 // pred_check_branch
    %6335 = sbr.rel (0) target = $region21
  $region20: #{downblock_pallas.1} parent=0 // pred_region
    _
  $region21: #{downblock_pallas.1} parent=0 // pred_fallthru
    _

</llo_original>
